<compile_context>
chip_gen: v6e
topology: v6e:2x2x1
jax: 0.10.0
libtpu: 0.0.40
codegen_flags: <defaults>
</compile_context>

<pallas_src>
import functools
import math

import jax
import jax.numpy as jnp
from jax import lax
from jax.experimental import pallas as pl
from jax.experimental.pallas import tpu as pltpu

_NEG_INF = -1e30


# -----------------------------------------------------------------------------
# In-kernel helpers (channel-major layout: arrays are (channels, tokens))
# -----------------------------------------------------------------------------
def _layernorm_t(x, gamma, beta, eps=1e-5):
    # Normalize over channels = sublane axis; gamma/beta are (C, 1).
    mu = jnp.mean(x, axis=0, keepdims=True)
    var = jnp.mean(jnp.square(x - mu), axis=0, keepdims=True)
    return (x - mu) * lax.rsqrt(var + eps) * gamma + beta


def _gelu(x):
    # TODO(synk): torch nn.GELU defaults to the exact erf form; tanh approximation
    # is used here for robust TPU lowering (small numeric difference).
    return jax.nn.gelu(x, approximate=True)


def _mha_t(q3, k3, v3, mask=None):
    """Batched-over-heads attention in channel-major layout.

    q3: (H, d, Nq), k3/v3: (H, d, Nk), mask: (Nk, Nq) additive or None.
    Logits are kept K-major (H, Nk, Nq): softmax statistics reduce over the
    sublane axis and come out already lane-aligned with the queries, so the
    post-PV normalization needs no relayout.  Returns (H*d, Nq) f32.
    """
    bf16 = jnp.bfloat16
    # q already carries 1/sqrt(dim_head) (folded into Wq at prep time).
    s = lax.dot_general(k3.astype(bf16), q3.astype(bf16),
                        (((1,), (1,)), ((0,), (0,))),
                        preferred_element_type=jnp.float32)          # (H, Nk, Nq)
    if mask is not None:
        s = s + mask[None]
    m = jnp.max(s, axis=1, keepdims=True)                            # (H, 1, Nq)
    p = jnp.exp(s - m)
    l = jnp.sum(p, axis=1, keepdims=True)                            # (H, 1, Nq)
    o = lax.dot_general(v3.astype(bf16), p.astype(bf16),
                        (((2,), (1,)), ((0,), (0,))),
                        preferred_element_type=jnp.float32)          # (H, d, Nq)
    # Normalize after the PV matmul (8x fewer f32 VPU multiplies than scaling p).
    o = o * pl.reciprocal(l, approx=True)
    h, d, nq = o.shape
    return o.reshape(h * d, nq)


def _dfa_tail(x, attn, wo, bo, ln1g, ln1b, w1, b1, w2, b2, ln2g, ln2b):
    # O-projection + residual/LN + FFN(GELU) + residual/LN, all channel-major.
    bf16, f32 = jnp.bfloat16, jnp.float32
    o = jnp.dot(wo[...], attn.astype(bf16), preferred_element_type=f32) + bo[...]
    x1 = _layernorm_t(x + o, ln1g[...], ln1b[...])
    h1 = jnp.dot(w1[...], x1.astype(bf16), preferred_element_type=f32) + b1[...]
    h1 = _gelu(h1)
    y = jnp.dot(w2[...], h1.astype(bf16), preferred_element_type=f32) + b2[...]
    return _layernorm_t(x1 + y, ln2g[...], ln2b[...])


# -----------------------------------------------------------------------------
# Single fused kernel: one grid step = one batch element, Self-DFA + Cross-DFA
# -----------------------------------------------------------------------------
def _semantic_guidance_kernel(
        tok_ref, seg_ref, img_ref,
        # self-DFA params
        s_wqkv, s_bqkv, s_wo, s_bo, s_ln1g, s_ln1b,
        s_w1, s_b1, s_w2, s_b2, s_ln2g, s_ln2b,
        # cross-DFA params
        c_wimg, c_bimg, c_wq, c_bq, c_wkv, c_bkv, c_wo, c_bo, c_ln1g, c_ln1b,
        c_w1, c_b1, c_w2, c_b2, c_ln2g, c_ln2b,
        # outputs
        self_o_ref, cross_o_ref,
        *, heads, dim_head, plane_boundaries):
    bf16, f32 = jnp.bfloat16, jnp.float32
    inner = heads * dim_head
    n_tok = tok_ref.shape[1]

    x = tok_ref[...].astype(f32)                      # (C, Ntot) residual, f32
    x_b = x.astype(bf16)

    # ---------------- Self-DFA: block-diagonal (per-plane) self-attention ----
    qkv = jnp.dot(s_wqkv[...], x_b, preferred_element_type=f32) + s_bqkv[...]
    q3 = qkv[:inner].reshape(heads, dim_head, n_tok)
    k3 = qkv[inner:2 * inner].reshape(heads, dim_head, n_tok)
    v3 = qkv[2 * inner:].reshape(heads, dim_head, n_tok)

    # Static block-diagonal mask (token attends only within its TPV plane).
    # TODO(synk): at production TPV resolutions, tile the KV axis flash-style
    # (online softmax + extra "arbitrary" grid axis) instead of full Ntot^2
    # logits — first wall under v7x's 64 MiB VMEM.
    r = lax.broadcasted_iota(jnp.int32, (n_tok, n_tok), 0)
    c = lax.broadcasted_iota(jnp.int32, (n_tok, n_tok), 1)
    pid_r = jnp.zeros((n_tok, n_tok), jnp.int32)
    pid_c = jnp.zeros((n_tok, n_tok), jnp.int32)
    for b in plane_boundaries:                         # static python ints
        pid_r = pid_r + (r >= b).astype(jnp.int32)
        pid_c = pid_c + (c >= b).astype(jnp.int32)
    mask = jnp.where(pid_r == pid_c, 0.0, _NEG_INF).astype(f32)   # symmetric

    attn_s = _mha_t(q3, k3, v3, mask)                              # (inner, Ntot)
    self_out = _dfa_tail(x, attn_s, s_wo, s_bo, s_ln1g, s_ln1b,
                         s_w1, s_b1, s_w2, s_b2, s_ln2g, s_ln2b)
    self_o_ref[...] = self_out.astype(self_o_ref.dtype)

    # ---------------- Cross-DFA: planes attend to fused image/seg context ----
    seg = seg_ref[...].astype(f32)                                 # (Ck, Nk)
    img = img_ref[...]                                             # (Cimg_pad, Nk)
    ctx = seg + jnp.dot(c_wimg[...], img.astype(bf16),
                        preferred_element_type=f32) + c_bimg[...]

    q = jnp.dot(c_wq[...], x_b, preferred_element_type=f32) + c_bq[...]
    kv = jnp.dot(c_wkv[...], ctx.astype(bf16),
                 preferred_element_type=f32) + c_bkv[...]
    n_ctx = ctx.shape[1]
    cq3 = q.reshape(heads, dim_head, n_tok)
    ck3 = kv[:inner].reshape(heads, dim_head, n_ctx)
    cv3 = kv[inner:].reshape(heads, dim_head, n_ctx)

    attn_c = _mha_t(cq3, ck3, cv3, None)                           # (inner, Ntot)
    cross_out = _dfa_tail(x, attn_c, c_wo, c_bo, c_ln1g, c_ln1b,
                          c_w1, c_b1, c_w2, c_b2, c_ln2g, c_ln2b)
    cross_o_ref[...] = cross_out.astype(cross_o_ref.dtype)


# -----------------------------------------------------------------------------
# Parameter prep: transpose weights to channel-major, fold 1/sqrt(d) into Wq
# -----------------------------------------------------------------------------
def _prep_tail(p):
    bf16 = jnp.bfloat16
    return [
        p["wo"].T.astype(bf16), p["bo"][:, None],
        p["ln1_g"][:, None], p["ln1_b"][:, None],
        p["w1"].T.astype(bf16), p["b1"][:, None],
        p["w2"].T.astype(bf16), p["b2"][:, None],
        p["ln2_g"][:, None], p["ln2_b"][:, None],
    ]


def prep_self_params(p, dim_head):
    scale = 1.0 / math.sqrt(dim_head)
    wqkv = jnp.concatenate([p["wq"] * scale, p["wk"], p["wv"]], axis=1)
    bqkv = jnp.concatenate([p["bq"] * scale, p["bk"], p["bv"]])
    return [wqkv.T.astype(jnp.bfloat16), bqkv[:, None]] + _prep_tail(p)


def prep_cross_params(p, dim_head, img_in_pad):
    scale = 1.0 / math.sqrt(dim_head)
    w_img = jnp.pad(p["w_img"], ((0, img_in_pad - p["w_img"].shape[0]), (0, 0)))
    wkv = jnp.concatenate([p["wk"], p["wv"]], axis=1)
    bkv = jnp.concatenate([p["bk"], p["bv"]])
    return ([w_img.T.astype(jnp.bfloat16), p["b_img"][:, None],
             (p["wq"] * scale).T.astype(jnp.bfloat16),
             (p["bq"] * scale)[:, None],
             wkv.T.astype(jnp.bfloat16), bkv[:, None]] + _prep_tail(p))


# -----------------------------------------------------------------------------
# pallas_call wrapper
# -----------------------------------------------------------------------------
def fused_semantic_guidance(tok, seg_tok, img_tok, self_params, cross_params,
                            heads, dim_head, plane_sizes):
    B, Cq, Ntot = tok.shape
    _, Ck, Nk = seg_tok.shape
    Cimg = img_tok.shape[1]

    offsets, acc = [], 0
    for n in plane_sizes:
        offsets.append(acc)
        acc += n
    assert acc == Ntot
    boundaries = tuple(offsets[1:])            # static plane starts (excl. 0)

    self_ops = prep_self_params(self_params, dim_head)
    cross_ops = prep_cross_params(cross_params, dim_head, img_in_pad=Cimg)
    ops = self_ops + cross_ops

    kernel = functools.partial(_semantic_guidance_kernel, heads=heads,
                               dim_head=dim_head, plane_boundaries=boundaries)

    def batch_spec(c, n):
        return pl.BlockSpec((None, c, n), lambda b: (b, 0, 0))

    in_specs = [batch_spec(Cq, Ntot), batch_spec(Ck, Nk), batch_spec(Cimg, Nk)]
    # Weights/biases are grid-invariant 2-D blocks (full-array blocks).
    in_specs += [pl.BlockSpec(o.shape, lambda b: (0, 0)) for o in ops]

    out_shape = (jax.ShapeDtypeStruct((B, Cq, Ntot), tok.dtype),
                 jax.ShapeDtypeStruct((B, Cq, Ntot), tok.dtype))
    out_specs = (batch_spec(Cq, Ntot), batch_spec(Cq, Ntot))

    # grid=(B,) "parallel": feeds both TensorCores on v7x; everything stays in
    # VMEM within one grid step, no scratch buffers needed.
    return pl.pallas_call(
        kernel,
        out_shape=out_shape,
        grid=(B,),
        in_specs=in_specs,
        out_specs=out_specs,
        compiler_params=pltpu.CompilerParams(dimension_semantics=("parallel",)),
    )(tok, seg_tok, img_tok, *ops)


# -----------------------------------------------------------------------------
# NCHW <-> channel-major tokens (pure reshapes, no transposes/copies)
# -----------------------------------------------------------------------------
def planes_to_tokens(planes):
    toks = [p.reshape(p.shape[0], p.shape[1], -1) for p in planes]   # [B,C,H*W]
    return jnp.concatenate(toks, axis=2)                             # [B,C,Ntot]


def tokens_to_planes(tok, plane_shapes):
    outs, off = [], 0
    for shp in plane_shapes:
        n = shp[2] * shp[3]
        outs.append(tok[:, :, off:off + n].reshape(shp))
        off += n
    return tuple(outs)


# -----------------------------------------------------------------------------
# SemanticGuidanceModule forward
# -----------------------------------------------------------------------------
def semantic_guidance_forward(tpv_feat, seg_feat, image, self_params,
                              cross_params, heads, dim_head):
    plane_shapes = [p.shape for p in tpv_feat]
    plane_sizes = [s[2] * s[3] for s in plane_shapes]

    tok = planes_to_tokens(tpv_feat)                                  # [B,C,Ntot]
    seg_tok = seg_feat.reshape(seg_feat.shape[0], seg_feat.shape[1], -1)
    img_tok = image.reshape(image.shape[0], image.shape[1], -1)
    pad = (-img_tok.shape[1]) % 8                                     # 3 -> 8 channels
    img_tok = jnp.pad(img_tok, ((0, 0), (0, pad), (0, 0)))

    self_out, cross_out = fused_semantic_guidance(
        tok, seg_tok, img_tok, self_params, cross_params,
        heads, dim_head, plane_sizes)

    # Reference forward does `print(cross_xy.size())` and returns None;
    # we return the tensors so the caller can block on device results.
    return (tokens_to_planes(self_out, plane_shapes)
            + tokens_to_planes(cross_out, plane_shapes))


# -----------------------------------------------------------------------------
# Deterministic parameter init
# -----------------------------------------------------------------------------
def _linear_init(key, fan_in, fan_out):
    w = jax.random.normal(key, (fan_in, fan_out), jnp.float32) / math.sqrt(fan_in)
    b = jnp.zeros((fan_out,), jnp.float32)
    return w, b


def init_dfa_params(key, q_dim, kv_dim, heads, dim_head, ffn_hidden,
                    with_img_proj=False, img_in=3, img_out=None):
    inner = heads * dim_head
    keys = jax.random.split(key, 8)
    p = {}
    p["wq"], p["bq"] = _linear_init(keys[0], q_dim, inner)
    p["wk"], p["bk"] = _linear_init(keys[1], kv_dim, inner)
    p["wv"], p["bv"] = _linear_init(keys[2], kv_dim, inner)
    p["wo"], p["bo"] = _linear_init(keys[3], inner, q_dim)
    p["w1"], p["b1"] = _linear_init(keys[4], q_dim, ffn_hidden)
    p["w2"], p["b2"] = _linear_init(keys[5], ffn_hidden, q_dim)
    p["ln1_g"] = jnp.ones((q_dim,), jnp.float32)
    p["ln1_b"] = jnp.zeros((q_dim,), jnp.float32)
    p["ln2_g"] = jnp.ones((q_dim,), jnp.float32)
    p["ln2_b"] = jnp.zeros((q_dim,), jnp.float32)
    if with_img_proj:
        p["w_img"], p["b_img"] = _linear_init(keys[6], img_in, img_out)
    return p


# -----------------------------------------------------------------------------
# main
# -----------------------------------------------------------------------------
if __name__ == "__main__":
    geo_feat_channels = 32
    img_feat_channels = 48
    shape = (8, 8, 4)            # (X, Y, Z)
    dim_head = 16
    heads = 2
    ffn_hidden = 64              # from ffn_cfg
    B = 2
    X, Y, Z = shape

    key = jax.random.PRNGKey(0)
    k_xy, k_xz, k_yz, k_seg, k_img, k_ps, k_pc = jax.random.split(key, 7)

    # TPV planes (NCHW): xy [B,C,X,Y], xz [B,C,X,Z], yz [B,C,Y,Z]
    tpv_xy = jax.random.normal(k_xy, (B, geo_feat_channels, X, Y), jnp.float32)
    tpv_xz = jax.random.normal(k_xz, (B, geo_feat_channels, X, Z), jnp.float32)
    tpv_yz = jax.random.normal(k_yz, (B, geo_feat_channels, Y, Z), jnp.float32)
    tpv_feat = (tpv_xy, tpv_xz, tpv_yz)

    seg_feat = jax.random.normal(k_seg, (B, img_feat_channels, 8, 8), jnp.float32)
    image = jax.random.normal(k_img, (B, 3, 8, 8), jnp.float32)

    self_params = init_dfa_params(k_ps, geo_feat_channels, geo_feat_channels,
                                  heads, dim_head, ffn_hidden)
    cross_params = init_dfa_params(k_pc, geo_feat_channels, img_feat_channels,
                                   heads, dim_head, ffn_hidden,
                                   with_img_proj=True, img_in=3,
                                   img_out=img_feat_channels)

    fwd = jax.jit(functools.partial(semantic_guidance_forward,
                                    heads=heads, dim_head=dim_head))
    outs = fwd(tpv_feat, seg_feat, image, self_params, cross_params)
    outs = jax.block_until_ready(outs)

    # sanity: output planes keep the input plane shapes, finite values
    assert outs[0].shape == tpv_xy.shape
    assert outs[1].shape == tpv_xz.shape
    assert outs[2].shape == tpv_yz.shape
    assert outs[3].shape == tpv_xy.shape
    assert outs[4].shape == tpv_xz.shape
    assert outs[5].shape == tpv_yz.shape
    assert all(bool(jnp.isfinite(o).all()) for o in outs)

    print("KERNEL_OK")
</pallas_src>

<mosaic_0001>
module attributes {stable_mosaic.version = 11 : i64} {
  func.func @_semantic_guidance_kernel(%arg0: i32, %arg1: memref<1x32x128xf32, #tpu.memory_space<vmem>>, %arg2: memref<1x48x64xf32, #tpu.memory_space<vmem>>, %arg3: memref<1x8x64xf32, #tpu.memory_space<vmem>>, %arg4: memref<96x32xbf16, #tpu.memory_space<vmem>>, %arg5: memref<96x1xf32, #tpu.memory_space<vmem>>, %arg6: memref<32x32xbf16, #tpu.memory_space<vmem>>, %arg7: memref<32x1xf32, #tpu.memory_space<vmem>>, %arg8: memref<32x1xf32, #tpu.memory_space<vmem>>, %arg9: memref<32x1xf32, #tpu.memory_space<vmem>>, %arg10: memref<64x32xbf16, #tpu.memory_space<vmem>>, %arg11: memref<64x1xf32, #tpu.memory_space<vmem>>, %arg12: memref<32x64xbf16, #tpu.memory_space<vmem>>, %arg13: memref<32x1xf32, #tpu.memory_space<vmem>>, %arg14: memref<32x1xf32, #tpu.memory_space<vmem>>, %arg15: memref<32x1xf32, #tpu.memory_space<vmem>>, %arg16: memref<48x8xbf16, #tpu.memory_space<vmem>>, %arg17: memref<48x1xf32, #tpu.memory_space<vmem>>, %arg18: memref<32x32xbf16, #tpu.memory_space<vmem>>, %arg19: memref<32x1xf32, #tpu.memory_space<vmem>>, %arg20: memref<64x48xbf16, #tpu.memory_space<vmem>>, %arg21: memref<64x1xf32, #tpu.memory_space<vmem>>, %arg22: memref<32x32xbf16, #tpu.memory_space<vmem>>, %arg23: memref<32x1xf32, #tpu.memory_space<vmem>>, %arg24: memref<32x1xf32, #tpu.memory_space<vmem>>, %arg25: memref<32x1xf32, #tpu.memory_space<vmem>>, %arg26: memref<64x32xbf16, #tpu.memory_space<vmem>>, %arg27: memref<64x1xf32, #tpu.memory_space<vmem>>, %arg28: memref<32x64xbf16, #tpu.memory_space<vmem>>, %arg29: memref<32x1xf32, #tpu.memory_space<vmem>>, %arg30: memref<32x1xf32, #tpu.memory_space<vmem>>, %arg31: memref<32x1xf32, #tpu.memory_space<vmem>>, %arg32: memref<1x32x128xf32, #tpu.memory_space<vmem>>, %arg33: memref<1x32x128xf32, #tpu.memory_space<vmem>>) attributes {dimension_semantics = [#tpu.dimension_semantics<parallel>], iteration_bounds = array<i64: 2>, scalar_prefetch = 0 : i64, scratch_operands = 0 : i64, tpu.core_type = #tpu.core_type<tc>, window_params = [{transform_indices = @transform_0, window_bounds = array<i64: 1, 32, 128>}, {transform_indices = @transform_1, window_bounds = array<i64: 1, 48, 64>}, {transform_indices = @transform_2, window_bounds = array<i64: 1, 8, 64>}, {pipeline_mode = #tpu.pipeline_mode<synchronous>, transform_indices = @transform_3, window_bounds = array<i64: 96, 32>}, {pipeline_mode = #tpu.pipeline_mode<synchronous>, transform_indices = @transform_4, window_bounds = array<i64: 96, 1>}, {pipeline_mode = #tpu.pipeline_mode<synchronous>, transform_indices = @transform_5, window_bounds = array<i64: 32, 32>}, {pipeline_mode = #tpu.pipeline_mode<synchronous>, transform_indices = @transform_6, window_bounds = array<i64: 32, 1>}, {pipeline_mode = #tpu.pipeline_mode<synchronous>, transform_indices = @transform_7, window_bounds = array<i64: 32, 1>}, {pipeline_mode = #tpu.pipeline_mode<synchronous>, transform_indices = @transform_8, window_bounds = array<i64: 32, 1>}, {pipeline_mode = #tpu.pipeline_mode<synchronous>, transform_indices = @transform_9, window_bounds = array<i64: 64, 32>}, {pipeline_mode = #tpu.pipeline_mode<synchronous>, transform_indices = @transform_10, window_bounds = array<i64: 64, 1>}, {pipeline_mode = #tpu.pipeline_mode<synchronous>, transform_indices = @transform_11, window_bounds = array<i64: 32, 64>}, {pipeline_mode = #tpu.pipeline_mode<synchronous>, transform_indices = @transform_12, window_bounds = array<i64: 32, 1>}, {pipeline_mode = #tpu.pipeline_mode<synchronous>, transform_indices = @transform_13, window_bounds = array<i64: 32, 1>}, {pipeline_mode = #tpu.pipeline_mode<synchronous>, transform_indices = @transform_14, window_bounds = array<i64: 32, 1>}, {pipeline_mode = #tpu.pipeline_mode<synchronous>, transform_indices = @transform_15, window_bounds = array<i64: 48, 8>}, {pipeline_mode = #tpu.pipeline_mode<synchronous>, transform_indices = @transform_16, window_bounds = array<i64: 48, 1>}, {pipeline_mode = #tpu.pipeline_mode<synchronous>, transform_indices = @transform_17, window_bounds = array<i64: 32, 32>}, {pipeline_mode = #tpu.pipeline_mode<synchronous>, transform_indices = @transform_18, window_bounds = array<i64: 32, 1>}, {pipeline_mode = #tpu.pipeline_mode<synchronous>, transform_indices = @transform_19, window_bounds = array<i64: 64, 48>}, {pipeline_mode = #tpu.pipeline_mode<synchronous>, transform_indices = @transform_20, window_bounds = array<i64: 64, 1>}, {pipeline_mode = #tpu.pipeline_mode<synchronous>, transform_indices = @transform_21, window_bounds = array<i64: 32, 32>}, {pipeline_mode = #tpu.pipeline_mode<synchronous>, transform_indices = @transform_22, window_bounds = array<i64: 32, 1>}, {pipeline_mode = #tpu.pipeline_mode<synchronous>, transform_indices = @transform_23, window_bounds = array<i64: 32, 1>}, {pipeline_mode = #tpu.pipeline_mode<synchronous>, transform_indices = @transform_24, window_bounds = array<i64: 32, 1>}, {pipeline_mode = #tpu.pipeline_mode<synchronous>, transform_indices = @transform_25, window_bounds = array<i64: 64, 32>}, {pipeline_mode = #tpu.pipeline_mode<synchronous>, transform_indices = @transform_26, window_bounds = array<i64: 64, 1>}, {pipeline_mode = #tpu.pipeline_mode<synchronous>, transform_indices = @transform_27, window_bounds = array<i64: 32, 64>}, {pipeline_mode = #tpu.pipeline_mode<synchronous>, transform_indices = @transform_28, window_bounds = array<i64: 32, 1>}, {pipeline_mode = #tpu.pipeline_mode<synchronous>, transform_indices = @transform_29, window_bounds = array<i64: 32, 1>}, {pipeline_mode = #tpu.pipeline_mode<synchronous>, transform_indices = @transform_30, window_bounds = array<i64: 32, 1>}, {transform_indices = @transform_31, window_bounds = array<i64: 1, 32, 128>}, {transform_indices = @transform_32, window_bounds = array<i64: 1, 32, 128>}]} {
    %c0 = arith.constant 0 : index
    %c0_0 = arith.constant 0 : index
    %c0_1 = arith.constant 0 : index
    %0 = vector.load %arg1[%c0, %c0_0, %c0_1] : memref<1x32x128xf32, #tpu.memory_space<vmem>>, vector<1x32x128xf32>
    %1 = vector.shape_cast %0 : vector<1x32x128xf32> to vector<32x128xf32>
    %2 = arith.truncf %1 : vector<32x128xf32> to vector<32x128xbf16>
    %c0_2 = arith.constant 0 : index
    %c0_3 = arith.constant 0 : index
    %3 = vector.load %arg4[%c0_2, %c0_3] : memref<96x32xbf16, #tpu.memory_space<vmem>>, vector<96x32xbf16>
    %cst = arith.constant dense<0.000000e+00> : vector<96x128xf32>
    %4 = tpu.matmul %3, %2, %cst {dimension_numbers = #tpu.dot_dimension_numbers<[1], [0], [0], [1], [0, 0, 1, 1], [], []>} : vector<96x32xbf16>, vector<32x128xbf16>, vector<96x128xf32> -> vector<96x128xf32>
    %c0_4 = arith.constant 0 : index
    %c0_5 = arith.constant 0 : index
    %5 = vector.load %arg5[%c0_4, %c0_5] : memref<96x1xf32, #tpu.memory_space<vmem>>, vector<96x1xf32>
    %6 = vector.broadcast %5 : vector<96x1xf32> to vector<96x128xf32>
    %7 = arith.addf %4, %6 : vector<96x128xf32>
    %8 = vector.extract_strided_slice %7 {offsets = [0, 0], sizes = [32, 128], strides = [1, 1]} : vector<96x128xf32> to vector<32x128xf32>
    %9 = vector.shape_cast %8 : vector<32x128xf32> to vector<2x16x128xf32>
    %10 = vector.extract_strided_slice %7 {offsets = [32, 0], sizes = [32, 128], strides = [1, 1]} : vector<96x128xf32> to vector<32x128xf32>
    %11 = vector.shape_cast %10 : vector<32x128xf32> to vector<2x16x128xf32>
    %12 = vector.extract_strided_slice %7 {offsets = [64, 0], sizes = [32, 128], strides = [1, 1]} : vector<96x128xf32> to vector<32x128xf32>
    %13 = vector.shape_cast %12 : vector<32x128xf32> to vector<2x16x128xf32>
    %14 = tpu.iota {dimensions = array<i32: 0>} : vector<128x128xi32>
    %15 = tpu.iota {dimensions = array<i32: 1>} : vector<128x128xi32>
    %c0_i32 = arith.constant 0 : i32
    %16 = vector.broadcast %c0_i32 : i32 to vector<128x128xi32>
    %c0_i32_6 = arith.constant 0 : i32
    %17 = vector.broadcast %c0_i32_6 : i32 to vector<128x128xi32>
    %c64_i32 = arith.constant 64 : i32
    %18 = vector.broadcast %c64_i32 : i32 to vector<128x128xi32>
    %19 = arith.cmpi sge, %14, %18 : vector<128x128xi32>
    %20 = arith.extui %19 : vector<128x128xi1> to vector<128x128xi32>
    %21 = arith.addi %16, %20 : vector<128x128xi32>
    %c64_i32_7 = arith.constant 64 : i32
    %22 = vector.broadcast %c64_i32_7 : i32 to vector<128x128xi32>
    %23 = arith.cmpi sge, %15, %22 : vector<128x128xi32>
    %24 = arith.extui %23 : vector<128x128xi1> to vector<128x128xi32>
    %25 = arith.addi %17, %24 : vector<128x128xi32>
    %c96_i32 = arith.constant 96 : i32
    %26 = vector.broadcast %c96_i32 : i32 to vector<128x128xi32>
    %27 = arith.cmpi sge, %14, %26 : vector<128x128xi32>
    %28 = arith.extui %27 : vector<128x128xi1> to vector<128x128xi32>
    %29 = arith.addi %21, %28 : vector<128x128xi32>
    %c96_i32_8 = arith.constant 96 : i32
    %30 = vector.broadcast %c96_i32_8 : i32 to vector<128x128xi32>
    %31 = arith.cmpi sge, %15, %30 : vector<128x128xi32>
    %32 = arith.extui %31 : vector<128x128xi1> to vector<128x128xi32>
    %33 = arith.addi %25, %32 : vector<128x128xi32>
    %34 = arith.cmpi eq, %29, %33 : vector<128x128xi32>
    %cst_9 = arith.constant 0.000000e+00 : f32
    %cst_10 = arith.constant -1.000000e+30 : f32
    %35 = vector.broadcast %cst_9 : f32 to vector<128x128xf32>
    %36 = vector.broadcast %cst_10 : f32 to vector<128x128xf32>
    %37 = arith.select %34, %35, %36 : vector<128x128xi1>, vector<128x128xf32>
    %38 = arith.truncf %11 : vector<2x16x128xf32> to vector<2x16x128xbf16>
    %39 = arith.truncf %9 : vector<2x16x128xf32> to vector<2x16x128xbf16>
    %cst_11 = arith.constant dense<0.000000e+00> : vector<2x128x128xf32>
    %40 = tpu.matmul %38, %39, %cst_11 {dimension_numbers = #tpu.dot_dimension_numbers<[1], [1], [2], [2], [0, 0, 0, 2, 1, 2], [0], [0]>} : vector<2x16x128xbf16>, vector<2x16x128xbf16>, vector<2x128x128xf32> -> vector<2x128x128xf32>
    %41 = vector.shape_cast %37 : vector<128x128xf32> to vector<1x128x128xf32>
    %42 = vector.broadcast %41 : vector<1x128x128xf32> to vector<2x128x128xf32>
    %43 = arith.addf %40, %42 : vector<2x128x128xf32>
    %cst_12 = arith.constant dense<0xFF800000> : vector<2x128xf32>
    %44 = vector.multi_reduction <maximumf>, %43, %cst_12 [1] : vector<2x128x128xf32> to vector<2x128xf32>
    %45 = vector.shape_cast %44 : vector<2x128xf32> to vector<2x1x128xf32>
    %46 = vector.broadcast %45 : vector<2x1x128xf32> to vector<2x128x128xf32>
    %47 = arith.subf %43, %46 : vector<2x128x128xf32>
    %48 = math.exp %47 : vector<2x128x128xf32>
    %cst_13 = arith.constant dense<0.000000e+00> : vector<2x128xf32>
    %49 = vector.multi_reduction <add>, %48, %cst_13 [1] : vector<2x128x128xf32> to vector<2x128xf32>
    %50 = vector.shape_cast %49 : vector<2x128xf32> to vector<2x1x128xf32>
    %51 = arith.truncf %13 : vector<2x16x128xf32> to vector<2x16x128xbf16>
    %52 = arith.truncf %48 : vector<2x128x128xf32> to vector<2x128x128xbf16>
    %cst_14 = arith.constant dense<0.000000e+00> : vector<2x16x128xf32>
    %53 = tpu.matmul %51, %52, %cst_14 {dimension_numbers = #tpu.dot_dimension_numbers<[2], [1], [1], [2], [0, 0, 0, 1, 1, 2], [0], [0]>} : vector<2x16x128xbf16>, vector<2x128x128xbf16>, vector<2x16x128xf32> -> vector<2x16x128xf32>
    %54 = tpu.reciprocal %50 {approx = true} : vector<2x1x128xf32> -> vector<2x1x128xf32>
    %55 = vector.broadcast %54 : vector<2x1x128xf32> to vector<2x16x128xf32>
    %56 = arith.mulf %53, %55 : vector<2x16x128xf32>
    %57 = vector.shape_cast %56 : vector<2x16x128xf32> to vector<32x128xf32>
    %c0_15 = arith.constant 0 : index
    %c0_16 = arith.constant 0 : index
    %58 = vector.load %arg6[%c0_15, %c0_16] : memref<32x32xbf16, #tpu.memory_space<vmem>>, vector<32x32xbf16>
    %59 = arith.truncf %57 : vector<32x128xf32> to vector<32x128xbf16>
    %cst_17 = arith.constant dense<0.000000e+00> : vector<32x128xf32>
    %60 = tpu.matmul %58, %59, %cst_17 {dimension_numbers = #tpu.dot_dimension_numbers<[1], [0], [0], [1], [0, 0, 1, 1], [], []>} : vector<32x32xbf16>, vector<32x128xbf16>, vector<32x128xf32> -> vector<32x128xf32>
    %c0_18 = arith.constant 0 : index
    %c0_19 = arith.constant 0 : index
    %61 = vector.load %arg7[%c0_18, %c0_19] : memref<32x1xf32, #tpu.memory_space<vmem>>, vector<32x1xf32>
    %62 = vector.broadcast %61 : vector<32x1xf32> to vector<32x128xf32>
    %63 = arith.addf %60, %62 : vector<32x128xf32>
    %64 = arith.addf %1, %63 : vector<32x128xf32>
    %c0_20 = arith.constant 0 : index
    %c0_21 = arith.constant 0 : index
    %65 = vector.load %arg8[%c0_20, %c0_21] : memref<32x1xf32, #tpu.memory_space<vmem>>, vector<32x1xf32>
    %c0_22 = arith.constant 0 : index
    %c0_23 = arith.constant 0 : index
    %66 = vector.load %arg9[%c0_22, %c0_23] : memref<32x1xf32, #tpu.memory_space<vmem>>, vector<32x1xf32>
    %cst_24 = arith.constant dense<0.000000e+00> : vector<128xf32>
    %67 = vector.multi_reduction <add>, %64, %cst_24 [0] : vector<32x128xf32> to vector<128xf32>
    %68 = vector.shape_cast %67 : vector<128xf32> to vector<1x128xf32>
    %cst_25 = arith.constant 3.200000e+01 : f32
    %69 = vector.broadcast %cst_25 : f32 to vector<1x128xf32>
    %70 = arith.divf %68, %69 : vector<1x128xf32>
    %71 = vector.broadcast %70 : vector<1x128xf32> to vector<32x128xf32>
    %72 = arith.subf %64, %71 : vector<32x128xf32>
    %73 = arith.mulf %72, %72 : vector<32x128xf32>
    %cst_26 = arith.constant dense<0.000000e+00> : vector<128xf32>
    %74 = vector.multi_reduction <add>, %73, %cst_26 [0] : vector<32x128xf32> to vector<128xf32>
    %75 = vector.shape_cast %74 : vector<128xf32> to vector<1x128xf32>
    %cst_27 = arith.constant 3.200000e+01 : f32
    %76 = vector.broadcast %cst_27 : f32 to vector<1x128xf32>
    %77 = arith.divf %75, %76 : vector<1x128xf32>
    %78 = vector.broadcast %70 : vector<1x128xf32> to vector<32x128xf32>
    %79 = arith.subf %64, %78 : vector<32x128xf32>
    %cst_28 = arith.constant 9.99999974E-6 : f32
    %80 = vector.broadcast %cst_28 : f32 to vector<1x128xf32>
    %81 = arith.addf %77, %80 : vector<1x128xf32>
    %82 = math.rsqrt %81 : vector<1x128xf32>
    %83 = vector.broadcast %82 : vector<1x128xf32> to vector<32x128xf32>
    %84 = arith.mulf %79, %83 : vector<32x128xf32>
    %85 = vector.broadcast %65 : vector<32x1xf32> to vector<32x128xf32>
    %86 = arith.mulf %84, %85 : vector<32x128xf32>
    %87 = vector.broadcast %66 : vector<32x1xf32> to vector<32x128xf32>
    %88 = arith.addf %86, %87 : vector<32x128xf32>
    %c0_29 = arith.constant 0 : index
    %c0_30 = arith.constant 0 : index
    %89 = vector.load %arg10[%c0_29, %c0_30] : memref<64x32xbf16, #tpu.memory_space<vmem>>, vector<64x32xbf16>
    %90 = arith.truncf %88 : vector<32x128xf32> to vector<32x128xbf16>
    %cst_31 = arith.constant dense<0.000000e+00> : vector<64x128xf32>
    %91 = tpu.matmul %89, %90, %cst_31 {dimension_numbers = #tpu.dot_dimension_numbers<[1], [0], [0], [1], [0, 0, 1, 1], [], []>} : vector<64x32xbf16>, vector<32x128xbf16>, vector<64x128xf32> -> vector<64x128xf32>
    %c0_32 = arith.constant 0 : index
    %c0_33 = arith.constant 0 : index
    %92 = vector.load %arg11[%c0_32, %c0_33] : memref<64x1xf32, #tpu.memory_space<vmem>>, vector<64x1xf32>
    %93 = vector.broadcast %92 : vector<64x1xf32> to vector<64x128xf32>
    %94 = arith.addf %91, %93 : vector<64x128xf32>
    %95 = arith.mulf %94, %94 : vector<64x128xf32>
    %96 = arith.mulf %94, %95 : vector<64x128xf32>
    %cst_34 = arith.constant 4.471500e-02 : f32
    %97 = vector.broadcast %cst_34 : f32 to vector<64x128xf32>
    %98 = arith.mulf %97, %96 : vector<64x128xf32>
    %99 = arith.addf %94, %98 : vector<64x128xf32>
    %cst_35 = arith.constant 0.797884583 : f32
    %100 = vector.broadcast %cst_35 : f32 to vector<64x128xf32>
    %101 = arith.mulf %100, %99 : vector<64x128xf32>
    %102 = math.tanh %101 : vector<64x128xf32>
    %cst_36 = arith.constant 1.000000e+00 : f32
    %103 = vector.broadcast %cst_36 : f32 to vector<64x128xf32>
    %104 = arith.addf %103, %102 : vector<64x128xf32>
    %cst_37 = arith.constant 5.000000e-01 : f32
    %105 = vector.broadcast %cst_37 : f32 to vector<64x128xf32>
    %106 = arith.mulf %105, %104 : vector<64x128xf32>
    %107 = arith.mulf %94, %106 : vector<64x128xf32>
    %c0_38 = arith.constant 0 : index
    %c0_39 = arith.constant 0 : index
    %108 = vector.load %arg12[%c0_38, %c0_39] : memref<32x64xbf16, #tpu.memory_space<vmem>>, vector<32x64xbf16>
    %109 = arith.truncf %107 : vector<64x128xf32> to vector<64x128xbf16>
    %cst_40 = arith.constant dense<0.000000e+00> : vector<32x128xf32>
    %110 = tpu.matmul %108, %109, %cst_40 {dimension_numbers = #tpu.dot_dimension_numbers<[1], [0], [0], [1], [0, 0, 1, 1], [], []>} : vector<32x64xbf16>, vector<64x128xbf16>, vector<32x128xf32> -> vector<32x128xf32>
    %c0_41 = arith.constant 0 : index
    %c0_42 = arith.constant 0 : index
    %111 = vector.load %arg13[%c0_41, %c0_42] : memref<32x1xf32, #tpu.memory_space<vmem>>, vector<32x1xf32>
    %112 = vector.broadcast %111 : vector<32x1xf32> to vector<32x128xf32>
    %113 = arith.addf %110, %112 : vector<32x128xf32>
    %114 = arith.addf %88, %113 : vector<32x128xf32>
    %c0_43 = arith.constant 0 : index
    %c0_44 = arith.constant 0 : index
    %115 = vector.load %arg14[%c0_43, %c0_44] : memref<32x1xf32, #tpu.memory_space<vmem>>, vector<32x1xf32>
    %c0_45 = arith.constant 0 : index
    %c0_46 = arith.constant 0 : index
    %116 = vector.load %arg15[%c0_45, %c0_46] : memref<32x1xf32, #tpu.memory_space<vmem>>, vector<32x1xf32>
    %cst_47 = arith.constant dense<0.000000e+00> : vector<128xf32>
    %117 = vector.multi_reduction <add>, %114, %cst_47 [0] : vector<32x128xf32> to vector<128xf32>
    %118 = vector.shape_cast %117 : vector<128xf32> to vector<1x128xf32>
    %cst_48 = arith.constant 3.200000e+01 : f32
    %119 = vector.broadcast %cst_48 : f32 to vector<1x128xf32>
    %120 = arith.divf %118, %119 : vector<1x128xf32>
    %121 = vector.broadcast %120 : vector<1x128xf32> to vector<32x128xf32>
    %122 = arith.subf %114, %121 : vector<32x128xf32>
    %123 = arith.mulf %122, %122 : vector<32x128xf32>
    %cst_49 = arith.constant dense<0.000000e+00> : vector<128xf32>
    %124 = vector.multi_reduction <add>, %123, %cst_49 [0] : vector<32x128xf32> to vector<128xf32>
    %125 = vector.shape_cast %124 : vector<128xf32> to vector<1x128xf32>
    %cst_50 = arith.constant 3.200000e+01 : f32
    %126 = vector.broadcast %cst_50 : f32 to vector<1x128xf32>
    %127 = arith.divf %125, %126 : vector<1x128xf32>
    %128 = vector.broadcast %120 : vector<1x128xf32> to vector<32x128xf32>
    %129 = arith.subf %114, %128 : vector<32x128xf32>
    %cst_51 = arith.constant 9.99999974E-6 : f32
    %130 = vector.broadcast %cst_51 : f32 to vector<1x128xf32>
    %131 = arith.addf %127, %130 : vector<1x128xf32>
    %132 = math.rsqrt %131 : vector<1x128xf32>
    %133 = vector.broadcast %132 : vector<1x128xf32> to vector<32x128xf32>
    %134 = arith.mulf %129, %133 : vector<32x128xf32>
    %135 = vector.broadcast %115 : vector<32x1xf32> to vector<32x128xf32>
    %136 = arith.mulf %134, %135 : vector<32x128xf32>
    %137 = vector.broadcast %116 : vector<32x1xf32> to vector<32x128xf32>
    %138 = arith.addf %136, %137 : vector<32x128xf32>
    %c0_52 = arith.constant 0 : index
    %c0_53 = arith.constant 0 : index
    %c0_54 = arith.constant 0 : index
    %139 = vector.load %arg32[%c0_52, %c0_53, %c0_54] : memref<1x32x128xf32, #tpu.memory_space<vmem>>, vector<1x32x128xf32>
    %140 = vector.shape_cast %139 : vector<1x32x128xf32> to vector<32x128xf32>
    %141 = vector.shape_cast %138 : vector<32x128xf32> to vector<1x32x128xf32>
    tpu.vector_store %arg32[%c0_52, %c0_53, %c0_54], %141 {strides = array<i32>} : memref<1x32x128xf32, #tpu.memory_space<vmem>>, vector<1x32x128xf32>,
    %c0_55 = arith.constant 0 : index
    %c0_56 = arith.constant 0 : index
    %c0_57 = arith.constant 0 : index
    %142 = vector.load %arg2[%c0_55, %c0_56, %c0_57] : memref<1x48x64xf32, #tpu.memory_space<vmem>>, vector<1x48x64xf32>
    %143 = vector.shape_cast %142 : vector<1x48x64xf32> to vector<48x64xf32>
    %c0_58 = arith.constant 0 : index
    %c0_59 = arith.constant 0 : index
    %c0_60 = arith.constant 0 : index
    %144 = vector.load %arg3[%c0_58, %c0_59, %c0_60] : memref<1x8x64xf32, #tpu.memory_space<vmem>>, vector<1x8x64xf32>
    %145 = vector.shape_cast %144 : vector<1x8x64xf32> to vector<8x64xf32>
    %c0_61 = arith.constant 0 : index
    %c0_62 = arith.constant 0 : index
    %146 = vector.load %arg16[%c0_61, %c0_62] : memref<48x8xbf16, #tpu.memory_space<vmem>>, vector<48x8xbf16>
    %147 = arith.truncf %145 : vector<8x64xf32> to vector<8x64xbf16>
    %cst_63 = arith.constant dense<0.000000e+00> : vector<48x64xf32>
    %148 = tpu.matmul %146, %147, %cst_63 {dimension_numbers = #tpu.dot_dimension_numbers<[1], [0], [0], [1], [0, 0, 1, 1], [], []>} : vector<48x8xbf16>, vector<8x64xbf16>, vector<48x64xf32> -> vector<48x64xf32>
    %149 = arith.addf %143, %148 : vector<48x64xf32>
    %c0_64 = arith.constant 0 : index
    %c0_65 = arith.constant 0 : index
    %150 = vector.load %arg17[%c0_64, %c0_65] : memref<48x1xf32, #tpu.memory_space<vmem>>, vector<48x1xf32>
    %151 = vector.broadcast %150 : vector<48x1xf32> to vector<48x64xf32>
    %152 = arith.addf %149, %151 : vector<48x64xf32>
    %c0_66 = arith.constant 0 : index
    %c0_67 = arith.constant 0 : index
    %153 = vector.load %arg18[%c0_66, %c0_67] : memref<32x32xbf16, #tpu.memory_space<vmem>>, vector<32x32xbf16>
    %cst_68 = arith.constant dense<0.000000e+00> : vector<32x128xf32>
    %154 = tpu.matmul %153, %2, %cst_68 {dimension_numbers = #tpu.dot_dimension_numbers<[1], [0], [0], [1], [0, 0, 1, 1], [], []>} : vector<32x32xbf16>, vector<32x128xbf16>, vector<32x128xf32> -> vector<32x128xf32>
    %c0_69 = arith.constant 0 : index
    %c0_70 = arith.constant 0 : index
    %155 = vector.load %arg19[%c0_69, %c0_70] : memref<32x1xf32, #tpu.memory_space<vmem>>, vector<32x1xf32>
    %156 = vector.broadcast %155 : vector<32x1xf32> to vector<32x128xf32>
    %157 = arith.addf %154, %156 : vector<32x128xf32>
    %c0_71 = arith.constant 0 : index
    %c0_72 = arith.constant 0 : index
    %158 = vector.load %arg20[%c0_71, %c0_72] : memref<64x48xbf16, #tpu.memory_space<vmem>>, vector<64x48xbf16>
    %159 = arith.truncf %152 : vector<48x64xf32> to vector<48x64xbf16>
    %cst_73 = arith.constant dense<0.000000e+00> : vector<64x64xf32>
    %160 = tpu.matmul %158, %159, %cst_73 {dimension_numbers = #tpu.dot_dimension_numbers<[1], [0], [0], [1], [0, 0, 1, 1], [], []>} : vector<64x48xbf16>, vector<48x64xbf16>, vector<64x64xf32> -> vector<64x64xf32>
    %c0_74 = arith.constant 0 : index
    %c0_75 = arith.constant 0 : index
    %161 = vector.load %arg21[%c0_74, %c0_75] : memref<64x1xf32, #tpu.memory_space<vmem>>, vector<64x1xf32>
    %162 = vector.broadcast %161 : vector<64x1xf32> to vector<64x64xf32>
    %163 = arith.addf %160, %162 : vector<64x64xf32>
    %164 = vector.shape_cast %157 : vector<32x128xf32> to vector<2x16x128xf32>
    %165 = vector.extract_strided_slice %163 {offsets = [0, 0], sizes = [32, 64], strides = [1, 1]} : vector<64x64xf32> to vector<32x64xf32>
    %166 = vector.shape_cast %165 : vector<32x64xf32> to vector<2x16x64xf32>
    %167 = vector.extract_strided_slice %163 {offsets = [32, 0], sizes = [32, 64], strides = [1, 1]} : vector<64x64xf32> to vector<32x64xf32>
    %168 = vector.shape_cast %167 : vector<32x64xf32> to vector<2x16x64xf32>
    %169 = arith.truncf %166 : vector<2x16x64xf32> to vector<2x16x64xbf16>
    %170 = arith.truncf %164 : vector<2x16x128xf32> to vector<2x16x128xbf16>
    %cst_76 = arith.constant dense<0.000000e+00> : vector<2x64x128xf32>
    %171 = tpu.matmul %169, %170, %cst_76 {dimension_numbers = #tpu.dot_dimension_numbers<[1], [1], [2], [2], [0, 0, 0, 2, 1, 2], [0], [0]>} : vector<2x16x64xbf16>, vector<2x16x128xbf16>, vector<2x64x128xf32> -> vector<2x64x128xf32>
    %cst_77 = arith.constant dense<0xFF800000> : vector<2x128xf32>
    %172 = vector.multi_reduction <maximumf>, %171, %cst_77 [1] : vector<2x64x128xf32> to vector<2x128xf32>
    %173 = vector.shape_cast %172 : vector<2x128xf32> to vector<2x1x128xf32>
    %174 = vector.broadcast %173 : vector<2x1x128xf32> to vector<2x64x128xf32>
    %175 = arith.subf %171, %174 : vector<2x64x128xf32>
    %176 = math.exp %175 : vector<2x64x128xf32>
    %cst_78 = arith.constant dense<0.000000e+00> : vector<2x128xf32>
    %177 = vector.multi_reduction <add>, %176, %cst_78 [1] : vector<2x64x128xf32> to vector<2x128xf32>
    %178 = vector.shape_cast %177 : vector<2x128xf32> to vector<2x1x128xf32>
    %179 = arith.truncf %168 : vector<2x16x64xf32> to vector<2x16x64xbf16>
    %180 = arith.truncf %176 : vector<2x64x128xf32> to vector<2x64x128xbf16>
    %cst_79 = arith.constant dense<0.000000e+00> : vector<2x16x128xf32>
    %181 = tpu.matmul %179, %180, %cst_79 {dimension_numbers = #tpu.dot_dimension_numbers<[2], [1], [1], [2], [0, 0, 0, 1, 1, 2], [0], [0]>} : vector<2x16x64xbf16>, vector<2x64x128xbf16>, vector<2x16x128xf32> -> vector<2x16x128xf32>
    %182 = tpu.reciprocal %178 {approx = true} : vector<2x1x128xf32> -> vector<2x1x128xf32>
    %183 = vector.broadcast %182 : vector<2x1x128xf32> to vector<2x16x128xf32>
    %184 = arith.mulf %181, %183 : vector<2x16x128xf32>
    %185 = vector.shape_cast %184 : vector<2x16x128xf32> to vector<32x128xf32>
    %c0_80 = arith.constant 0 : index
    %c0_81 = arith.constant 0 : index
    %186 = vector.load %arg22[%c0_80, %c0_81] : memref<32x32xbf16, #tpu.memory_space<vmem>>, vector<32x32xbf16>
    %187 = arith.truncf %185 : vector<32x128xf32> to vector<32x128xbf16>
    %cst_82 = arith.constant dense<0.000000e+00> : vector<32x128xf32>
    %188 = tpu.matmul %186, %187, %cst_82 {dimension_numbers = #tpu.dot_dimension_numbers<[1], [0], [0], [1], [0, 0, 1, 1], [], []>} : vector<32x32xbf16>, vector<32x128xbf16>, vector<32x128xf32> -> vector<32x128xf32>
    %c0_83 = arith.constant 0 : index
    %c0_84 = arith.constant 0 : index
    %189 = vector.load %arg23[%c0_83, %c0_84] : memref<32x1xf32, #tpu.memory_space<vmem>>, vector<32x1xf32>
    %190 = vector.broadcast %189 : vector<32x1xf32> to vector<32x128xf32>
    %191 = arith.addf %188, %190 : vector<32x128xf32>
    %192 = arith.addf %1, %191 : vector<32x128xf32>
    %c0_85 = arith.constant 0 : index
    %c0_86 = arith.constant 0 : index
    %193 = vector.load %arg24[%c0_85, %c0_86] : memref<32x1xf32, #tpu.memory_space<vmem>>, vector<32x1xf32>
    %c0_87 = arith.constant 0 : index
    %c0_88 = arith.constant 0 : index
    %194 = vector.load %arg25[%c0_87, %c0_88] : memref<32x1xf32, #tpu.memory_space<vmem>>, vector<32x1xf32>
    %cst_89 = arith.constant dense<0.000000e+00> : vector<128xf32>
    %195 = vector.multi_reduction <add>, %192, %cst_89 [0] : vector<32x128xf32> to vector<128xf32>
    %196 = vector.shape_cast %195 : vector<128xf32> to vector<1x128xf32>
    %cst_90 = arith.constant 3.200000e+01 : f32
    %197 = vector.broadcast %cst_90 : f32 to vector<1x128xf32>
    %198 = arith.divf %196, %197 : vector<1x128xf32>
    %199 = vector.broadcast %198 : vector<1x128xf32> to vector<32x128xf32>
    %200 = arith.subf %192, %199 : vector<32x128xf32>
    %201 = arith.mulf %200, %200 : vector<32x128xf32>
    %cst_91 = arith.constant dense<0.000000e+00> : vector<128xf32>
    %202 = vector.multi_reduction <add>, %201, %cst_91 [0] : vector<32x128xf32> to vector<128xf32>
    %203 = vector.shape_cast %202 : vector<128xf32> to vector<1x128xf32>
    %cst_92 = arith.constant 3.200000e+01 : f32
    %204 = vector.broadcast %cst_92 : f32 to vector<1x128xf32>
    %205 = arith.divf %203, %204 : vector<1x128xf32>
    %206 = vector.broadcast %198 : vector<1x128xf32> to vector<32x128xf32>
    %207 = arith.subf %192, %206 : vector<32x128xf32>
    %cst_93 = arith.constant 9.99999974E-6 : f32
    %208 = vector.broadcast %cst_93 : f32 to vector<1x128xf32>
    %209 = arith.addf %205, %208 : vector<1x128xf32>
    %210 = math.rsqrt %209 : vector<1x128xf32>
    %211 = vector.broadcast %210 : vector<1x128xf32> to vector<32x128xf32>
    %212 = arith.mulf %207, %211 : vector<32x128xf32>
    %213 = vector.broadcast %193 : vector<32x1xf32> to vector<32x128xf32>
    %214 = arith.mulf %212, %213 : vector<32x128xf32>
    %215 = vector.broadcast %194 : vector<32x1xf32> to vector<32x128xf32>
    %216 = arith.addf %214, %215 : vector<32x128xf32>
    %c0_94 = arith.constant 0 : index
    %c0_95 = arith.constant 0 : index
    %217 = vector.load %arg26[%c0_94, %c0_95] : memref<64x32xbf16, #tpu.memory_space<vmem>>, vector<64x32xbf16>
    %218 = arith.truncf %216 : vector<32x128xf32> to vector<32x128xbf16>
    %cst_96 = arith.constant dense<0.000000e+00> : vector<64x128xf32>
    %219 = tpu.matmul %217, %218, %cst_96 {dimension_numbers = #tpu.dot_dimension_numbers<[1], [0], [0], [1], [0, 0, 1, 1], [], []>} : vector<64x32xbf16>, vector<32x128xbf16>, vector<64x128xf32> -> vector<64x128xf32>
    %c0_97 = arith.constant 0 : index
    %c0_98 = arith.constant 0 : index
    %220 = vector.load %arg27[%c0_97, %c0_98] : memref<64x1xf32, #tpu.memory_space<vmem>>, vector<64x1xf32>
    %221 = vector.broadcast %220 : vector<64x1xf32> to vector<64x128xf32>
    %222 = arith.addf %219, %221 : vector<64x128xf32>
    %223 = arith.mulf %222, %222 : vector<64x128xf32>
    %224 = arith.mulf %222, %223 : vector<64x128xf32>
    %cst_99 = arith.constant 4.471500e-02 : f32
    %225 = vector.broadcast %cst_99 : f32 to vector<64x128xf32>
    %226 = arith.mulf %225, %224 : vector<64x128xf32>
    %227 = arith.addf %222, %226 : vector<64x128xf32>
    %cst_100 = arith.constant 0.797884583 : f32
    %228 = vector.broadcast %cst_100 : f32 to vector<64x128xf32>
    %229 = arith.mulf %228, %227 : vector<64x128xf32>
    %230 = math.tanh %229 : vector<64x128xf32>
    %cst_101 = arith.constant 1.000000e+00 : f32
    %231 = vector.broadcast %cst_101 : f32 to vector<64x128xf32>
    %232 = arith.addf %231, %230 : vector<64x128xf32>
    %cst_102 = arith.constant 5.000000e-01 : f32
    %233 = vector.broadcast %cst_102 : f32 to vector<64x128xf32>
    %234 = arith.mulf %233, %232 : vector<64x128xf32>
    %235 = arith.mulf %222, %234 : vector<64x128xf32>
    %c0_103 = arith.constant 0 : index
    %c0_104 = arith.constant 0 : index
    %236 = vector.load %arg28[%c0_103, %c0_104] : memref<32x64xbf16, #tpu.memory_space<vmem>>, vector<32x64xbf16>
    %237 = arith.truncf %235 : vector<64x128xf32> to vector<64x128xbf16>
    %cst_105 = arith.constant dense<0.000000e+00> : vector<32x128xf32>
    %238 = tpu.matmul %236, %237, %cst_105 {dimension_numbers = #tpu.dot_dimension_numbers<[1], [0], [0], [1], [0, 0, 1, 1], [], []>} : vector<32x64xbf16>, vector<64x128xbf16>, vector<32x128xf32> -> vector<32x128xf32>
    %c0_106 = arith.constant 0 : index
    %c0_107 = arith.constant 0 : index
    %239 = vector.load %arg29[%c0_106, %c0_107] : memref<32x1xf32, #tpu.memory_space<vmem>>, vector<32x1xf32>
    %240 = vector.broadcast %239 : vector<32x1xf32> to vector<32x128xf32>
    %241 = arith.addf %238, %240 : vector<32x128xf32>
    %242 = arith.addf %216, %241 : vector<32x128xf32>
    %c0_108 = arith.constant 0 : index
    %c0_109 = arith.constant 0 : index
    %243 = vector.load %arg30[%c0_108, %c0_109] : memref<32x1xf32, #tpu.memory_space<vmem>>, vector<32x1xf32>
    %c0_110 = arith.constant 0 : index
    %c0_111 = arith.constant 0 : index
    %244 = vector.load %arg31[%c0_110, %c0_111] : memref<32x1xf32, #tpu.memory_space<vmem>>, vector<32x1xf32>
    %cst_112 = arith.constant dense<0.000000e+00> : vector<128xf32>
    %245 = vector.multi_reduction <add>, %242, %cst_112 [0] : vector<32x128xf32> to vector<128xf32>
    %246 = vector.shape_cast %245 : vector<128xf32> to vector<1x128xf32>
    %cst_113 = arith.constant 3.200000e+01 : f32
    %247 = vector.broadcast %cst_113 : f32 to vector<1x128xf32>
    %248 = arith.divf %246, %247 : vector<1x128xf32>
    %249 = vector.broadcast %248 : vector<1x128xf32> to vector<32x128xf32>
    %250 = arith.subf %242, %249 : vector<32x128xf32>
    %251 = arith.mulf %250, %250 : vector<32x128xf32>
    %cst_114 = arith.constant dense<0.000000e+00> : vector<128xf32>
    %252 = vector.multi_reduction <add>, %251, %cst_114 [0] : vector<32x128xf32> to vector<128xf32>
    %253 = vector.shape_cast %252 : vector<128xf32> to vector<1x128xf32>
    %cst_115 = arith.constant 3.200000e+01 : f32
    %254 = vector.broadcast %cst_115 : f32 to vector<1x128xf32>
    %255 = arith.divf %253, %254 : vector<1x128xf32>
    %256 = vector.broadcast %248 : vector<1x128xf32> to vector<32x128xf32>
    %257 = arith.subf %242, %256 : vector<32x128xf32>
    %cst_116 = arith.constant 9.99999974E-6 : f32
    %258 = vector.broadcast %cst_116 : f32 to vector<1x128xf32>
    %259 = arith.addf %255, %258 : vector<1x128xf32>
    %260 = math.rsqrt %259 : vector<1x128xf32>
    %261 = vector.broadcast %260 : vector<1x128xf32> to vector<32x128xf32>
    %262 = arith.mulf %257, %261 : vector<32x128xf32>
    %263 = vector.broadcast %243 : vector<32x1xf32> to vector<32x128xf32>
    %264 = arith.mulf %262, %263 : vector<32x128xf32>
    %265 = vector.broadcast %244 : vector<32x1xf32> to vector<32x128xf32>
    %266 = arith.addf %264, %265 : vector<32x128xf32>
    %c0_117 = arith.constant 0 : index
    %c0_118 = arith.constant 0 : index
    %c0_119 = arith.constant 0 : index
    %267 = vector.load %arg33[%c0_117, %c0_118, %c0_119] : memref<1x32x128xf32, #tpu.memory_space<vmem>>, vector<1x32x128xf32>
    %268 = vector.shape_cast %267 : vector<1x32x128xf32> to vector<32x128xf32>
    %269 = vector.shape_cast %266 : vector<32x128xf32> to vector<1x32x128xf32>
    tpu.vector_store %arg33[%c0_117, %c0_118, %c0_119], %269 {strides = array<i32>} : memref<1x32x128xf32, #tpu.memory_space<vmem>>, vector<1x32x128xf32>,
    return
  }
  func.func @transform_0(%arg0: i32) -> (i32, i32, i32) {
    %c0_i32 = arith.constant 0 : i32
    %c0_i32_0 = arith.constant 0 : i32
    %c0_i32_1 = arith.constant 0 : i32
    return %arg0, %c0_i32, %c0_i32_0 : i32, i32, i32
  }
  func.func @transform_1(%arg0: i32) -> (i32, i32, i32) {
    %c0_i32 = arith.constant 0 : i32
    %c0_i32_0 = arith.constant 0 : i32
    %c0_i32_1 = arith.constant 0 : i32
    return %arg0, %c0_i32, %c0_i32_0 : i32, i32, i32
  }
  func.func @transform_2(%arg0: i32) -> (i32, i32, i32) {
    %c0_i32 = arith.constant 0 : i32
    %c0_i32_0 = arith.constant 0 : i32
    %c0_i32_1 = arith.constant 0 : i32
    return %arg0, %c0_i32, %c0_i32_0 : i32, i32, i32
  }
  func.func @transform_3(%arg0: i32) -> (i32, i32) {
    %c0_i32 = arith.constant 0 : i32
    %c0_i32_0 = arith.constant 0 : i32
    %c0_i32_1 = arith.constant 0 : i32
    return %c0_i32, %c0_i32_0 : i32, i32
  }
  func.func @transform_4(%arg0: i32) -> (i32, i32) {
    %c0_i32 = arith.constant 0 : i32
    %c0_i32_0 = arith.constant 0 : i32
    %c0_i32_1 = arith.constant 0 : i32
    return %c0_i32, %c0_i32_0 : i32, i32
  }
  func.func @transform_5(%arg0: i32) -> (i32, i32) {
    %c0_i32 = arith.constant 0 : i32
    %c0_i32_0 = arith.constant 0 : i32
    %c0_i32_1 = arith.constant 0 : i32
    return %c0_i32, %c0_i32_0 : i32, i32
  }
  func.func @transform_6(%arg0: i32) -> (i32, i32) {
    %c0_i32 = arith.constant 0 : i32
    %c0_i32_0 = arith.constant 0 : i32
    %c0_i32_1 = arith.constant 0 : i32
    return %c0_i32, %c0_i32_0 : i32, i32
  }
  func.func @transform_7(%arg0: i32) -> (i32, i32) {
    %c0_i32 = arith.constant 0 : i32
    %c0_i32_0 = arith.constant 0 : i32
    %c0_i32_1 = arith.constant 0 : i32
    return %c0_i32, %c0_i32_0 : i32, i32
  }
  func.func @transform_8(%arg0: i32) -> (i32, i32) {
    %c0_i32 = arith.constant 0 : i32
    %c0_i32_0 = arith.constant 0 : i32
    %c0_i32_1 = arith.constant 0 : i32
    return %c0_i32, %c0_i32_0 : i32, i32
  }
  func.func @transform_9(%arg0: i32) -> (i32, i32) {
    %c0_i32 = arith.constant 0 : i32
    %c0_i32_0 = arith.constant 0 : i32
    %c0_i32_1 = arith.constant 0 : i32
    return %c0_i32, %c0_i32_0 : i32, i32
  }
  func.func @transform_10(%arg0: i32) -> (i32, i32) {
    %c0_i32 = arith.constant 0 : i32
    %c0_i32_0 = arith.constant 0 : i32
    %c0_i32_1 = arith.constant 0 : i32
    return %c0_i32, %c0_i32_0 : i32, i32
  }
  func.func @transform_11(%arg0: i32) -> (i32, i32) {
    %c0_i32 = arith.constant 0 : i32
    %c0_i32_0 = arith.constant 0 : i32
    %c0_i32_1 = arith.constant 0 : i32
    return %c0_i32, %c0_i32_0 : i32, i32
  }
  func.func @transform_12(%arg0: i32) -> (i32, i32) {
    %c0_i32 = arith.constant 0 : i32
    %c0_i32_0 = arith.constant 0 : i32
    %c0_i32_1 = arith.constant 0 : i32
    return %c0_i32, %c0_i32_0 : i32, i32
  }
  func.func @transform_13(%arg0: i32) -> (i32, i32) {
    %c0_i32 = arith.constant 0 : i32
    %c0_i32_0 = arith.constant 0 : i32
    %c0_i32_1 = arith.constant 0 : i32
    return %c0_i32, %c0_i32_0 : i32, i32
  }
  func.func @transform_14(%arg0: i32) -> (i32, i32) {
    %c0_i32 = arith.constant 0 : i32
    %c0_i32_0 = arith.constant 0 : i32
    %c0_i32_1 = arith.constant 0 : i32
    return %c0_i32, %c0_i32_0 : i32, i32
  }
  func.func @transform_15(%arg0: i32) -> (i32, i32) {
    %c0_i32 = arith.constant 0 : i32
    %c0_i32_0 = arith.constant 0 : i32
    %c0_i32_1 = arith.constant 0 : i32
    return %c0_i32, %c0_i32_0 : i32, i32
  }
  func.func @transform_16(%arg0: i32) -> (i32, i32) {
    %c0_i32 = arith.constant 0 : i32
    %c0_i32_0 = arith.constant 0 : i32
    %c0_i32_1 = arith.constant 0 : i32
    return %c0_i32, %c0_i32_0 : i32, i32
  }
  func.func @transform_17(%arg0: i32) -> (i32, i32) {
    %c0_i32 = arith.constant 0 : i32
    %c0_i32_0 = arith.constant 0 : i32
    %c0_i32_1 = arith.constant 0 : i32
    return %c0_i32, %c0_i32_0 : i32, i32
  }
  func.func @transform_18(%arg0: i32) -> (i32, i32) {
    %c0_i32 = arith.constant 0 : i32
    %c0_i32_0 = arith.constant 0 : i32
    %c0_i32_1 = arith.constant 0 : i32
    return %c0_i32, %c0_i32_0 : i32, i32
  }
  func.func @transform_19(%arg0: i32) -> (i32, i32) {
    %c0_i32 = arith.constant 0 : i32
    %c0_i32_0 = arith.constant 0 : i32
    %c0_i32_1 = arith.constant 0 : i32
    return %c0_i32, %c0_i32_0 : i32, i32
  }
  func.func @transform_20(%arg0: i32) -> (i32, i32) {
    %c0_i32 = arith.constant 0 : i32
    %c0_i32_0 = arith.constant 0 : i32
    %c0_i32_1 = arith.constant 0 : i32
    return %c0_i32, %c0_i32_0 : i32, i32
  }
  func.func @transform_21(%arg0: i32) -> (i32, i32) {
    %c0_i32 = arith.constant 0 : i32
    %c0_i32_0 = arith.constant 0 : i32
    %c0_i32_1 = arith.constant 0 : i32
    return %c0_i32, %c0_i32_0 : i32, i32
  }
  func.func @transform_22(%arg0: i32) -> (i32, i32) {
    %c0_i32 = arith.constant 0 : i32
    %c0_i32_0 = arith.constant 0 : i32
    %c0_i32_1 = arith.constant 0 : i32
    return %c0_i32, %c0_i32_0 : i32, i32
  }
  func.func @transform_23(%arg0: i32) -> (i32, i32) {
    %c0_i32 = arith.constant 0 : i32
    %c0_i32_0 = arith.constant 0 : i32
    %c0_i32_1 = arith.constant 0 : i32
    return %c0_i32, %c0_i32_0 : i32, i32
  }
  func.func @transform_24(%arg0: i32) -> (i32, i32) {
    %c0_i32 = arith.constant 0 : i32
    %c0_i32_0 = arith.constant 0 : i32
    %c0_i32_1 = arith.constant 0 : i32
    return %c0_i32, %c0_i32_0 : i32, i32
  }
  func.func @transform_25(%arg0: i32) -> (i32, i32) {
    %c0_i32 = arith.constant 0 : i32
    %c0_i32_0 = arith.constant 0 : i32
    %c0_i32_1 = arith.constant 0 : i32
    return %c0_i32, %c0_i32_0 : i32, i32
  }
  func.func @transform_26(%arg0: i32) -> (i32, i32) {
    %c0_i32 = arith.constant 0 : i32
    %c0_i32_0 = arith.constant 0 : i32
    %c0_i32_1 = arith.constant 0 : i32
    return %c0_i32, %c0_i32_0 : i32, i32
  }
  func.func @transform_27(%arg0: i32) -> (i32, i32) {
    %c0_i32 = arith.constant 0 : i32
    %c0_i32_0 = arith.constant 0 : i32
    %c0_i32_1 = arith.constant 0 : i32
    return %c0_i32, %c0_i32_0 : i32, i32
  }
  func.func @transform_28(%arg0: i32) -> (i32, i32) {
    %c0_i32 = arith.constant 0 : i32
    %c0_i32_0 = arith.constant 0 : i32
    %c0_i32_1 = arith.constant 0 : i32
    return %c0_i32, %c0_i32_0 : i32, i32
  }
  func.func @transform_29(%arg0: i32) -> (i32, i32) {
    %c0_i32 = arith.constant 0 : i32
    %c0_i32_0 = arith.constant 0 : i32
    %c0_i32_1 = arith.constant 0 : i32
    return %c0_i32, %c0_i32_0 : i32, i32
  }
  func.func @transform_30(%arg0: i32) -> (i32, i32) {
    %c0_i32 = arith.constant 0 : i32
    %c0_i32_0 = arith.constant 0 : i32
    %c0_i32_1 = arith.constant 0 : i32
    return %c0_i32, %c0_i32_0 : i32, i32
  }
  func.func @transform_31(%arg0: i32) -> (i32, i32, i32) {
    %c0_i32 = arith.constant 0 : i32
    %c0_i32_0 = arith.constant 0 : i32
    %c0_i32_1 = arith.constant 0 : i32
    return %arg0, %c0_i32, %c0_i32_0 : i32, i32, i32
  }
  func.func @transform_32(%arg0: i32) -> (i32, i32, i32) {
    %c0_i32 = arith.constant 0 : i32
    %c0_i32_0 = arith.constant 0 : i32
    %c0_i32_1 = arith.constant 0 : i32
    return %arg0, %c0_i32, %c0_i32_0 : i32, i32, i32
  }
}

</mosaic_0001>

<llo_original>
// kernel: semantic_guidance_forward.1
$region0: #{semantic_guidance_forward.1}
  #allocation0 [shape = 'u32[]', space=smem, size = 0x4, offset = 0x4, fixed_abs, tag = 'smem constant byte address 0x4 - core index']
  #allocation1 [shape = 'u32[144,128]{1,0:T(1,128)}', space=vmem, size = 0x12000, scoped, tag = 'internal scratch']
  %s0 = inlined_call_operand.smem [shape: u32[33], index: -1, kind: input, shape index: {}]
  %s1 = sld [smem:[%s0]]
  %s2 = scalar_lea.smem %s0, 1
  %s3 = sld [smem:[%s2]]
  %s4 = scalar_lea.smem %s0, 2
  %s5 = sld [smem:[%s4]]
  %s6 = scalar_lea.smem %s0, 3
  %s7 = sld [smem:[%s6]]
  %s8 = scalar_lea.smem %s0, 4
  %s9 = sld [smem:[%s8]]
  %s10 = scalar_lea.smem %s0, 5
  %s11 = sld [smem:[%s10]]
  %s12 = scalar_lea.smem %s0, 6
  %s13 = sld [smem:[%s12]]
  %s14 = scalar_lea.smem %s0, 7
  %s15 = sld [smem:[%s14]]
  %s16 = scalar_lea.smem %s0, 8
  %s17 = sld [smem:[%s16]]
  %s18 = scalar_lea.smem %s0, 9
  %s19 = sld [smem:[%s18]]
  %s20 = scalar_lea.smem %s0, 10
  %s21 = sld [smem:[%s20]]
  %s22 = scalar_lea.smem %s0, 11
  %s23 = sld [smem:[%s22]]
  %s24 = scalar_lea.smem %s0, 12
  %s25 = sld [smem:[%s24]]
  %s26 = scalar_lea.smem %s0, 13
  %s27 = sld [smem:[%s26]]
  %s28 = scalar_lea.smem %s0, 14
  %s29 = sld [smem:[%s28]]
  %s30 = scalar_lea.smem %s0, 15
  %s31 = sld [smem:[%s30]]
  %s32 = scalar_lea.smem %s0, 16
  %s33 = sld [smem:[%s32]]
  %s34 = scalar_lea.smem %s0, 17
  %s35 = sld [smem:[%s34]]
  %s36 = scalar_lea.smem %s0, 18
  %s37 = sld [smem:[%s36]]
  %s38 = scalar_lea.smem %s0, 19
  %s39 = sld [smem:[%s38]]
  %s40 = scalar_lea.smem %s0, 20
  %s41 = sld [smem:[%s40]]
  %s42 = scalar_lea.smem %s0, 21
  %s43 = sld [smem:[%s42]]
  %s44 = scalar_lea.smem %s0, 22
  %s45 = sld [smem:[%s44]]
  %s46 = scalar_lea.smem %s0, 23
  %s47 = sld [smem:[%s46]]
  %s48 = scalar_lea.smem %s0, 24
  %s49 = sld [smem:[%s48]]
  %s50 = scalar_lea.smem %s0, 25
  %s51 = sld [smem:[%s50]]
  %s52 = scalar_lea.smem %s0, 26
  %s53 = sld [smem:[%s52]]
  %s54 = scalar_lea.smem %s0, 27
  %s55 = sld [smem:[%s54]]
  %s56 = scalar_lea.smem %s0, 28
  %s57 = sld [smem:[%s56]]
  %s58 = scalar_lea.smem %s0, 29
  %s59 = sld [smem:[%s58]]
  %s60 = scalar_lea.smem %s0, 30
  %s61 = sld [smem:[%s60]]
  %s62 = scalar_lea.smem %s0, 31
  %s63 = sld [smem:[%s62]]
  %s64 = scalar_lea.smem %s0, 32
  %s65 = sld [smem:[%s64]]
  %66 = xla_tuple %s63, %s65
  %s67 = sld [smem:[#allocation0]]
  $region165: #{semantic_guidance_forward.1} parent=0
    _
  %s69 = ssub.s32 1, %s67
  %s70 = scalar_select 0, %s69, %s67
  loop: start=0, step=1, limit=4
  $region2: #{semantic_guidance_forward.1} parent=0 // loop_pre_header
    _
  $region3: #{semantic_guidance_forward.1} parent=0 // loop_header
    %s72 = sphi 0, %s76
    %p73 = scmp.ge.s32.totalorder %s72, 4
    %s82 = sphi 0, %s84
    %s85 = sphi 0, %s82
    %s86 = sphi 0, %s85
    %s102 = sphi 0, %s86
    %s108 = sphi 0, %s110
    %s111 = sphi 0, %s108
    %s112 = sphi 0, %s111
    %s128 = sphi 0, %s112
    %s134 = sphi 0, %s136
    %s137 = sphi 0, %s134
    %s138 = sphi 0, %s137
    %s154 = sphi 0, %s138
    %s158 = sphi 0, %s158
    %s160 = sphi 0, %s158
    %s161 = sphi 0, %s160
    %s175 = sphi 0, %s161
    %s179 = sphi 0, %s179
    %s181 = sphi 0, %s179
    %s182 = sphi 0, %s181
    %s196 = sphi 0, %s182
    %s200 = sphi 0, %s200
    %s202 = sphi 0, %s200
    %s203 = sphi 0, %s202
    %s217 = sphi 0, %s203
    %s221 = sphi 0, %s221
    %s223 = sphi 0, %s221
    %s224 = sphi 0, %s223
    %s238 = sphi 0, %s224
    %s242 = sphi 0, %s242
    %s244 = sphi 0, %s242
    %s245 = sphi 0, %s244
    %s259 = sphi 0, %s245
    %s263 = sphi 0, %s263
    %s265 = sphi 0, %s263
    %s266 = sphi 0, %s265
    %s280 = sphi 0, %s266
    %s284 = sphi 0, %s284
    %s286 = sphi 0, %s284
    %s287 = sphi 0, %s286
    %s301 = sphi 0, %s287
    %s305 = sphi 0, %s305
    %s307 = sphi 0, %s305
    %s308 = sphi 0, %s307
    %s322 = sphi 0, %s308
    %s326 = sphi 0, %s326
    %s328 = sphi 0, %s326
    %s329 = sphi 0, %s328
    %s343 = sphi 0, %s329
    %s347 = sphi 0, %s347
    %s349 = sphi 0, %s347
    %s350 = sphi 0, %s349
    %s364 = sphi 0, %s350
    %s368 = sphi 0, %s368
    %s370 = sphi 0, %s368
    %s371 = sphi 0, %s370
    %s385 = sphi 0, %s371
    %s389 = sphi 0, %s389
    %s391 = sphi 0, %s389
    %s392 = sphi 0, %s391
    %s406 = sphi 0, %s392
    %s410 = sphi 0, %s410
    %s412 = sphi 0, %s410
    %s413 = sphi 0, %s412
    %s427 = sphi 0, %s413
    %s431 = sphi 0, %s431
    %s433 = sphi 0, %s431
    %s434 = sphi 0, %s433
    %s448 = sphi 0, %s434
    %s452 = sphi 0, %s452
    %s454 = sphi 0, %s452
    %s455 = sphi 0, %s454
    %s469 = sphi 0, %s455
    %s473 = sphi 0, %s473
    %s475 = sphi 0, %s473
    %s476 = sphi 0, %s475
    %s490 = sphi 0, %s476
    %s494 = sphi 0, %s494
    %s496 = sphi 0, %s494
    %s497 = sphi 0, %s496
    %s511 = sphi 0, %s497
    %s515 = sphi 0, %s515
    %s517 = sphi 0, %s515
    %s518 = sphi 0, %s517
    %s532 = sphi 0, %s518
    %s536 = sphi 0, %s536
    %s538 = sphi 0, %s536
    %s539 = sphi 0, %s538
    %s553 = sphi 0, %s539
    %s557 = sphi 0, %s557
    %s559 = sphi 0, %s557
    %s560 = sphi 0, %s559
    %s574 = sphi 0, %s560
    %s578 = sphi 0, %s578
    %s580 = sphi 0, %s578
    %s581 = sphi 0, %s580
    %s595 = sphi 0, %s581
    %s599 = sphi 0, %s599
    %s601 = sphi 0, %s599
    %s602 = sphi 0, %s601
    %s616 = sphi 0, %s602
    %s620 = sphi 0, %s620
    %s622 = sphi 0, %s620
    %s623 = sphi 0, %s622
    %s637 = sphi 0, %s623
    %s641 = sphi 0, %s641
    %s643 = sphi 0, %s641
    %s644 = sphi 0, %s643
    %s658 = sphi 0, %s644
    %s662 = sphi 0, %s662
    %s664 = sphi 0, %s662
    %s665 = sphi 0, %s664
    %s679 = sphi 0, %s665
    %s683 = sphi 0, %s683
    %s685 = sphi 0, %s683
    %s686 = sphi 0, %s685
    %s700 = sphi 0, %s686
    %s704 = sphi 0, %s704
    %s706 = sphi 0, %s704
    %s707 = sphi 0, %s706
    %s721 = sphi 0, %s707
    %s725 = sphi 0, %s725
    %s727 = sphi 0, %s725
    %s728 = sphi 0, %s727
    %s742 = sphi 0, %s728
    %s748 = sphi 0, %s750
    %s751 = sphi 0, %s748
    %s752 = sphi 0, %s751
    %s768 = sphi 0, %s752
    %s774 = sphi 0, %s776
    %s777 = sphi 0, %s774
    %s778 = sphi 0, %s777
    %s794 = sphi 0, %s778
  $region4: #{semantic_guidance_forward.1} parent=0 // loop_header_branch
    %75 = sbr.rel (%p73) target = $region8
  $region5: #{semantic_guidance_forward.1} parent=0 // loop_body
    %s77 = ssub.s32 %s72, 1
    %s78 = ssub.s32 %s72, 2
    %s79 = sadd.s32 %s72, 1
    %s80 = ssub.s32 %s72, %s79
    %p81 = scmp.eq.s32.totalorder %s80, 0
    %s83 = sadd.s32 %s82, 1
    %s84 = scalar_select %p81, %s82, %s83
    %p87 = pneg %p81
    %p88 = scmp.eq.s32.totalorder %s72, 1
    %p89 = por %p87, %p88
    %p90 = scmp.ne.s32.totalorder %s82, %s85
    %p91 = scmp.eq.s32.totalorder %s72, 0
    %p92 = por %p90, %p91
    %p93 = scmp.ne.s32.totalorder %s82, %s85
    %p94 = scmp.eq.s32.totalorder %s77, 1
    %p95 = por %p93, %p94
    %p96 = scmp.ne.s32.totalorder %s85, %s86
    %p97 = scmp.eq.s32.totalorder %s77, 0
    %p98 = por %p96, %p97
    %p99 = scmp.ne.s32.totalorder %s85, %s86
    %p100 = scmp.eq.s32.totalorder %s78, 1
    %p101 = por %p99, %p100
    %p103 = scmp.ne.s32.totalorder %s86, %s102
    %p104 = scmp.eq.s32.totalorder %s78, 0
    %p105 = por %p103, %p104
    %s106 = ssub.s32 %s72, %s79
    %p107 = scmp.eq.s32.totalorder %s106, 0
    %s109 = sadd.s32 %s108, 1
    %s110 = scalar_select %p107, %s108, %s109
    %p113 = pneg %p107
    %p114 = scmp.eq.s32.totalorder %s72, 1
    %p115 = por %p113, %p114
    %p116 = scmp.ne.s32.totalorder %s108, %s111
    %p117 = scmp.eq.s32.totalorder %s72, 0
    %p118 = por %p116, %p117
    %p119 = scmp.ne.s32.totalorder %s108, %s111
    %p120 = scmp.eq.s32.totalorder %s77, 1
    %p121 = por %p119, %p120
    %p122 = scmp.ne.s32.totalorder %s111, %s112
    %p123 = scmp.eq.s32.totalorder %s77, 0
    %p124 = por %p122, %p123
    %p125 = scmp.ne.s32.totalorder %s111, %s112
    %p126 = scmp.eq.s32.totalorder %s78, 1
    %p127 = por %p125, %p126
    %p129 = scmp.ne.s32.totalorder %s112, %s128
    %p130 = scmp.eq.s32.totalorder %s78, 0
    %p131 = por %p129, %p130
    %s132 = ssub.s32 %s72, %s79
    %p133 = scmp.eq.s32.totalorder %s132, 0
    %s135 = sadd.s32 %s134, 1
    %s136 = scalar_select %p133, %s134, %s135
    %p139 = pneg %p133
    %p140 = scmp.eq.s32.totalorder %s72, 1
    %p141 = por %p139, %p140
    %p142 = scmp.ne.s32.totalorder %s134, %s137
    %p143 = scmp.eq.s32.totalorder %s72, 0
    %p144 = por %p142, %p143
    %p145 = scmp.ne.s32.totalorder %s134, %s137
    %p146 = scmp.eq.s32.totalorder %s77, 1
    %p147 = por %p145, %p146
    %p148 = scmp.ne.s32.totalorder %s137, %s138
    %p149 = scmp.eq.s32.totalorder %s77, 0
    %p150 = por %p148, %p149
    %p151 = scmp.ne.s32.totalorder %s137, %s138
    %p152 = scmp.eq.s32.totalorder %s78, 1
    %p153 = por %p151, %p152
    %p155 = scmp.ne.s32.totalorder %s138, %s154
    %p156 = scmp.eq.s32.totalorder %s78, 0
    %p157 = por %p155, %p156
    %s159 = sadd.s32 %s158, 1
    %p162 = scmp.eq.s32.totalorder %s72, 1
    %p163 = scmp.ne.s32.totalorder %s158, %s160
    %p164 = scmp.eq.s32.totalorder %s72, 0
    %p165 = por %p163, %p164
    %p166 = scmp.ne.s32.totalorder %s158, %s160
    %p167 = scmp.eq.s32.totalorder %s77, 1
    %p168 = por %p166, %p167
    %p169 = scmp.ne.s32.totalorder %s160, %s161
    %p170 = scmp.eq.s32.totalorder %s77, 0
    %p171 = por %p169, %p170
    %p172 = scmp.ne.s32.totalorder %s160, %s161
    %p173 = scmp.eq.s32.totalorder %s78, 1
    %p174 = por %p172, %p173
    %p176 = scmp.ne.s32.totalorder %s161, %s175
    %p177 = scmp.eq.s32.totalorder %s78, 0
    %p178 = por %p176, %p177
    %s180 = sadd.s32 %s179, 1
    %p183 = scmp.eq.s32.totalorder %s72, 1
    %p184 = scmp.ne.s32.totalorder %s179, %s181
    %p185 = scmp.eq.s32.totalorder %s72, 0
    %p186 = por %p184, %p185
    %p187 = scmp.ne.s32.totalorder %s179, %s181
    %p188 = scmp.eq.s32.totalorder %s77, 1
    %p189 = por %p187, %p188
    %p190 = scmp.ne.s32.totalorder %s181, %s182
    %p191 = scmp.eq.s32.totalorder %s77, 0
    %p192 = por %p190, %p191
    %p193 = scmp.ne.s32.totalorder %s181, %s182
    %p194 = scmp.eq.s32.totalorder %s78, 1
    %p195 = por %p193, %p194
    %p197 = scmp.ne.s32.totalorder %s182, %s196
    %p198 = scmp.eq.s32.totalorder %s78, 0
    %p199 = por %p197, %p198
    %s201 = sadd.s32 %s200, 1
    %p204 = scmp.eq.s32.totalorder %s72, 1
    %p205 = scmp.ne.s32.totalorder %s200, %s202
    %p206 = scmp.eq.s32.totalorder %s72, 0
    %p207 = por %p205, %p206
    %p208 = scmp.ne.s32.totalorder %s200, %s202
    %p209 = scmp.eq.s32.totalorder %s77, 1
    %p210 = por %p208, %p209
    %p211 = scmp.ne.s32.totalorder %s202, %s203
    %p212 = scmp.eq.s32.totalorder %s77, 0
    %p213 = por %p211, %p212
    %p214 = scmp.ne.s32.totalorder %s202, %s203
    %p215 = scmp.eq.s32.totalorder %s78, 1
    %p216 = por %p214, %p215
    %p218 = scmp.ne.s32.totalorder %s203, %s217
    %p219 = scmp.eq.s32.totalorder %s78, 0
    %p220 = por %p218, %p219
    %s222 = sadd.s32 %s221, 1
    %p225 = scmp.eq.s32.totalorder %s72, 1
    %p226 = scmp.ne.s32.totalorder %s221, %s223
    %p227 = scmp.eq.s32.totalorder %s72, 0
    %p228 = por %p226, %p227
    %p229 = scmp.ne.s32.totalorder %s221, %s223
    %p230 = scmp.eq.s32.totalorder %s77, 1
    %p231 = por %p229, %p230
    %p232 = scmp.ne.s32.totalorder %s223, %s224
    %p233 = scmp.eq.s32.totalorder %s77, 0
    %p234 = por %p232, %p233
    %p235 = scmp.ne.s32.totalorder %s223, %s224
    %p236 = scmp.eq.s32.totalorder %s78, 1
    %p237 = por %p235, %p236
    %p239 = scmp.ne.s32.totalorder %s224, %s238
    %p240 = scmp.eq.s32.totalorder %s78, 0
    %p241 = por %p239, %p240
    %s243 = sadd.s32 %s242, 1
    %p246 = scmp.eq.s32.totalorder %s72, 1
    %p247 = scmp.ne.s32.totalorder %s242, %s244
    %p248 = scmp.eq.s32.totalorder %s72, 0
    %p249 = por %p247, %p248
    %p250 = scmp.ne.s32.totalorder %s242, %s244
    %p251 = scmp.eq.s32.totalorder %s77, 1
    %p252 = por %p250, %p251
    %p253 = scmp.ne.s32.totalorder %s244, %s245
    %p254 = scmp.eq.s32.totalorder %s77, 0
    %p255 = por %p253, %p254
    %p256 = scmp.ne.s32.totalorder %s244, %s245
    %p257 = scmp.eq.s32.totalorder %s78, 1
    %p258 = por %p256, %p257
    %p260 = scmp.ne.s32.totalorder %s245, %s259
    %p261 = scmp.eq.s32.totalorder %s78, 0
    %p262 = por %p260, %p261
    %s264 = sadd.s32 %s263, 1
    %p267 = scmp.eq.s32.totalorder %s72, 1
    %p268 = scmp.ne.s32.totalorder %s263, %s265
    %p269 = scmp.eq.s32.totalorder %s72, 0
    %p270 = por %p268, %p269
    %p271 = scmp.ne.s32.totalorder %s263, %s265
    %p272 = scmp.eq.s32.totalorder %s77, 1
    %p273 = por %p271, %p272
    %p274 = scmp.ne.s32.totalorder %s265, %s266
    %p275 = scmp.eq.s32.totalorder %s77, 0
    %p276 = por %p274, %p275
    %p277 = scmp.ne.s32.totalorder %s265, %s266
    %p278 = scmp.eq.s32.totalorder %s78, 1
    %p279 = por %p277, %p278
    %p281 = scmp.ne.s32.totalorder %s266, %s280
    %p282 = scmp.eq.s32.totalorder %s78, 0
    %p283 = por %p281, %p282
    %s285 = sadd.s32 %s284, 1
    %p288 = scmp.eq.s32.totalorder %s72, 1
    %p289 = scmp.ne.s32.totalorder %s284, %s286
    %p290 = scmp.eq.s32.totalorder %s72, 0
    %p291 = por %p289, %p290
    %p292 = scmp.ne.s32.totalorder %s284, %s286
    %p293 = scmp.eq.s32.totalorder %s77, 1
    %p294 = por %p292, %p293
    %p295 = scmp.ne.s32.totalorder %s286, %s287
    %p296 = scmp.eq.s32.totalorder %s77, 0
    %p297 = por %p295, %p296
    %p298 = scmp.ne.s32.totalorder %s286, %s287
    %p299 = scmp.eq.s32.totalorder %s78, 1
    %p300 = por %p298, %p299
    %p302 = scmp.ne.s32.totalorder %s287, %s301
    %p303 = scmp.eq.s32.totalorder %s78, 0
    %p304 = por %p302, %p303
    %s306 = sadd.s32 %s305, 1
    %p309 = scmp.eq.s32.totalorder %s72, 1
    %p310 = scmp.ne.s32.totalorder %s305, %s307
    %p311 = scmp.eq.s32.totalorder %s72, 0
    %p312 = por %p310, %p311
    %p313 = scmp.ne.s32.totalorder %s305, %s307
    %p314 = scmp.eq.s32.totalorder %s77, 1
    %p315 = por %p313, %p314
    %p316 = scmp.ne.s32.totalorder %s307, %s308
    %p317 = scmp.eq.s32.totalorder %s77, 0
    %p318 = por %p316, %p317
    %p319 = scmp.ne.s32.totalorder %s307, %s308
    %p320 = scmp.eq.s32.totalorder %s78, 1
    %p321 = por %p319, %p320
    %p323 = scmp.ne.s32.totalorder %s308, %s322
    %p324 = scmp.eq.s32.totalorder %s78, 0
    %p325 = por %p323, %p324
    %s327 = sadd.s32 %s326, 1
    %p330 = scmp.eq.s32.totalorder %s72, 1
    %p331 = scmp.ne.s32.totalorder %s326, %s328
    %p332 = scmp.eq.s32.totalorder %s72, 0
    %p333 = por %p331, %p332
    %p334 = scmp.ne.s32.totalorder %s326, %s328
    %p335 = scmp.eq.s32.totalorder %s77, 1
    %p336 = por %p334, %p335
    %p337 = scmp.ne.s32.totalorder %s328, %s329
    %p338 = scmp.eq.s32.totalorder %s77, 0
    %p339 = por %p337, %p338
    %p340 = scmp.ne.s32.totalorder %s328, %s329
    %p341 = scmp.eq.s32.totalorder %s78, 1
    %p342 = por %p340, %p341
    %p344 = scmp.ne.s32.totalorder %s329, %s343
    %p345 = scmp.eq.s32.totalorder %s78, 0
    %p346 = por %p344, %p345
    %s348 = sadd.s32 %s347, 1
    %p351 = scmp.eq.s32.totalorder %s72, 1
    %p352 = scmp.ne.s32.totalorder %s347, %s349
    %p353 = scmp.eq.s32.totalorder %s72, 0
    %p354 = por %p352, %p353
    %p355 = scmp.ne.s32.totalorder %s347, %s349
    %p356 = scmp.eq.s32.totalorder %s77, 1
    %p357 = por %p355, %p356
    %p358 = scmp.ne.s32.totalorder %s349, %s350
    %p359 = scmp.eq.s32.totalorder %s77, 0
    %p360 = por %p358, %p359
    %p361 = scmp.ne.s32.totalorder %s349, %s350
    %p362 = scmp.eq.s32.totalorder %s78, 1
    %p363 = por %p361, %p362
    %p365 = scmp.ne.s32.totalorder %s350, %s364
    %p366 = scmp.eq.s32.totalorder %s78, 0
    %p367 = por %p365, %p366
    %s369 = sadd.s32 %s368, 1
    %p372 = scmp.eq.s32.totalorder %s72, 1
    %p373 = scmp.ne.s32.totalorder %s368, %s370
    %p374 = scmp.eq.s32.totalorder %s72, 0
    %p375 = por %p373, %p374
    %p376 = scmp.ne.s32.totalorder %s368, %s370
    %p377 = scmp.eq.s32.totalorder %s77, 1
    %p378 = por %p376, %p377
    %p379 = scmp.ne.s32.totalorder %s370, %s371
    %p380 = scmp.eq.s32.totalorder %s77, 0
    %p381 = por %p379, %p380
    %p382 = scmp.ne.s32.totalorder %s370, %s371
    %p383 = scmp.eq.s32.totalorder %s78, 1
    %p384 = por %p382, %p383
    %p386 = scmp.ne.s32.totalorder %s371, %s385
    %p387 = scmp.eq.s32.totalorder %s78, 0
    %p388 = por %p386, %p387
    %s390 = sadd.s32 %s389, 1
    %p393 = scmp.eq.s32.totalorder %s72, 1
    %p394 = scmp.ne.s32.totalorder %s389, %s391
    %p395 = scmp.eq.s32.totalorder %s72, 0
    %p396 = por %p394, %p395
    %p397 = scmp.ne.s32.totalorder %s389, %s391
    %p398 = scmp.eq.s32.totalorder %s77, 1
    %p399 = por %p397, %p398
    %p400 = scmp.ne.s32.totalorder %s391, %s392
    %p401 = scmp.eq.s32.totalorder %s77, 0
    %p402 = por %p400, %p401
    %p403 = scmp.ne.s32.totalorder %s391, %s392
    %p404 = scmp.eq.s32.totalorder %s78, 1
    %p405 = por %p403, %p404
    %p407 = scmp.ne.s32.totalorder %s392, %s406
    %p408 = scmp.eq.s32.totalorder %s78, 0
    %p409 = por %p407, %p408
    %s411 = sadd.s32 %s410, 1
    %p414 = scmp.eq.s32.totalorder %s72, 1
    %p415 = scmp.ne.s32.totalorder %s410, %s412
    %p416 = scmp.eq.s32.totalorder %s72, 0
    %p417 = por %p415, %p416
    %p418 = scmp.ne.s32.totalorder %s410, %s412
    %p419 = scmp.eq.s32.totalorder %s77, 1
    %p420 = por %p418, %p419
    %p421 = scmp.ne.s32.totalorder %s412, %s413
    %p422 = scmp.eq.s32.totalorder %s77, 0
    %p423 = por %p421, %p422
    %p424 = scmp.ne.s32.totalorder %s412, %s413
    %p425 = scmp.eq.s32.totalorder %s78, 1
    %p426 = por %p424, %p425
    %p428 = scmp.ne.s32.totalorder %s413, %s427
    %p429 = scmp.eq.s32.totalorder %s78, 0
    %p430 = por %p428, %p429
    %s432 = sadd.s32 %s431, 1
    %p435 = scmp.eq.s32.totalorder %s72, 1
    %p436 = scmp.ne.s32.totalorder %s431, %s433
    %p437 = scmp.eq.s32.totalorder %s72, 0
    %p438 = por %p436, %p437
    %p439 = scmp.ne.s32.totalorder %s431, %s433
    %p440 = scmp.eq.s32.totalorder %s77, 1
    %p441 = por %p439, %p440
    %p442 = scmp.ne.s32.totalorder %s433, %s434
    %p443 = scmp.eq.s32.totalorder %s77, 0
    %p444 = por %p442, %p443
    %p445 = scmp.ne.s32.totalorder %s433, %s434
    %p446 = scmp.eq.s32.totalorder %s78, 1
    %p447 = por %p445, %p446
    %p449 = scmp.ne.s32.totalorder %s434, %s448
    %p450 = scmp.eq.s32.totalorder %s78, 0
    %p451 = por %p449, %p450
    %s453 = sadd.s32 %s452, 1
    %p456 = scmp.eq.s32.totalorder %s72, 1
    %p457 = scmp.ne.s32.totalorder %s452, %s454
    %p458 = scmp.eq.s32.totalorder %s72, 0
    %p459 = por %p457, %p458
    %p460 = scmp.ne.s32.totalorder %s452, %s454
    %p461 = scmp.eq.s32.totalorder %s77, 1
    %p462 = por %p460, %p461
    %p463 = scmp.ne.s32.totalorder %s454, %s455
    %p464 = scmp.eq.s32.totalorder %s77, 0
    %p465 = por %p463, %p464
    %p466 = scmp.ne.s32.totalorder %s454, %s455
    %p467 = scmp.eq.s32.totalorder %s78, 1
    %p468 = por %p466, %p467
    %p470 = scmp.ne.s32.totalorder %s455, %s469
    %p471 = scmp.eq.s32.totalorder %s78, 0
    %p472 = por %p470, %p471
    %s474 = sadd.s32 %s473, 1
    %p477 = scmp.eq.s32.totalorder %s72, 1
    %p478 = scmp.ne.s32.totalorder %s473, %s475
    %p479 = scmp.eq.s32.totalorder %s72, 0
    %p480 = por %p478, %p479
    %p481 = scmp.ne.s32.totalorder %s473, %s475
    %p482 = scmp.eq.s32.totalorder %s77, 1
    %p483 = por %p481, %p482
    %p484 = scmp.ne.s32.totalorder %s475, %s476
    %p485 = scmp.eq.s32.totalorder %s77, 0
    %p486 = por %p484, %p485
    %p487 = scmp.ne.s32.totalorder %s475, %s476
    %p488 = scmp.eq.s32.totalorder %s78, 1
    %p489 = por %p487, %p488
    %p491 = scmp.ne.s32.totalorder %s476, %s490
    %p492 = scmp.eq.s32.totalorder %s78, 0
    %p493 = por %p491, %p492
    %s495 = sadd.s32 %s494, 1
    %p498 = scmp.eq.s32.totalorder %s72, 1
    %p499 = scmp.ne.s32.totalorder %s494, %s496
    %p500 = scmp.eq.s32.totalorder %s72, 0
    %p501 = por %p499, %p500
    %p502 = scmp.ne.s32.totalorder %s494, %s496
    %p503 = scmp.eq.s32.totalorder %s77, 1
    %p504 = por %p502, %p503
    %p505 = scmp.ne.s32.totalorder %s496, %s497
    %p506 = scmp.eq.s32.totalorder %s77, 0
    %p507 = por %p505, %p506
    %p508 = scmp.ne.s32.totalorder %s496, %s497
    %p509 = scmp.eq.s32.totalorder %s78, 1
    %p510 = por %p508, %p509
    %p512 = scmp.ne.s32.totalorder %s497, %s511
    %p513 = scmp.eq.s32.totalorder %s78, 0
    %p514 = por %p512, %p513
    %s516 = sadd.s32 %s515, 1
    %p519 = scmp.eq.s32.totalorder %s72, 1
    %p520 = scmp.ne.s32.totalorder %s515, %s517
    %p521 = scmp.eq.s32.totalorder %s72, 0
    %p522 = por %p520, %p521
    %p523 = scmp.ne.s32.totalorder %s515, %s517
    %p524 = scmp.eq.s32.totalorder %s77, 1
    %p525 = por %p523, %p524
    %p526 = scmp.ne.s32.totalorder %s517, %s518
    %p527 = scmp.eq.s32.totalorder %s77, 0
    %p528 = por %p526, %p527
    %p529 = scmp.ne.s32.totalorder %s517, %s518
    %p530 = scmp.eq.s32.totalorder %s78, 1
    %p531 = por %p529, %p530
    %p533 = scmp.ne.s32.totalorder %s518, %s532
    %p534 = scmp.eq.s32.totalorder %s78, 0
    %p535 = por %p533, %p534
    %s537 = sadd.s32 %s536, 1
    %p540 = scmp.eq.s32.totalorder %s72, 1
    %p541 = scmp.ne.s32.totalorder %s536, %s538
    %p542 = scmp.eq.s32.totalorder %s72, 0
    %p543 = por %p541, %p542
    %p544 = scmp.ne.s32.totalorder %s536, %s538
    %p545 = scmp.eq.s32.totalorder %s77, 1
    %p546 = por %p544, %p545
    %p547 = scmp.ne.s32.totalorder %s538, %s539
    %p548 = scmp.eq.s32.totalorder %s77, 0
    %p549 = por %p547, %p548
    %p550 = scmp.ne.s32.totalorder %s538, %s539
    %p551 = scmp.eq.s32.totalorder %s78, 1
    %p552 = por %p550, %p551
    %p554 = scmp.ne.s32.totalorder %s539, %s553
    %p555 = scmp.eq.s32.totalorder %s78, 0
    %p556 = por %p554, %p555
    %s558 = sadd.s32 %s557, 1
    %p561 = scmp.eq.s32.totalorder %s72, 1
    %p562 = scmp.ne.s32.totalorder %s557, %s559
    %p563 = scmp.eq.s32.totalorder %s72, 0
    %p564 = por %p562, %p563
    %p565 = scmp.ne.s32.totalorder %s557, %s559
    %p566 = scmp.eq.s32.totalorder %s77, 1
    %p567 = por %p565, %p566
    %p568 = scmp.ne.s32.totalorder %s559, %s560
    %p569 = scmp.eq.s32.totalorder %s77, 0
    %p570 = por %p568, %p569
    %p571 = scmp.ne.s32.totalorder %s559, %s560
    %p572 = scmp.eq.s32.totalorder %s78, 1
    %p573 = por %p571, %p572
    %p575 = scmp.ne.s32.totalorder %s560, %s574
    %p576 = scmp.eq.s32.totalorder %s78, 0
    %p577 = por %p575, %p576
    %s579 = sadd.s32 %s578, 1
    %p582 = scmp.eq.s32.totalorder %s72, 1
    %p583 = scmp.ne.s32.totalorder %s578, %s580
    %p584 = scmp.eq.s32.totalorder %s72, 0
    %p585 = por %p583, %p584
    %p586 = scmp.ne.s32.totalorder %s578, %s580
    %p587 = scmp.eq.s32.totalorder %s77, 1
    %p588 = por %p586, %p587
    %p589 = scmp.ne.s32.totalorder %s580, %s581
    %p590 = scmp.eq.s32.totalorder %s77, 0
    %p591 = por %p589, %p590
    %p592 = scmp.ne.s32.totalorder %s580, %s581
    %p593 = scmp.eq.s32.totalorder %s78, 1
    %p594 = por %p592, %p593
    %p596 = scmp.ne.s32.totalorder %s581, %s595
    %p597 = scmp.eq.s32.totalorder %s78, 0
    %p598 = por %p596, %p597
    %s600 = sadd.s32 %s599, 1
    %p603 = scmp.eq.s32.totalorder %s72, 1
    %p604 = scmp.ne.s32.totalorder %s599, %s601
    %p605 = scmp.eq.s32.totalorder %s72, 0
    %p606 = por %p604, %p605
    %p607 = scmp.ne.s32.totalorder %s599, %s601
    %p608 = scmp.eq.s32.totalorder %s77, 1
    %p609 = por %p607, %p608
    %p610 = scmp.ne.s32.totalorder %s601, %s602
    %p611 = scmp.eq.s32.totalorder %s77, 0
    %p612 = por %p610, %p611
    %p613 = scmp.ne.s32.totalorder %s601, %s602
    %p614 = scmp.eq.s32.totalorder %s78, 1
    %p615 = por %p613, %p614
    %p617 = scmp.ne.s32.totalorder %s602, %s616
    %p618 = scmp.eq.s32.totalorder %s78, 0
    %p619 = por %p617, %p618
    %s621 = sadd.s32 %s620, 1
    %p624 = scmp.eq.s32.totalorder %s72, 1
    %p625 = scmp.ne.s32.totalorder %s620, %s622
    %p626 = scmp.eq.s32.totalorder %s72, 0
    %p627 = por %p625, %p626
    %p628 = scmp.ne.s32.totalorder %s620, %s622
    %p629 = scmp.eq.s32.totalorder %s77, 1
    %p630 = por %p628, %p629
    %p631 = scmp.ne.s32.totalorder %s622, %s623
    %p632 = scmp.eq.s32.totalorder %s77, 0
    %p633 = por %p631, %p632
    %p634 = scmp.ne.s32.totalorder %s622, %s623
    %p635 = scmp.eq.s32.totalorder %s78, 1
    %p636 = por %p634, %p635
    %p638 = scmp.ne.s32.totalorder %s623, %s637
    %p639 = scmp.eq.s32.totalorder %s78, 0
    %p640 = por %p638, %p639
    %s642 = sadd.s32 %s641, 1
    %p645 = scmp.eq.s32.totalorder %s72, 1
    %p646 = scmp.ne.s32.totalorder %s641, %s643
    %p647 = scmp.eq.s32.totalorder %s72, 0
    %p648 = por %p646, %p647
    %p649 = scmp.ne.s32.totalorder %s641, %s643
    %p650 = scmp.eq.s32.totalorder %s77, 1
    %p651 = por %p649, %p650
    %p652 = scmp.ne.s32.totalorder %s643, %s644
    %p653 = scmp.eq.s32.totalorder %s77, 0
    %p654 = por %p652, %p653
    %p655 = scmp.ne.s32.totalorder %s643, %s644
    %p656 = scmp.eq.s32.totalorder %s78, 1
    %p657 = por %p655, %p656
    %p659 = scmp.ne.s32.totalorder %s644, %s658
    %p660 = scmp.eq.s32.totalorder %s78, 0
    %p661 = por %p659, %p660
    %s663 = sadd.s32 %s662, 1
    %p666 = scmp.eq.s32.totalorder %s72, 1
    %p667 = scmp.ne.s32.totalorder %s662, %s664
    %p668 = scmp.eq.s32.totalorder %s72, 0
    %p669 = por %p667, %p668
    %p670 = scmp.ne.s32.totalorder %s662, %s664
    %p671 = scmp.eq.s32.totalorder %s77, 1
    %p672 = por %p670, %p671
    %p673 = scmp.ne.s32.totalorder %s664, %s665
    %p674 = scmp.eq.s32.totalorder %s77, 0
    %p675 = por %p673, %p674
    %p676 = scmp.ne.s32.totalorder %s664, %s665
    %p677 = scmp.eq.s32.totalorder %s78, 1
    %p678 = por %p676, %p677
    %p680 = scmp.ne.s32.totalorder %s665, %s679
    %p681 = scmp.eq.s32.totalorder %s78, 0
    %p682 = por %p680, %p681
    %s684 = sadd.s32 %s683, 1
    %p687 = scmp.eq.s32.totalorder %s72, 1
    %p688 = scmp.ne.s32.totalorder %s683, %s685
    %p689 = scmp.eq.s32.totalorder %s72, 0
    %p690 = por %p688, %p689
    %p691 = scmp.ne.s32.totalorder %s683, %s685
    %p692 = scmp.eq.s32.totalorder %s77, 1
    %p693 = por %p691, %p692
    %p694 = scmp.ne.s32.totalorder %s685, %s686
    %p695 = scmp.eq.s32.totalorder %s77, 0
    %p696 = por %p694, %p695
    %p697 = scmp.ne.s32.totalorder %s685, %s686
    %p698 = scmp.eq.s32.totalorder %s78, 1
    %p699 = por %p697, %p698
    %p701 = scmp.ne.s32.totalorder %s686, %s700
    %p702 = scmp.eq.s32.totalorder %s78, 0
    %p703 = por %p701, %p702
    %s705 = sadd.s32 %s704, 1
    %p708 = scmp.eq.s32.totalorder %s72, 1
    %p709 = scmp.ne.s32.totalorder %s704, %s706
    %p710 = scmp.eq.s32.totalorder %s72, 0
    %p711 = por %p709, %p710
    %p712 = scmp.ne.s32.totalorder %s704, %s706
    %p713 = scmp.eq.s32.totalorder %s77, 1
    %p714 = por %p712, %p713
    %p715 = scmp.ne.s32.totalorder %s706, %s707
    %p716 = scmp.eq.s32.totalorder %s77, 0
    %p717 = por %p715, %p716
    %p718 = scmp.ne.s32.totalorder %s706, %s707
    %p719 = scmp.eq.s32.totalorder %s78, 1
    %p720 = por %p718, %p719
    %p722 = scmp.ne.s32.totalorder %s707, %s721
    %p723 = scmp.eq.s32.totalorder %s78, 0
    %p724 = por %p722, %p723
    %s726 = sadd.s32 %s725, 1
    %p729 = scmp.eq.s32.totalorder %s72, 1
    %p730 = scmp.ne.s32.totalorder %s725, %s727
    %p731 = scmp.eq.s32.totalorder %s72, 0
    %p732 = por %p730, %p731
    %p733 = scmp.ne.s32.totalorder %s725, %s727
    %p734 = scmp.eq.s32.totalorder %s77, 1
    %p735 = por %p733, %p734
    %p736 = scmp.ne.s32.totalorder %s727, %s728
    %p737 = scmp.eq.s32.totalorder %s77, 0
    %p738 = por %p736, %p737
    %p739 = scmp.ne.s32.totalorder %s727, %s728
    %p740 = scmp.eq.s32.totalorder %s78, 1
    %p741 = por %p739, %p740
    %p743 = scmp.ne.s32.totalorder %s728, %s742
    %p744 = scmp.eq.s32.totalorder %s78, 0
    %p745 = por %p743, %p744
    %s746 = ssub.s32 %s72, %s79
    %p747 = scmp.eq.s32.totalorder %s746, 0
    %s749 = sadd.s32 %s748, 1
    %s750 = scalar_select %p747, %s748, %s749
    %p753 = pneg %p747
    %p754 = scmp.eq.s32.totalorder %s72, 1
    %p755 = por %p753, %p754
    %p756 = scmp.ne.s32.totalorder %s748, %s751
    %p757 = scmp.eq.s32.totalorder %s72, 0
    %p758 = por %p756, %p757
    %p759 = scmp.ne.s32.totalorder %s748, %s751
    %p760 = scmp.eq.s32.totalorder %s77, 1
    %p761 = por %p759, %p760
    %p762 = scmp.ne.s32.totalorder %s751, %s752
    %p763 = scmp.eq.s32.totalorder %s77, 0
    %p764 = por %p762, %p763
    %p765 = scmp.ne.s32.totalorder %s751, %s752
    %p766 = scmp.eq.s32.totalorder %s78, 1
    %p767 = por %p765, %p766
    %p769 = scmp.ne.s32.totalorder %s752, %s768
    %p770 = scmp.eq.s32.totalorder %s78, 0
    %p771 = por %p769, %p770
    %s772 = ssub.s32 %s72, %s79
    %p773 = scmp.eq.s32.totalorder %s772, 0
    %s775 = sadd.s32 %s774, 1
    %s776 = scalar_select %p773, %s774, %s775
    %p779 = pneg %p773
    %p780 = scmp.eq.s32.totalorder %s72, 1
    %p781 = por %p779, %p780
    %p782 = scmp.ne.s32.totalorder %s774, %s777
    %p783 = scmp.eq.s32.totalorder %s72, 0
    %p784 = por %p782, %p783
    %p785 = scmp.ne.s32.totalorder %s774, %s777
    %p786 = scmp.eq.s32.totalorder %s77, 1
    %p787 = por %p785, %p786
    %p788 = scmp.ne.s32.totalorder %s777, %s778
    %p789 = scmp.eq.s32.totalorder %s77, 0
    %p790 = por %p788, %p789
    %p791 = scmp.ne.s32.totalorder %s777, %s778
    %p792 = scmp.eq.s32.totalorder %s78, 1
    %p793 = por %p791, %p792
    %p795 = scmp.ne.s32.totalorder %s778, %s794
    %p796 = scmp.eq.s32.totalorder %s78, 0
    %p797 = por %p795, %p796
    %p798 = scmp.le.s32.totalorder 1, %s72
    %p799 = scmp.lt.s32.totalorder %s72, 3
    %p800 = pnand %p798, %p799
    %p801 = pneg %p800
    // Predicated region
    $region9: #{semantic_guidance_forward.1} parent=5 // pred_check
      _
    $region10: #{semantic_guidance_forward.1} parent=5 // pred_check_branch
      %803 = sbr.rel (%p800) target = $region12
    $region11: #{semantic_guidance_forward.1} parent=5 // pred_region
      %s804 = ssub.s32 %s72, 1
      // Predicated region
      $region13: #{semantic_guidance_forward.1} parent=11 // pred_check
        %p805 = pneg %p171
      $region14: #{semantic_guidance_forward.1} parent=11 // pred_check_branch
        %807 = sbr.rel (%p805) target = $region16
      $region15: #{semantic_guidance_forward.1} parent=11 // pred_region
        _
      $region16: #{semantic_guidance_forward.1} parent=11 // pred_fallthru
        _
      // Predicated region
      $region17: #{semantic_guidance_forward.1} parent=11 // pred_check
        %p808 = pneg %p192
      $region18: #{semantic_guidance_forward.1} parent=11 // pred_check_branch
        %810 = sbr.rel (%p808) target = $region20
      $region19: #{semantic_guidance_forward.1} parent=11 // pred_region
        _
      $region20: #{semantic_guidance_forward.1} parent=11 // pred_fallthru
        _
      // Predicated region
      $region21: #{semantic_guidance_forward.1} parent=11 // pred_check
        %p811 = pneg %p213
      $region22: #{semantic_guidance_forward.1} parent=11 // pred_check_branch
        %813 = sbr.rel (%p811) target = $region24
      $region23: #{semantic_guidance_forward.1} parent=11 // pred_region
        _
      $region24: #{semantic_guidance_forward.1} parent=11 // pred_fallthru
        _
      // Predicated region
      $region25: #{semantic_guidance_forward.1} parent=11 // pred_check
        %p814 = pneg %p234
      $region26: #{semantic_guidance_forward.1} parent=11 // pred_check_branch
        %816 = sbr.rel (%p814) target = $region28
      $region27: #{semantic_guidance_forward.1} parent=11 // pred_region
        _
      $region28: #{semantic_guidance_forward.1} parent=11 // pred_fallthru
        _
      // Predicated region
      $region29: #{semantic_guidance_forward.1} parent=11 // pred_check
        %p817 = pneg %p255
      $region30: #{semantic_guidance_forward.1} parent=11 // pred_check_branch
        %819 = sbr.rel (%p817) target = $region32
      $region31: #{semantic_guidance_forward.1} parent=11 // pred_region
        _
      $region32: #{semantic_guidance_forward.1} parent=11 // pred_fallthru
        _
      // Predicated region
      $region33: #{semantic_guidance_forward.1} parent=11 // pred_check
        %p820 = pneg %p276
      $region34: #{semantic_guidance_forward.1} parent=11 // pred_check_branch
        %822 = sbr.rel (%p820) target = $region36
      $region35: #{semantic_guidance_forward.1} parent=11 // pred_region
        _
      $region36: #{semantic_guidance_forward.1} parent=11 // pred_fallthru
        _
      // Predicated region
      $region37: #{semantic_guidance_forward.1} parent=11 // pred_check
        %p823 = pneg %p297
      $region38: #{semantic_guidance_forward.1} parent=11 // pred_check_branch
        %825 = sbr.rel (%p823) target = $region40
      $region39: #{semantic_guidance_forward.1} parent=11 // pred_region
        _
      $region40: #{semantic_guidance_forward.1} parent=11 // pred_fallthru
        _
      // Predicated region
      $region41: #{semantic_guidance_forward.1} parent=11 // pred_check
        %p826 = pneg %p318
      $region42: #{semantic_guidance_forward.1} parent=11 // pred_check_branch
        %828 = sbr.rel (%p826) target = $region44
      $region43: #{semantic_guidance_forward.1} parent=11 // pred_region
        _
      $region44: #{semantic_guidance_forward.1} parent=11 // pred_fallthru
        _
      // Predicated region
      $region45: #{semantic_guidance_forward.1} parent=11 // pred_check
        %p829 = pneg %p339
      $region46: #{semantic_guidance_forward.1} parent=11 // pred_check_branch
        %831 = sbr.rel (%p829) target = $region48
      $region47: #{semantic_guidance_forward.1} parent=11 // pred_region
        _
      $region48: #{semantic_guidance_forward.1} parent=11 // pred_fallthru
        _
      // Predicated region
      $region49: #{semantic_guidance_forward.1} parent=11 // pred_check
        %p832 = pneg %p360
      $region50: #{semantic_guidance_forward.1} parent=11 // pred_check_branch
        %834 = sbr.rel (%p832) target = $region52
      $region51: #{semantic_guidance_forward.1} parent=11 // pred_region
        _
      $region52: #{semantic_guidance_forward.1} parent=11 // pred_fallthru
        _
      // Predicated region
      $region53: #{semantic_guidance_forward.1} parent=11 // pred_check
        %p835 = pneg %p381
      $region54: #{semantic_guidance_forward.1} parent=11 // pred_check_branch
        %837 = sbr.rel (%p835) target = $region56
      $region55: #{semantic_guidance_forward.1} parent=11 // pred_region
        _
      $region56: #{semantic_guidance_forward.1} parent=11 // pred_fallthru
        _
      // Predicated region
      $region57: #{semantic_guidance_forward.1} parent=11 // pred_check
        %p838 = pneg %p402
      $region58: #{semantic_guidance_forward.1} parent=11 // pred_check_branch
        %840 = sbr.rel (%p838) target = $region60
      $region59: #{semantic_guidance_forward.1} parent=11 // pred_region
        _
      $region60: #{semantic_guidance_forward.1} parent=11 // pred_fallthru
        _
      // Predicated region
      $region61: #{semantic_guidance_forward.1} parent=11 // pred_check
        %p841 = pneg %p423
      $region62: #{semantic_guidance_forward.1} parent=11 // pred_check_branch
        %843 = sbr.rel (%p841) target = $region64
      $region63: #{semantic_guidance_forward.1} parent=11 // pred_region
        _
      $region64: #{semantic_guidance_forward.1} parent=11 // pred_fallthru
        _
      // Predicated region
      $region65: #{semantic_guidance_forward.1} parent=11 // pred_check
        %p844 = pneg %p444
      $region66: #{semantic_guidance_forward.1} parent=11 // pred_check_branch
        %846 = sbr.rel (%p844) target = $region68
      $region67: #{semantic_guidance_forward.1} parent=11 // pred_region
        _
      $region68: #{semantic_guidance_forward.1} parent=11 // pred_fallthru
        _
      // Predicated region
      $region69: #{semantic_guidance_forward.1} parent=11 // pred_check
        %p847 = pneg %p465
      $region70: #{semantic_guidance_forward.1} parent=11 // pred_check_branch
        %849 = sbr.rel (%p847) target = $region72
      $region71: #{semantic_guidance_forward.1} parent=11 // pred_region
        _
      $region72: #{semantic_guidance_forward.1} parent=11 // pred_fallthru
        _
      // Predicated region
      $region73: #{semantic_guidance_forward.1} parent=11 // pred_check
        %p850 = pneg %p486
      $region74: #{semantic_guidance_forward.1} parent=11 // pred_check_branch
        %852 = sbr.rel (%p850) target = $region76
      $region75: #{semantic_guidance_forward.1} parent=11 // pred_region
        _
      $region76: #{semantic_guidance_forward.1} parent=11 // pred_fallthru
        _
      // Predicated region
      $region77: #{semantic_guidance_forward.1} parent=11 // pred_check
        %p853 = pneg %p507
      $region78: #{semantic_guidance_forward.1} parent=11 // pred_check_branch
        %855 = sbr.rel (%p853) target = $region80
      $region79: #{semantic_guidance_forward.1} parent=11 // pred_region
        _
      $region80: #{semantic_guidance_forward.1} parent=11 // pred_fallthru
        _
      // Predicated region
      $region81: #{semantic_guidance_forward.1} parent=11 // pred_check
        %p856 = pneg %p528
      $region82: #{semantic_guidance_forward.1} parent=11 // pred_check_branch
        %858 = sbr.rel (%p856) target = $region84
      $region83: #{semantic_guidance_forward.1} parent=11 // pred_region
        _
      $region84: #{semantic_guidance_forward.1} parent=11 // pred_fallthru
        _
      // Predicated region
      $region85: #{semantic_guidance_forward.1} parent=11 // pred_check
        %p859 = pneg %p549
      $region86: #{semantic_guidance_forward.1} parent=11 // pred_check_branch
        %861 = sbr.rel (%p859) target = $region88
      $region87: #{semantic_guidance_forward.1} parent=11 // pred_region
        _
      $region88: #{semantic_guidance_forward.1} parent=11 // pred_fallthru
        _
      // Predicated region
      $region89: #{semantic_guidance_forward.1} parent=11 // pred_check
        %p862 = pneg %p570
      $region90: #{semantic_guidance_forward.1} parent=11 // pred_check_branch
        %864 = sbr.rel (%p862) target = $region92
      $region91: #{semantic_guidance_forward.1} parent=11 // pred_region
        _
      $region92: #{semantic_guidance_forward.1} parent=11 // pred_fallthru
        _
      // Predicated region
      $region93: #{semantic_guidance_forward.1} parent=11 // pred_check
        %p865 = pneg %p591
      $region94: #{semantic_guidance_forward.1} parent=11 // pred_check_branch
        %867 = sbr.rel (%p865) target = $region96
      $region95: #{semantic_guidance_forward.1} parent=11 // pred_region
        _
      $region96: #{semantic_guidance_forward.1} parent=11 // pred_fallthru
        _
      // Predicated region
      $region97: #{semantic_guidance_forward.1} parent=11 // pred_check
        %p868 = pneg %p612
      $region98: #{semantic_guidance_forward.1} parent=11 // pred_check_branch
        %870 = sbr.rel (%p868) target = $region100
      $region99: #{semantic_guidance_forward.1} parent=11 // pred_region
        _
      $region100: #{semantic_guidance_forward.1} parent=11 // pred_fallthru
        _
      // Predicated region
      $region101: #{semantic_guidance_forward.1} parent=11 // pred_check
        %p871 = pneg %p633
      $region102: #{semantic_guidance_forward.1} parent=11 // pred_check_branch
        %873 = sbr.rel (%p871) target = $region104
      $region103: #{semantic_guidance_forward.1} parent=11 // pred_region
        _
      $region104: #{semantic_guidance_forward.1} parent=11 // pred_fallthru
        _
      // Predicated region
      $region105: #{semantic_guidance_forward.1} parent=11 // pred_check
        %p874 = pneg %p654
      $region106: #{semantic_guidance_forward.1} parent=11 // pred_check_branch
        %876 = sbr.rel (%p874) target = $region108
      $region107: #{semantic_guidance_forward.1} parent=11 // pred_region
        _
      $region108: #{semantic_guidance_forward.1} parent=11 // pred_fallthru
        _
      // Predicated region
      $region109: #{semantic_guidance_forward.1} parent=11 // pred_check
        %p877 = pneg %p675
      $region110: #{semantic_guidance_forward.1} parent=11 // pred_check_branch
        %879 = sbr.rel (%p877) target = $region112
      $region111: #{semantic_guidance_forward.1} parent=11 // pred_region
        _
      $region112: #{semantic_guidance_forward.1} parent=11 // pred_fallthru
        _
      // Predicated region
      $region113: #{semantic_guidance_forward.1} parent=11 // pred_check
        %p880 = pneg %p696
      $region114: #{semantic_guidance_forward.1} parent=11 // pred_check_branch
        %882 = sbr.rel (%p880) target = $region116
      $region115: #{semantic_guidance_forward.1} parent=11 // pred_region
        _
      $region116: #{semantic_guidance_forward.1} parent=11 // pred_fallthru
        _
      // Predicated region
      $region117: #{semantic_guidance_forward.1} parent=11 // pred_check
        %p883 = pneg %p717
      $region118: #{semantic_guidance_forward.1} parent=11 // pred_check_branch
        %885 = sbr.rel (%p883) target = $region120
      $region119: #{semantic_guidance_forward.1} parent=11 // pred_region
        _
      $region120: #{semantic_guidance_forward.1} parent=11 // pred_fallthru
        _
      // Predicated region
      $region121: #{semantic_guidance_forward.1} parent=11 // pred_check
        %p886 = pneg %p738
      $region122: #{semantic_guidance_forward.1} parent=11 // pred_check_branch
        %888 = sbr.rel (%p886) target = $region124
      $region123: #{semantic_guidance_forward.1} parent=11 // pred_region
        _
      $region124: #{semantic_guidance_forward.1} parent=11 // pred_fallthru
        _
    $region12: #{semantic_guidance_forward.1} parent=5 // pred_fallthru
      _
    %p889 = scmp.lt.s32.totalorder %s72, 2
    // Predicated region
    $region125: #{semantic_guidance_forward.1} parent=5 // pred_check
      %p890 = pneg %p889
    $region126: #{semantic_guidance_forward.1} parent=5 // pred_check_branch
      %892 = sbr.rel (%p890) target = $region128
    $region127: #{semantic_guidance_forward.1} parent=5 // pred_region
      // Predicated region
      $region129: #{semantic_guidance_forward.1} parent=127 // pred_check
        %p893 = pneg %p92
      $region130: #{semantic_guidance_forward.1} parent=127 // pred_check_branch
        %895 = sbr.rel (%p893) target = $region132
      $region131: #{semantic_guidance_forward.1} parent=127 // pred_region
        %p896 = scmp.lt.s32.totalorder %s72, 1
        %s897 = scalar_select %p896, %s72, 1
        %s898 = smul.addr %s897, 4
        %s899 = smul.addr %s898, 8
        %s900 = scalar_lea.vmem %s1, %s899
      $region132: #{semantic_guidance_forward.1} parent=127 // pred_fallthru
        _
      // Predicated region
      $region133: #{semantic_guidance_forward.1} parent=127 // pred_check
        %p901 = pneg %p118
      $region134: #{semantic_guidance_forward.1} parent=127 // pred_check_branch
        %903 = sbr.rel (%p901) target = $region136
      $region135: #{semantic_guidance_forward.1} parent=127 // pred_region
        %p904 = scmp.lt.s32.totalorder %s72, 1
        %s905 = scalar_select %p904, %s72, 1
        %s906 = smul.addr %s905, 6
        %s907 = smul.addr %s906, 8
        %s908 = scalar_lea.vmem %s3, %s907
      $region136: #{semantic_guidance_forward.1} parent=127 // pred_fallthru
        _
      // Predicated region
      $region137: #{semantic_guidance_forward.1} parent=127 // pred_check
        %p909 = pneg %p144
      $region138: #{semantic_guidance_forward.1} parent=127 // pred_check_branch
        %911 = sbr.rel (%p909) target = $region140
      $region139: #{semantic_guidance_forward.1} parent=127 // pred_region
        %p912 = scmp.lt.s32.totalorder %s72, 1
        %s913 = scalar_select %p912, %s72, 1
        %s914 = smul.addr %s913, 8
        %s915 = scalar_lea.vmem %s5, %s914
      $region140: #{semantic_guidance_forward.1} parent=127 // pred_fallthru
        _
    $region128: #{semantic_guidance_forward.1} parent=5 // pred_fallthru
      _
    %p916 = scmp.le.s32.totalorder 1, %s72
    %p917 = scmp.lt.s32.totalorder %s72, 3
    %p918 = pnand %p916, %p917
    %p919 = pneg %p918
    // Predicated region
    $region141: #{semantic_guidance_forward.1} parent=5 // pred_check
      _
    $region142: #{semantic_guidance_forward.1} parent=5 // pred_check_branch
      %921 = sbr.rel (%p918) target = $region144
    $region143: #{semantic_guidance_forward.1} parent=5 // pred_region
      %s922 = ssub.s32 %s72, 1
      %p923 = scmp.lt.s32.totalorder %s77, 1
      %s924 = scalar_select %p923, %s77, 1
      %s925 = smul.addr %s924, 4
      %s926 = smul.addr %s925, 8
      %s927 = scalar_lea.vmem %s1, %s926
      %p928 = pneg %p98
      %p929 = pneg %p95
      %p930 = scmp.lt.s32.totalorder %s77, 1
      %s931 = scalar_select %p930, %s77, 1
      %s932 = smul.addr %s931, 6
      %s933 = smul.addr %s932, 8
      %s934 = scalar_lea.vmem %s3, %s933
      %p935 = pneg %p124
      %p936 = pneg %p121
      %p937 = scmp.lt.s32.totalorder %s77, 1
      %s938 = scalar_select %p937, %s77, 1
      %s939 = smul.addr %s938, 8
      %s940 = scalar_lea.vmem %s5, %s939
      %p941 = pneg %p150
      %p942 = pneg %p147
      %p943 = pneg %p171
      %p944 = pneg %p168
      %p945 = pneg %p192
      %p946 = pneg %p189
      %p947 = pneg %p213
      %p948 = pneg %p210
      %p949 = pneg %p234
      %p950 = pneg %p231
      %p951 = pneg %p255
      %p952 = pneg %p252
      %p953 = pneg %p276
      %p954 = pneg %p273
      %p955 = pneg %p297
      %p956 = pneg %p294
      %p957 = pneg %p318
      %p958 = pneg %p315
      %p959 = pneg %p339
      %p960 = pneg %p336
      %p961 = pneg %p360
      %p962 = pneg %p357
      %p963 = pneg %p381
      %p964 = pneg %p378
      %p965 = pneg %p402
      %p966 = pneg %p399
      %p967 = pneg %p423
      %p968 = pneg %p420
      %p969 = pneg %p444
      %p970 = pneg %p441
      %p971 = pneg %p465
      %p972 = pneg %p462
      %p973 = pneg %p486
      %p974 = pneg %p483
      %p975 = pneg %p507
      %p976 = pneg %p504
      %p977 = pneg %p528
      %p978 = pneg %p525
      %p979 = pneg %p549
      %p980 = pneg %p546
      %p981 = pneg %p570
      %p982 = pneg %p567
      %p983 = pneg %p591
      %p984 = pneg %p588
      %p985 = pneg %p612
      %p986 = pneg %p609
      %p987 = pneg %p633
      %p988 = pneg %p630
      %p989 = pneg %p654
      %p990 = pneg %p651
      %p991 = pneg %p675
      %p992 = pneg %p672
      %p993 = pneg %p696
      %p994 = pneg %p693
      %p995 = pneg %p717
      %p996 = pneg %p714
      %p997 = pneg %p738
      %p998 = pneg %p735
      %p999 = pneg %p764
      %p1000 = pneg %p761
      %p1001 = scmp.lt.s32.totalorder %s77, 1
      %s1002 = scalar_select %p1001, %s77, 1
      %s1003 = smul.addr %s1002, 4
      %s1004 = smul.addr %s1003, 8
      %s1005 = scalar_lea.vmem %s63, %s1004
      %p1006 = pneg %p790
      %p1007 = pneg %p787
      %p1008 = scmp.lt.s32.totalorder %s77, 1
      %s1009 = scalar_select %p1008, %s77, 1
      %s1010 = smul.addr %s1009, 4
      %s1011 = smul.addr %s1010, 8
      %s1012 = scalar_lea.vmem %s65, %s1011
      %p1013 = scmp.lt.s32.totalorder %s77, 1
      %s1014 = scalar_select %p1013, %s77, 1
      %s1015 = smul.addr %s1014, 4
      %s1016 = smul.addr %s1015, 8
      %s1017 = scalar_lea.vmem %s1, %s1016
      %p1018 = scmp.lt.s32.totalorder %s77, 1
      %s1019 = scalar_select %p1018, %s77, 1
      %s1020 = smul.addr %s1019, 6
      %s1021 = smul.addr %s1020, 8
      %s1022 = scalar_lea.vmem %s3, %s1021
      %p1023 = scmp.lt.s32.totalorder %s77, 1
      %s1024 = scalar_select %p1023, %s77, 1
      %s1025 = smul.addr %s1024, 8
      %s1026 = scalar_lea.vmem %s5, %s1025
      %p1027 = scmp.lt.s32.totalorder %s77, 1
      %s1028 = scalar_select %p1027, %s77, 1
      %s1029 = smul.addr %s1028, 4
      %s1030 = smul.addr %s1029, 8
      %s1031 = scalar_lea.vmem %s63, %s1030
      %p1032 = scmp.lt.s32.totalorder %s77, 1
      %s1033 = scalar_select %p1032, %s77, 1
      %s1034 = smul.addr %s1033, 4
      %s1035 = smul.addr %s1034, 8
      %s1036 = scalar_lea.vmem %s65, %s1035
      %v1038 = vld [vmem:[%s1017] sm:$0xff]
      %v1039 = vld [vmem:[%s1017 + $0x8] sm:$0xff]
      %v1040 = vld [vmem:[%s1017 + $0x10] sm:$0xff]
      %v1041 = vld [vmem:[%s1017 + $0x18] sm:$0xff]
      %v1042 = vpack.c.bf16 %v1039, %v1038
      %v1043 = vpack.c.bf16 %v1041, %v1040
      %v1044 = vld [vmem:[%s7] sm:$0xf]
      %v1045 = vld [vmem:[%s7 + $0x4] sm:$0xf]
      %v1046 = vld [vmem:[%s7 + $0x8] sm:$0xf]
      %v1047 = vld [vmem:[%s7 + $0xc] sm:$0xf]
      %v1048 = vld [vmem:[%s7 + $0x10] sm:$0xf]
      %v1049 = vld [vmem:[%s7 + $0x14] sm:$0xf]
      %v1050 = vld [vmem:[%s7 + $0x18] sm:$0xf]
      %v1051 = vld [vmem:[%s7 + $0x1c] sm:$0xf]
      %v1052 = vld [vmem:[%s7 + $0x20] sm:$0xf]
      %v1053 = vld [vmem:[%s7 + $0x24] sm:$0xf]
      %v1054 = vld [vmem:[%s7 + $0x28] sm:$0xf]
      %v1055 = vld [vmem:[%s7 + $0x2c] sm:$0xf]
      %v1056 = vld [vmem:[%s9] sm:$0xff]
      %v1057 = vld [vmem:[%s9 + $0x8] sm:$0xff]
      %v1058 = vld [vmem:[%s9 + $0x10] sm:$0xff]
      %v1059 = vld [vmem:[%s9 + $0x18] sm:$0xff]
      %v1060 = vld [vmem:[%s9 + $0x20] sm:$0xff]
      %v1061 = vld [vmem:[%s9 + $0x28] sm:$0xff]
      %v1062 = vld [vmem:[%s9 + $0x30] sm:$0xff]
      %v1063 = vld [vmem:[%s9 + $0x38] sm:$0xff]
      %v1064 = vld [vmem:[%s9 + $0x40] sm:$0xff]
      %v1065 = vld [vmem:[%s9 + $0x48] sm:$0xff]
      %v1066 = vld [vmem:[%s9 + $0x50] sm:$0xff]
      %v1067 = vld [vmem:[%s9 + $0x58] sm:$0xff]
      %1069 = vset.pattern.permute.xlu0 0
      %1070 = vperm.xlu0 %1069, %v1056
      %v1071 = vpop.permute.xlu0 %1070
      %1074 = vset.pattern.permute.xlu0 0
      %1075 = vperm.xlu0 %1074, %v1057
      %v1076 = vpop.permute.xlu0 %1075
      %1079 = vset.pattern.permute.xlu0 0
      %1080 = vperm.xlu0 %1079, %v1058
      %v1081 = vpop.permute.xlu0 %1080
      %1084 = vset.pattern.permute.xlu0 0
      %1085 = vperm.xlu0 %1084, %v1059
      %v1086 = vpop.permute.xlu0 %1085
      %1089 = vset.pattern.permute.xlu0 0
      %1090 = vperm.xlu0 %1089, %v1060
      %v1091 = vpop.permute.xlu0 %1090
      %1094 = vset.pattern.permute.xlu0 0
      %1095 = vperm.xlu0 %1094, %v1061
      %v1096 = vpop.permute.xlu0 %1095
      %1099 = vset.pattern.permute.xlu0 0
      %1100 = vperm.xlu0 %1099, %v1062
      %v1101 = vpop.permute.xlu0 %1100
      %1104 = vset.pattern.permute.xlu0 0
      %1105 = vperm.xlu0 %1104, %v1063
      %v1106 = vpop.permute.xlu0 %1105
      %1109 = vset.pattern.permute.xlu0 0
      %1110 = vperm.xlu0 %1109, %v1064
      %v1111 = vpop.permute.xlu0 %1110
      %1114 = vset.pattern.permute.xlu0 0
      %1115 = vperm.xlu0 %1114, %v1065
      %v1116 = vpop.permute.xlu0 %1115
      %1119 = vset.pattern.permute.xlu0 0
      %1120 = vperm.xlu0 %1119, %v1066
      %v1121 = vpop.permute.xlu0 %1120
      %1124 = vset.pattern.permute.xlu0 0
      %1125 = vperm.xlu0 %1124, %v1067
      %v1126 = vpop.permute.xlu0 %1125
      %v1140 = vunpack.c.l.b16 %v1044
      %v1141 = vunpack.c.l.b16 %v1045
      %v1142 = vunpack.c.l.b16 %v1046
      %v1143 = vunpack.c.l.b16 %v1047
      %v1144 = vunpack.c.l.b16 %v1048
      %v1145 = vunpack.c.l.b16 %v1049
      %v1146 = vunpack.c.l.b16 %v1050
      %v1147 = vunpack.c.l.b16 %v1051
      %v1148 = vunpack.c.l.b16 %v1052
      %v1149 = vunpack.c.l.b16 %v1053
      %v1150 = vunpack.c.l.b16 %v1054
      %v1151 = vunpack.c.l.b16 %v1055
      %v1152 = vpack.c.b16 %v1141, %v1140
      %v1153 = vpack.c.b16 %v1143, %v1142
      %v1154 = vpack.c.b16 %v1145, %v1144
      %v1155 = vpack.c.b16 %v1147, %v1146
      %v1156 = vpack.c.b16 %v1149, %v1148
      %v1157 = vpack.c.b16 %v1151, %v1150
      %vm1158 = vcmask 261120
      %v1160 = vsel %vm1158, %v1152, 0
      %v1163 = vsel %vm1158, %v1153, 0
      %v1166 = vsel %vm1158, %v1154, 0
      %v1169 = vsel %vm1158, %v1155, 0
      %v1172 = vsel %vm1158, %v1156, 0
      %v1175 = vsel %vm1158, %v1157, 0
      %1177 = vmatprep.subr.bf16.mxu0 0
      %1178 = vmatpush1.bf16.msra.mxu0 0
      %1179 = vmatprep.subr.bf16.mxu0 0
      %1180 = vmatpush1.bf16.msra.mxu0 0
      %1181 = vmatprep.subr.bf16.mxu0 0
      %1182 = vmatpush1.bf16.msra.mxu0 0
      %1183 = vmatprep.subr.bf16.mxu0 0
      %1184 = vmatpush1.bf16.msra.mxu0 0
      %1185 = vmatprep.subr.bf16.mxu0 0
      %1186 = vmatpush1.bf16.msra.mxu0 0
      %1187 = vmatprep.subr.bf16.mxu0 0
      %1188 = vmatpush1.bf16.msra.mxu0 0
      %1189 = vmatprep.subr.bf16.mxu0 0
      %1190 = vmatpush1.bf16.msra.mxu0 %v1043
      %1191 = vmatprep.subr.bf16.mxu0 0
      %1192 = vmatpush1.bf16.msra.mxu0 %v1042
      %1193 = vmatprep.subr.bf16.mxu0 0
      %1194 = vmatpush2.bf16.msra.mxu0 0
      %1195 = vmatprep.subr.bf16.mxu0 0
      %1196 = vmatpush2.bf16.msra.mxu0 0
      %1197 = vmatprep.subr.bf16.mxu0 0
      %1198 = vmatpush2.bf16.msra.mxu0 0
      %1199 = vmatprep.subr.bf16.mxu0 0
      %1200 = vmatpush2.bf16.msra.mxu0 0
      %1201 = vmatprep.subr.bf16.mxu0 0
      %1202 = vmatpush2.bf16.msra.mxu0 0
      %1203 = vmatprep.subr.bf16.mxu0 0
      %1204 = vmatpush2.bf16.msra.mxu0 0
      %1205 = vmatprep.subr.bf16.mxu0 0
      %1206 = vmatpush2.bf16.msra.mxu0 0
      %1207 = vmatprep.subr.bf16.mxu0 0
      %1208 = vmatpush2.bf16.msra.mxu0 0
      %1209 = vmatprep.mubr.bf16.mxu0 0
      %1210 = vmatmul.mubr.bf16.gmra.mxu0 %v1160
      %v1211 = vpop.f32.mrf.mxu0
      %v1212 = vadd.f32 %v1071, %v1211
      %v1213 = vpop.f32.mrf.mxu0
      %v1214 = vpop.f32.mrf.mxu0
      %v1215 = vadd.f32 %v1076, %v1214
      %v1216 = vpop.f32.mrf.mxu0
      %1217 = vmatprep.mubr.bf16.mxu0 0
      %1218 = vmatmul.mubr.bf16.gmra.mxu0 %v1163
      %v1219 = vpop.f32.mrf.mxu0
      %v1220 = vadd.f32 %v1081, %v1219
      %v1221 = vpop.f32.mrf.mxu0
      %v1222 = vpop.f32.mrf.mxu0
      %v1223 = vadd.f32 %v1086, %v1222
      %v1224 = vpop.f32.mrf.mxu0
      %1225 = vmatprep.mubr.bf16.mxu0 0
      %1226 = vmatmul.mubr.bf16.gmra.mxu0 %v1166
      %v1227 = vpop.f32.mrf.mxu0
      %v1228 = vadd.f32 %v1091, %v1227
      %v1229 = vpop.f32.mrf.mxu0
      %v1230 = vpop.f32.mrf.mxu0
      %v1231 = vadd.f32 %v1096, %v1230
      %v1232 = vpop.f32.mrf.mxu0
      %1233 = vmatprep.mubr.bf16.mxu0 0
      %1234 = vmatmul.mubr.bf16.gmra.mxu0 %v1169
      %v1235 = vpop.f32.mrf.mxu0
      %v1236 = vadd.f32 %v1101, %v1235
      %v1237 = vpop.f32.mrf.mxu0
      %v1238 = vpop.f32.mrf.mxu0
      %v1239 = vadd.f32 %v1106, %v1238
      %v1240 = vpop.f32.mrf.mxu0
      %1241 = vmatprep.mubr.bf16.mxu0 0
      %1242 = vmatmul.mubr.bf16.gmra.mxu0 %v1172
      %v1243 = vpop.f32.mrf.mxu0
      %v1244 = vadd.f32 %v1111, %v1243
      %v1245 = vpop.f32.mrf.mxu0
      %v1246 = vpop.f32.mrf.mxu0
      %v1247 = vadd.f32 %v1116, %v1246
      %v1248 = vpop.f32.mrf.mxu0
      %1249 = vmatprep.mubr.bf16.mxu0 0
      %1250 = vmatmul.mubr.bf16.gmra.mxu0 %v1175
      %v1251 = vpop.f32.mrf.mxu0
      %v1252 = vadd.f32 %v1121, %v1251
      %v1253 = vpop.f32.mrf.mxu0
      %v1254 = vpop.f32.mrf.mxu0
      %v1255 = vadd.f32 %v1126, %v1254
      %v1256 = vpop.f32.mrf.mxu0
      %1257 = vdwg.mxu0
      %v1258 = vlaneseq
      %v1259 = vshrl.u32 %v1258, 7
      %v1260 = vadd.s32 %v1259, 8
      %v1261 = vadd.s32 %v1259, 16
      %v1262 = vadd.s32 %v1259, 24
      %v1263 = vadd.s32 %v1259, 32
      %v1264 = vadd.s32 %v1259, 40
      %v1265 = vadd.s32 %v1259, 48
      %v1266 = vadd.s32 %v1259, 56
      %v1267 = vadd.s32 %v1259, 64
      %v1268 = vadd.s32 %v1259, 72
      %v1269 = vadd.s32 %v1259, 80
      %v1270 = vadd.s32 %v1259, 88
      %v1271 = vadd.s32 %v1259, 96
      %v1272 = vadd.s32 %v1259, 104
      %v1273 = vadd.s32 %v1259, 112
      %v1274 = vadd.s32 %v1259, 120
      %v1275 = vlaneseq
      %v1276 = vand.u32 %v1275, 127
      %vm1277 = vcmp.ge.s32.totalorder %v1259, 64
      %vm1278 = vcmp.ge.s32.totalorder %v1260, 64
      %vm1279 = vcmp.ge.s32.totalorder %v1261, 64
      %vm1280 = vcmp.ge.s32.totalorder %v1262, 64
      %vm1281 = vcmp.ge.s32.totalorder %v1263, 64
      %vm1282 = vcmp.ge.s32.totalorder %v1264, 64
      %vm1283 = vcmp.ge.s32.totalorder %v1265, 64
      %vm1284 = vcmp.ge.s32.totalorder %v1266, 64
      %vm1285 = vcmp.ge.s32.totalorder %v1267, 64
      %vm1286 = vcmp.ge.s32.totalorder %v1268, 64
      %vm1287 = vcmp.ge.s32.totalorder %v1269, 64
      %vm1288 = vcmp.ge.s32.totalorder %v1270, 64
      %vm1289 = vcmp.ge.s32.totalorder %v1271, 64
      %vm1290 = vcmp.ge.s32.totalorder %v1272, 64
      %vm1291 = vcmp.ge.s32.totalorder %v1273, 64
      %vm1292 = vcmp.ge.s32.totalorder %v1274, 64
      %v1293 = vsel %vm1277, 1, 0
      %v1294 = vsel %vm1278, 1, 0
      %v1295 = vsel %vm1279, 1, 0
      %v1296 = vsel %vm1280, 1, 0
      %v1297 = vsel %vm1281, 1, 0
      %v1298 = vsel %vm1282, 1, 0
      %v1299 = vsel %vm1283, 1, 0
      %v1300 = vsel %vm1284, 1, 0
      %v1301 = vsel %vm1285, 1, 0
      %v1302 = vsel %vm1286, 1, 0
      %v1303 = vsel %vm1287, 1, 0
      %v1304 = vsel %vm1288, 1, 0
      %v1305 = vsel %vm1289, 1, 0
      %v1306 = vsel %vm1290, 1, 0
      %v1307 = vsel %vm1291, 1, 0
      %v1308 = vsel %vm1292, 1, 0
      %vm1309 = vcmp.ge.s32.totalorder %v1276, 64
      %v1310 = vsel %vm1309, 1, 0
      %vm1311 = vcmp.ge.s32.totalorder %v1259, 96
      %vm1312 = vcmp.ge.s32.totalorder %v1260, 96
      %vm1313 = vcmp.ge.s32.totalorder %v1261, 96
      %vm1314 = vcmp.ge.s32.totalorder %v1262, 96
      %vm1315 = vcmp.ge.s32.totalorder %v1263, 96
      %vm1316 = vcmp.ge.s32.totalorder %v1264, 96
      %vm1317 = vcmp.ge.s32.totalorder %v1265, 96
      %vm1318 = vcmp.ge.s32.totalorder %v1266, 96
      %vm1319 = vcmp.ge.s32.totalorder %v1267, 96
      %vm1320 = vcmp.ge.s32.totalorder %v1268, 96
      %vm1321 = vcmp.ge.s32.totalorder %v1269, 96
      %vm1322 = vcmp.ge.s32.totalorder %v1270, 96
      %vm1323 = vcmp.ge.s32.totalorder %v1271, 96
      %vm1324 = vcmp.ge.s32.totalorder %v1272, 96
      %vm1325 = vcmp.ge.s32.totalorder %v1273, 96
      %vm1326 = vcmp.ge.s32.totalorder %v1274, 96
      %v1327 = vsel %vm1311, 1, 0
      %v1328 = vsel %vm1312, 1, 0
      %v1329 = vsel %vm1313, 1, 0
      %v1330 = vsel %vm1314, 1, 0
      %v1331 = vsel %vm1315, 1, 0
      %v1332 = vsel %vm1316, 1, 0
      %v1333 = vsel %vm1317, 1, 0
      %v1334 = vsel %vm1318, 1, 0
      %v1335 = vsel %vm1319, 1, 0
      %v1336 = vsel %vm1320, 1, 0
      %v1337 = vsel %vm1321, 1, 0
      %v1338 = vsel %vm1322, 1, 0
      %v1339 = vsel %vm1323, 1, 0
      %v1340 = vsel %vm1324, 1, 0
      %v1341 = vsel %vm1325, 1, 0
      %v1342 = vsel %vm1326, 1, 0
      %v1343 = vadd.s32 %v1293, %v1327
      %v1344 = vadd.s32 %v1294, %v1328
      %v1345 = vadd.s32 %v1295, %v1329
      %v1346 = vadd.s32 %v1296, %v1330
      %v1347 = vadd.s32 %v1297, %v1331
      %v1348 = vadd.s32 %v1298, %v1332
      %v1349 = vadd.s32 %v1299, %v1333
      %v1350 = vadd.s32 %v1300, %v1334
      %v1351 = vadd.s32 %v1301, %v1335
      %v1352 = vadd.s32 %v1302, %v1336
      %v1353 = vadd.s32 %v1303, %v1337
      %v1354 = vadd.s32 %v1304, %v1338
      %v1355 = vadd.s32 %v1305, %v1339
      %v1356 = vadd.s32 %v1306, %v1340
      %v1357 = vadd.s32 %v1307, %v1341
      %v1358 = vadd.s32 %v1308, %v1342
      %vm1359 = vcmp.ge.s32.totalorder %v1276, 96
      %v1360 = vsel %vm1359, 1, 0
      %v1361 = vadd.s32 %v1310, %v1360
      %vm1362 = vcmp.eq.s32.totalorder %v1343, %v1361
      %vm1363 = vcmp.eq.s32.totalorder %v1344, %v1361
      %vm1364 = vcmp.eq.s32.totalorder %v1345, %v1361
      %vm1365 = vcmp.eq.s32.totalorder %v1346, %v1361
      %vm1366 = vcmp.eq.s32.totalorder %v1347, %v1361
      %vm1367 = vcmp.eq.s32.totalorder %v1348, %v1361
      %vm1368 = vcmp.eq.s32.totalorder %v1349, %v1361
      %vm1369 = vcmp.eq.s32.totalorder %v1350, %v1361
      %vm1370 = vcmp.eq.s32.totalorder %v1351, %v1361
      %vm1371 = vcmp.eq.s32.totalorder %v1352, %v1361
      %vm1372 = vcmp.eq.s32.totalorder %v1353, %v1361
      %vm1373 = vcmp.eq.s32.totalorder %v1354, %v1361
      %vm1374 = vcmp.eq.s32.totalorder %v1355, %v1361
      %vm1375 = vcmp.eq.s32.totalorder %v1356, %v1361
      %vm1376 = vcmp.eq.s32.totalorder %v1357, %v1361
      %vm1377 = vcmp.eq.s32.totalorder %v1358, %v1361
      %v1378 = vsel %vm1362, 0.0, -1e+30
      %v1379 = vsel %vm1363, 0.0, -1e+30
      %v1380 = vsel %vm1364, 0.0, -1e+30
      %v1381 = vsel %vm1365, 0.0, -1e+30
      %v1382 = vsel %vm1366, 0.0, -1e+30
      %v1383 = vsel %vm1367, 0.0, -1e+30
      %v1384 = vsel %vm1368, 0.0, -1e+30
      %v1385 = vsel %vm1369, 0.0, -1e+30
      %v1386 = vsel %vm1370, 0.0, -1e+30
      %v1387 = vsel %vm1371, 0.0, -1e+30
      %v1388 = vsel %vm1372, 0.0, -1e+30
      %v1389 = vsel %vm1373, 0.0, -1e+30
      %v1390 = vsel %vm1374, 0.0, -1e+30
      %v1391 = vsel %vm1375, 0.0, -1e+30
      %v1392 = vsel %vm1376, 0.0, -1e+30
      %v1393 = vsel %vm1377, 0.0, -1e+30
      %v1394 = vpack.c.bf16 %v1231, %v1228
      %v1395 = vpack.c.bf16 %v1239, %v1236
      %v1396 = vpack.c.bf16 %v1215, %v1212
      %v1397 = vpack.c.bf16 %v1223, %v1220
      %1398 = vxpose.xlu0.c.b16.start [1/8] %v1394, 128
      %1399 = vxpose.xlu0.c.b16.cont [2/8] 0, 128
      %1400 = vxpose.xlu0.c.b16.cont [3/8] 0, 128
      %1401 = vxpose.xlu0.c.b16.cont [4/8] 0, 128
      %1402 = vxpose.xlu0.c.b16.cont [5/8] 0, 128
      %1403 = vxpose.xlu0.c.b16.cont [6/8] 0, 128
      %1404 = vxpose.xlu0.c.b16.cont [7/8] 0, 128
      %1405 = vxpose.xlu0.c.b16.end [8/8] 0, 128
      %v1406 = vpop.trf.xlu0
      %v1407 = vpop.trf.xlu0
      %v1408 = vpop.trf.xlu0
      %v1409 = vpop.trf.xlu0
      %v1410 = vpop.trf.xlu0
      %v1411 = vpop.trf.xlu0
      %v1412 = vpop.trf.xlu0
      %v1413 = vpop.trf.xlu0
      %vm1414 = vcmask 130048
      %v1416 = vsel %vm1414, %v1406, 0
      %v1419 = vsel %vm1414, %v1407, 0
      %v1422 = vsel %vm1414, %v1408, 0
      %v1425 = vsel %vm1414, %v1409, 0
      %v1428 = vsel %vm1414, %v1410, 0
      %v1431 = vsel %vm1414, %v1411, 0
      %v1434 = vsel %vm1414, %v1412, 0
      %v1437 = vsel %vm1414, %v1413, 0
      %1439 = vmatprep.subr.bf16.mxu0 0
      %1440 = vmatpush1.bf16.msra.mxu0 0
      %1441 = vmatprep.subr.bf16.mxu0 0
      %1442 = vmatpush1.bf16.msra.mxu0 0
      %1443 = vmatprep.subr.bf16.mxu0 0
      %1444 = vmatpush1.bf16.msra.mxu0 0
      %1445 = vmatprep.subr.bf16.mxu0 0
      %1446 = vmatpush1.bf16.msra.mxu0 0
      %1447 = vmatprep.subr.bf16.mxu0 0
      %1448 = vmatpush1.bf16.msra.mxu0 0
      %1449 = vmatprep.subr.bf16.mxu0 0
      %1450 = vmatpush1.bf16.msra.mxu0 0
      %1451 = vmatprep.subr.bf16.mxu0 0
      %1452 = vmatpush1.bf16.msra.mxu0 0
      %1453 = vmatprep.subr.bf16.mxu0 0
      %1454 = vmatpush1.bf16.msra.mxu0 %v1396
      %1455 = vmatprep.subr.bf16.mxu0 0
      %1456 = vmatpush2.bf16.msra.mxu0 0
      %1457 = vmatprep.subr.bf16.mxu0 0
      %1458 = vmatpush2.bf16.msra.mxu0 0
      %1459 = vmatprep.subr.bf16.mxu0 0
      %1460 = vmatpush2.bf16.msra.mxu0 0
      %1461 = vmatprep.subr.bf16.mxu0 0
      %1462 = vmatpush2.bf16.msra.mxu0 0
      %1463 = vmatprep.subr.bf16.mxu0 0
      %1464 = vmatpush2.bf16.msra.mxu0 0
      %1465 = vmatprep.subr.bf16.mxu0 0
      %1466 = vmatpush2.bf16.msra.mxu0 0
      %1467 = vmatprep.subr.bf16.mxu0 0
      %1468 = vmatpush2.bf16.msra.mxu0 0
      %1469 = vmatprep.subr.bf16.mxu0 0
      %1470 = vmatpush2.bf16.msra.mxu0 0
      %1471 = vmatprep.mubr.bf16.mxu0 0
      %1472 = vmatmul.mubr.bf16.gmra.mxu0 %v1416
      %v1473 = vpop.f32.mrf.mxu0
      %v1474 = vadd.f32 %v1378, %v1473
      %v1475 = vpop.f32.mrf.mxu0
      %v1476 = vpop.f32.mrf.mxu0
      %v1477 = vadd.f32 %v1379, %v1476
      %v1478 = vpop.f32.mrf.mxu0
      %1479 = vmatprep.mubr.bf16.mxu0 0
      %1480 = vmatmul.mubr.bf16.gmra.mxu0 %v1419
      %v1481 = vpop.f32.mrf.mxu0
      %v1482 = vadd.f32 %v1380, %v1481
      %v1483 = vpop.f32.mrf.mxu0
      %v1484 = vpop.f32.mrf.mxu0
      %v1485 = vadd.f32 %v1381, %v1484
      %v1486 = vpop.f32.mrf.mxu0
      %1487 = vmatprep.mubr.bf16.mxu0 0
      %1488 = vmatmul.mubr.bf16.gmra.mxu0 %v1422
      %v1489 = vpop.f32.mrf.mxu0
      %v1490 = vadd.f32 %v1382, %v1489
      %v1491 = vpop.f32.mrf.mxu0
      %v1492 = vpop.f32.mrf.mxu0
      %v1493 = vadd.f32 %v1383, %v1492
      %v1494 = vpop.f32.mrf.mxu0
      %1495 = vmatprep.mubr.bf16.mxu0 0
      %1496 = vmatmul.mubr.bf16.gmra.mxu0 %v1425
      %v1497 = vpop.f32.mrf.mxu0
      %v1498 = vadd.f32 %v1384, %v1497
      %v1499 = vpop.f32.mrf.mxu0
      %v1500 = vpop.f32.mrf.mxu0
      %v1501 = vadd.f32 %v1385, %v1500
      %v1502 = vpop.f32.mrf.mxu0
      %1503 = vmatprep.mubr.bf16.mxu0 0
      %1504 = vmatmul.mubr.bf16.gmra.mxu0 %v1428
      %v1505 = vpop.f32.mrf.mxu0
      %v1506 = vadd.f32 %v1386, %v1505
      %v1507 = vpop.f32.mrf.mxu0
      %v1508 = vpop.f32.mrf.mxu0
      %v1509 = vadd.f32 %v1387, %v1508
      %v1510 = vpop.f32.mrf.mxu0
      %1511 = vmatprep.mubr.bf16.mxu0 0
      %1512 = vmatmul.mubr.bf16.gmra.mxu0 %v1431
      %v1513 = vpop.f32.mrf.mxu0
      %v1514 = vadd.f32 %v1388, %v1513
      %v1515 = vpop.f32.mrf.mxu0
      %v1516 = vpop.f32.mrf.mxu0
      %v1517 = vadd.f32 %v1389, %v1516
      %v1518 = vpop.f32.mrf.mxu0
      %1519 = vmatprep.mubr.bf16.mxu0 0
      %1520 = vmatmul.mubr.bf16.gmra.mxu0 %v1434
      %v1521 = vpop.f32.mrf.mxu0
      %v1522 = vadd.f32 %v1390, %v1521
      %v1523 = vpop.f32.mrf.mxu0
      %v1524 = vpop.f32.mrf.mxu0
      %v1525 = vadd.f32 %v1391, %v1524
      %v1526 = vpop.f32.mrf.mxu0
      %1527 = vmatprep.mubr.bf16.mxu0 0
      %1528 = vmatmul.mubr.bf16.gmra.mxu0 %v1437
      %v1529 = vpop.f32.mrf.mxu0
      %v1530 = vadd.f32 %v1392, %v1529
      %v1531 = vpop.f32.mrf.mxu0
      %v1532 = vpop.f32.mrf.mxu0
      %v1533 = vadd.f32 %v1393, %v1532
      %v1534 = vpop.f32.mrf.mxu0
      %1535 = vdwg.mxu0
      %1536 = vxpose.xlu0.c.b16.start [1/8] %v1395, 128
      %1537 = vxpose.xlu0.c.b16.cont [2/8] 0, 128
      %1538 = vxpose.xlu0.c.b16.cont [3/8] 0, 128
      %1539 = vxpose.xlu0.c.b16.cont [4/8] 0, 128
      %1540 = vxpose.xlu0.c.b16.cont [5/8] 0, 128
      %1541 = vxpose.xlu0.c.b16.cont [6/8] 0, 128
      %1542 = vxpose.xlu0.c.b16.cont [7/8] 0, 128
      %1543 = vxpose.xlu0.c.b16.end [8/8] 0, 128
      %v1544 = vpop.trf.xlu0
      %v1545 = vpop.trf.xlu0
      %v1546 = vpop.trf.xlu0
      %v1547 = vpop.trf.xlu0
      %v1548 = vpop.trf.xlu0
      %v1549 = vpop.trf.xlu0
      %v1550 = vpop.trf.xlu0
      %v1551 = vpop.trf.xlu0
      %v1553 = vsel %vm1414, %v1544, 0
      %v1556 = vsel %vm1414, %v1545, 0
      %v1559 = vsel %vm1414, %v1546, 0
      %v1562 = vsel %vm1414, %v1547, 0
      %v1565 = vsel %vm1414, %v1548, 0
      %v1568 = vsel %vm1414, %v1549, 0
      %v1571 = vsel %vm1414, %v1550, 0
      %v1574 = vsel %vm1414, %v1551, 0
      %1576 = vmatprep.subr.bf16.mxu0 0
      %1577 = vmatpush1.bf16.msra.mxu0 0
      %1578 = vmatprep.subr.bf16.mxu0 0
      %1579 = vmatpush1.bf16.msra.mxu0 0
      %1580 = vmatprep.subr.bf16.mxu0 0
      %1581 = vmatpush1.bf16.msra.mxu0 0
      %1582 = vmatprep.subr.bf16.mxu0 0
      %1583 = vmatpush1.bf16.msra.mxu0 0
      %1584 = vmatprep.subr.bf16.mxu0 0
      %1585 = vmatpush1.bf16.msra.mxu0 0
      %1586 = vmatprep.subr.bf16.mxu0 0
      %1587 = vmatpush1.bf16.msra.mxu0 0
      %1588 = vmatprep.subr.bf16.mxu0 0
      %1589 = vmatpush1.bf16.msra.mxu0 0
      %1590 = vmatprep.subr.bf16.mxu0 0
      %1591 = vmatpush1.bf16.msra.mxu0 %v1397
      %1592 = vmatprep.subr.bf16.mxu0 0
      %1593 = vmatpush2.bf16.msra.mxu0 0
      %1594 = vmatprep.subr.bf16.mxu0 0
      %1595 = vmatpush2.bf16.msra.mxu0 0
      %1596 = vmatprep.subr.bf16.mxu0 0
      %1597 = vmatpush2.bf16.msra.mxu0 0
      %1598 = vmatprep.subr.bf16.mxu0 0
      %1599 = vmatpush2.bf16.msra.mxu0 0
      %1600 = vmatprep.subr.bf16.mxu0 0
      %1601 = vmatpush2.bf16.msra.mxu0 0
      %1602 = vmatprep.subr.bf16.mxu0 0
      %1603 = vmatpush2.bf16.msra.mxu0 0
      %1604 = vmatprep.subr.bf16.mxu0 0
      %1605 = vmatpush2.bf16.msra.mxu0 0
      %1606 = vmatprep.subr.bf16.mxu0 0
      %1607 = vmatpush2.bf16.msra.mxu0 0
      %1608 = vmatprep.mubr.bf16.mxu0 0
      %1609 = vmatmul.mubr.bf16.gmra.mxu0 %v1553
      %v1610 = vpop.f32.mrf.mxu0
      %v1611 = vadd.f32 %v1378, %v1610
      %v1612 = vpop.f32.mrf.mxu0
      %v1613 = vpop.f32.mrf.mxu0
      %v1614 = vadd.f32 %v1379, %v1613
      %v1615 = vpop.f32.mrf.mxu0
      %1616 = vmatprep.mubr.bf16.mxu0 0
      %1617 = vmatmul.mubr.bf16.gmra.mxu0 %v1556
      %v1618 = vpop.f32.mrf.mxu0
      %v1619 = vadd.f32 %v1380, %v1618
      %v1620 = vpop.f32.mrf.mxu0
      %v1621 = vpop.f32.mrf.mxu0
      %v1622 = vadd.f32 %v1381, %v1621
      %v1623 = vpop.f32.mrf.mxu0
      %1624 = vmatprep.mubr.bf16.mxu0 0
      %1625 = vmatmul.mubr.bf16.gmra.mxu0 %v1559
      %v1626 = vpop.f32.mrf.mxu0
      %v1627 = vadd.f32 %v1382, %v1626
      %v1628 = vpop.f32.mrf.mxu0
      %v1629 = vpop.f32.mrf.mxu0
      %v1630 = vadd.f32 %v1383, %v1629
      %v1631 = vpop.f32.mrf.mxu0
      %1632 = vmatprep.mubr.bf16.mxu0 0
      %1633 = vmatmul.mubr.bf16.gmra.mxu0 %v1562
      %v1634 = vpop.f32.mrf.mxu0
      %v1635 = vadd.f32 %v1384, %v1634
      %v1636 = vpop.f32.mrf.mxu0
      %v1637 = vpop.f32.mrf.mxu0
      %v1638 = vadd.f32 %v1385, %v1637
      %v1639 = vpop.f32.mrf.mxu0
      %1640 = vmatprep.mubr.bf16.mxu0 0
      %1641 = vmatmul.mubr.bf16.gmra.mxu0 %v1565
      %v1642 = vpop.f32.mrf.mxu0
      %v1643 = vadd.f32 %v1386, %v1642
      %v1644 = vpop.f32.mrf.mxu0
      %v1645 = vpop.f32.mrf.mxu0
      %v1646 = vadd.f32 %v1387, %v1645
      %v1647 = vpop.f32.mrf.mxu0
      %1648 = vmatprep.mubr.bf16.mxu0 0
      %1649 = vmatmul.mubr.bf16.gmra.mxu0 %v1568
      %v1650 = vpop.f32.mrf.mxu0
      %v1651 = vadd.f32 %v1388, %v1650
      %v1652 = vpop.f32.mrf.mxu0
      %v1653 = vpop.f32.mrf.mxu0
      %v1654 = vadd.f32 %v1389, %v1653
      %v1655 = vpop.f32.mrf.mxu0
      %1656 = vmatprep.mubr.bf16.mxu0 0
      %1657 = vmatmul.mubr.bf16.gmra.mxu0 %v1571
      %v1658 = vpop.f32.mrf.mxu0
      %v1659 = vadd.f32 %v1390, %v1658
      %v1660 = vpop.f32.mrf.mxu0
      %v1661 = vpop.f32.mrf.mxu0
      %v1662 = vadd.f32 %v1391, %v1661
      %v1663 = vpop.f32.mrf.mxu0
      %1664 = vmatprep.mubr.bf16.mxu0 0
      %1665 = vmatmul.mubr.bf16.gmra.mxu0 %v1574
      %v1666 = vpop.f32.mrf.mxu0
      %v1667 = vadd.f32 %v1392, %v1666
      %v1668 = vpop.f32.mrf.mxu0
      %v1669 = vpop.f32.mrf.mxu0
      %v1670 = vadd.f32 %v1393, %v1669
      %v1671 = vpop.f32.mrf.mxu0
      %1672 = vdwg.mxu0
      %v1673 = vmax.f32 %v1474, %v1482
      %v1674 = vmax.f32 %v1477, %v1485
      %v1675 = vmax.f32 %v1673, %v1490
      %v1676 = vmax.f32 %v1674, %v1493
      %v1677 = vmax.f32 %v1675, %v1498
      %v1678 = vmax.f32 %v1676, %v1501
      %v1679 = vmax.f32 %v1677, %v1506
      %v1680 = vmax.f32 %v1678, %v1509
      %v1681 = vmax.f32 %v1679, %v1514
      %v1682 = vmax.f32 %v1680, %v1517
      %v1683 = vmax.f32 %v1681, %v1522
      %v1684 = vmax.f32 %v1682, %v1525
      %v1685 = vmax.f32 %v1683, %v1530
      %v1686 = vmax.f32 %v1684, %v1533
      %v1687 = vmax.f32 %v1685, %v1686
      %v1688 = vrot.slane %v1687, 4
      %v1689 = vmax.f32 %v1687, %v1688
      %v1690 = vrot.slane %v1689, 2
      %v1691 = vmax.f32 %v1689, %v1690
      %v1692 = vrot.slane %v1691, 1
      %v1693 = vmax.f32 %v1691, %v1692
      %v1694 = vmax.f32 %v1611, %v1619
      %v1695 = vmax.f32 %v1614, %v1622
      %v1696 = vmax.f32 %v1694, %v1627
      %v1697 = vmax.f32 %v1695, %v1630
      %v1698 = vmax.f32 %v1696, %v1635
      %v1699 = vmax.f32 %v1697, %v1638
      %v1700 = vmax.f32 %v1698, %v1643
      %v1701 = vmax.f32 %v1699, %v1646
      %v1702 = vmax.f32 %v1700, %v1651
      %v1703 = vmax.f32 %v1701, %v1654
      %v1704 = vmax.f32 %v1702, %v1659
      %v1705 = vmax.f32 %v1703, %v1662
      %v1706 = vmax.f32 %v1704, %v1667
      %v1707 = vmax.f32 %v1705, %v1670
      %v1708 = vmax.f32 %v1706, %v1707
      %v1709 = vrot.slane %v1708, 4
      %v1710 = vmax.f32 %v1708, %v1709
      %v1711 = vrot.slane %v1710, 2
      %v1712 = vmax.f32 %v1710, %v1711
      %v1713 = vrot.slane %v1712, 1
      %v1714 = vmax.f32 %v1712, %v1713
      %v1715 = vsub.f32 %v1474, %v1693
      %v1716 = vsub.f32 %v1477, %v1693
      %v1717 = vsub.f32 %v1482, %v1693
      %v1718 = vsub.f32 %v1485, %v1693
      %v1719 = vsub.f32 %v1490, %v1693
      %v1720 = vsub.f32 %v1493, %v1693
      %v1721 = vsub.f32 %v1498, %v1693
      %v1722 = vsub.f32 %v1501, %v1693
      %v1723 = vsub.f32 %v1506, %v1693
      %v1724 = vsub.f32 %v1509, %v1693
      %v1725 = vsub.f32 %v1514, %v1693
      %v1726 = vsub.f32 %v1517, %v1693
      %v1727 = vsub.f32 %v1522, %v1693
      %v1728 = vsub.f32 %v1525, %v1693
      %v1729 = vsub.f32 %v1530, %v1693
      %v1730 = vsub.f32 %v1533, %v1693
      %v1731 = vsub.f32 %v1611, %v1714
      %v1732 = vsub.f32 %v1614, %v1714
      %v1733 = vsub.f32 %v1619, %v1714
      %v1734 = vsub.f32 %v1622, %v1714
      %v1735 = vsub.f32 %v1627, %v1714
      %v1736 = vsub.f32 %v1630, %v1714
      %v1737 = vsub.f32 %v1635, %v1714
      %v1738 = vsub.f32 %v1638, %v1714
      %v1739 = vsub.f32 %v1643, %v1714
      %v1740 = vsub.f32 %v1646, %v1714
      %v1741 = vsub.f32 %v1651, %v1714
      %v1742 = vsub.f32 %v1654, %v1714
      %v1743 = vsub.f32 %v1659, %v1714
      %v1744 = vsub.f32 %v1662, %v1714
      %v1745 = vsub.f32 %v1667, %v1714
      %v1746 = vsub.f32 %v1670, %v1714
      %v1747 = vmul.f32 %v1715, 1.442695
      %v1748 = vpow.pop %v1747
      %v1749 = vmul.f32 %v1716, 1.442695
      %v1750 = vpow.pop %v1749
      %v1751 = vmul.f32 %v1717, 1.442695
      %v1752 = vpow.pop %v1751
      %v1753 = vmul.f32 %v1718, 1.442695
      %v1754 = vpow.pop %v1753
      %v1755 = vmul.f32 %v1719, 1.442695
      %v1756 = vpow.pop %v1755
      %v1757 = vmul.f32 %v1720, 1.442695
      %v1758 = vpow.pop %v1757
      %v1759 = vmul.f32 %v1721, 1.442695
      %v1760 = vpow.pop %v1759
      %v1761 = vmul.f32 %v1722, 1.442695
      %v1762 = vpow.pop %v1761
      %v1763 = vmul.f32 %v1723, 1.442695
      %v1764 = vpow.pop %v1763
      %v1765 = vmul.f32 %v1724, 1.442695
      %v1766 = vpow.pop %v1765
      %v1767 = vmul.f32 %v1725, 1.442695
      %v1768 = vpow.pop %v1767
      %v1769 = vmul.f32 %v1726, 1.442695
      %v1770 = vpow.pop %v1769
      %v1771 = vmul.f32 %v1727, 1.442695
      %v1772 = vpow.pop %v1771
      %v1773 = vmul.f32 %v1728, 1.442695
      %v1774 = vpow.pop %v1773
      %v1775 = vmul.f32 %v1729, 1.442695
      %v1776 = vpow.pop %v1775
      %v1777 = vmul.f32 %v1730, 1.442695
      %v1778 = vpow.pop %v1777
      %v1779 = vmul.f32 %v1731, 1.442695
      %v1780 = vpow.pop %v1779
      %v1781 = vmul.f32 %v1732, 1.442695
      %v1782 = vpow.pop %v1781
      %v1783 = vmul.f32 %v1733, 1.442695
      %v1784 = vpow.pop %v1783
      %v1785 = vmul.f32 %v1734, 1.442695
      %v1786 = vpow.pop %v1785
      %v1787 = vmul.f32 %v1735, 1.442695
      %v1788 = vpow.pop %v1787
      %v1789 = vmul.f32 %v1736, 1.442695
      %v1790 = vpow.pop %v1789
      %v1791 = vmul.f32 %v1737, 1.442695
      %v1792 = vpow.pop %v1791
      %v1793 = vmul.f32 %v1738, 1.442695
      %v1794 = vpow.pop %v1793
      %v1795 = vmul.f32 %v1739, 1.442695
      %v1796 = vpow.pop %v1795
      %v1797 = vmul.f32 %v1740, 1.442695
      %v1798 = vpow.pop %v1797
      %v1799 = vmul.f32 %v1741, 1.442695
      %v1800 = vpow.pop %v1799
      %v1801 = vmul.f32 %v1742, 1.442695
      %v1802 = vpow.pop %v1801
      %v1803 = vmul.f32 %v1743, 1.442695
      %v1804 = vpow.pop %v1803
      %v1805 = vmul.f32 %v1744, 1.442695
      %v1806 = vpow.pop %v1805
      %v1807 = vmul.f32 %v1745, 1.442695
      %v1808 = vpow.pop %v1807
      %v1809 = vmul.f32 %v1746, 1.442695
      %v1810 = vpow.pop %v1809
      %v1811 = vadd.f32 %v1748, %v1750
      %v1812 = vadd.f32 %v1811, %v1752
      %v1813 = vadd.f32 %v1812, %v1754
      %v1814 = vadd.f32 %v1813, %v1756
      %v1815 = vadd.f32 %v1814, %v1758
      %v1816 = vadd.f32 %v1815, %v1760
      %v1817 = vadd.f32 %v1816, %v1762
      %v1818 = vadd.f32 %v1817, %v1764
      %v1819 = vadd.f32 %v1818, %v1766
      %v1820 = vadd.f32 %v1819, %v1768
      %v1821 = vadd.f32 %v1820, %v1770
      %v1822 = vadd.f32 %v1821, %v1772
      %v1823 = vadd.f32 %v1822, %v1774
      %v1824 = vadd.f32 %v1823, %v1776
      %v1825 = vadd.f32 %v1824, %v1778
      %v1826 = vrot.slane %v1825, 4
      %v1827 = vadd.f32 %v1825, %v1826
      %v1828 = vrot.slane %v1827, 2
      %v1829 = vadd.f32 %v1827, %v1828
      %v1830 = vrot.slane %v1829, 1
      %v1831 = vadd.f32 %v1829, %v1830
      %v1832 = vadd.f32 %v1780, %v1782
      %v1833 = vadd.f32 %v1832, %v1784
      %v1834 = vadd.f32 %v1833, %v1786
      %v1835 = vadd.f32 %v1834, %v1788
      %v1836 = vadd.f32 %v1835, %v1790
      %v1837 = vadd.f32 %v1836, %v1792
      %v1838 = vadd.f32 %v1837, %v1794
      %v1839 = vadd.f32 %v1838, %v1796
      %v1840 = vadd.f32 %v1839, %v1798
      %v1841 = vadd.f32 %v1840, %v1800
      %v1842 = vadd.f32 %v1841, %v1802
      %v1843 = vadd.f32 %v1842, %v1804
      %v1844 = vadd.f32 %v1843, %v1806
      %v1845 = vadd.f32 %v1844, %v1808
      %v1846 = vadd.f32 %v1845, %v1810
      %v1847 = vrot.slane %v1846, 4
      %v1848 = vadd.f32 %v1846, %v1847
      %v1849 = vrot.slane %v1848, 2
      %v1850 = vadd.f32 %v1848, %v1849
      %v1851 = vrot.slane %v1850, 1
      %v1852 = vadd.f32 %v1850, %v1851
      %v1853 = vpack.c.bf16 %v1247, %v1244
      %v1854 = vpack.c.bf16 %v1255, %v1252
      %v1855 = vpack.c.bf16 %v1750, %v1748
      %v1856 = vpack.c.bf16 %v1754, %v1752
      %v1857 = vpack.c.bf16 %v1758, %v1756
      %v1858 = vpack.c.bf16 %v1762, %v1760
      %v1859 = vpack.c.bf16 %v1766, %v1764
      %v1860 = vpack.c.bf16 %v1770, %v1768
      %v1861 = vpack.c.bf16 %v1774, %v1772
      %v1862 = vpack.c.bf16 %v1778, %v1776
      %v1863 = vpack.c.bf16 %v1782, %v1780
      %v1864 = vpack.c.bf16 %v1786, %v1784
      %v1865 = vpack.c.bf16 %v1790, %v1788
      %v1866 = vpack.c.bf16 %v1794, %v1792
      %v1867 = vpack.c.bf16 %v1798, %v1796
      %v1868 = vpack.c.bf16 %v1802, %v1800
      %v1869 = vpack.c.bf16 %v1806, %v1804
      %v1870 = vpack.c.bf16 %v1810, %v1808
      %1871 = vmatprep.subr.bf16.mxu0 0
      %1872 = vmatpush1.bf16.msra.mxu0 %v1862
      %1873 = vmatprep.subr.bf16.mxu0 0
      %1874 = vmatpush1.bf16.msra.mxu0 %v1861
      %1875 = vmatprep.subr.bf16.mxu0 0
      %1876 = vmatpush1.bf16.msra.mxu0 %v1860
      %1877 = vmatprep.subr.bf16.mxu0 0
      %1878 = vmatpush1.bf16.msra.mxu0 %v1859
      %1879 = vmatprep.subr.bf16.mxu0 0
      %1880 = vmatpush1.bf16.msra.mxu0 %v1858
      %1881 = vmatprep.subr.bf16.mxu0 0
      %1882 = vmatpush1.bf16.msra.mxu0 %v1857
      %1883 = vmatprep.subr.bf16.mxu0 0
      %1884 = vmatpush1.bf16.msra.mxu0 %v1856
      %1885 = vmatprep.subr.bf16.mxu0 0
      %1886 = vmatpush1.bf16.msra.mxu0 %v1855
      %1887 = vmatprep.subr.bf16.mxu0 0
      %1888 = vmatpush2.bf16.msra.mxu0 0
      %1889 = vmatprep.subr.bf16.mxu0 0
      %1890 = vmatpush2.bf16.msra.mxu0 0
      %1891 = vmatprep.subr.bf16.mxu0 0
      %1892 = vmatpush2.bf16.msra.mxu0 0
      %1893 = vmatprep.subr.bf16.mxu0 0
      %1894 = vmatpush2.bf16.msra.mxu0 0
      %1895 = vmatprep.subr.bf16.mxu0 0
      %1896 = vmatpush2.bf16.msra.mxu0 0
      %1897 = vmatprep.subr.bf16.mxu0 0
      %1898 = vmatpush2.bf16.msra.mxu0 0
      %1899 = vmatprep.subr.bf16.mxu0 0
      %1900 = vmatpush2.bf16.msra.mxu0 0
      %1901 = vmatprep.subr.bf16.mxu0 0
      %1902 = vmatpush2.bf16.msra.mxu0 0
      %1903 = vmatprep.mubr.bf16.mxu0 0
      %1904 = vmatmul.mubr.bf16.gmra.mxu0 %v1853
      %v1905 = vpop.f32.mrf.mxu0
      %v1906 = vadd.f32 0.0, %v1905
      %v1907 = vpop.f32.mrf.mxu0
      %v1908 = vpop.f32.mrf.mxu0
      %v1909 = vadd.f32 0.0, %v1908
      %v1910 = vpop.f32.mrf.mxu0
      %1911 = vdwg.mxu0
      %1912 = vmatprep.subr.bf16.mxu0 0
      %1913 = vmatpush1.bf16.msra.mxu0 %v1870
      %1914 = vmatprep.subr.bf16.mxu0 0
      %1915 = vmatpush1.bf16.msra.mxu0 %v1869
      %1916 = vmatprep.subr.bf16.mxu0 0
      %1917 = vmatpush1.bf16.msra.mxu0 %v1868
      %1918 = vmatprep.subr.bf16.mxu0 0
      %1919 = vmatpush1.bf16.msra.mxu0 %v1867
      %1920 = vmatprep.subr.bf16.mxu0 0
      %1921 = vmatpush1.bf16.msra.mxu0 %v1866
      %1922 = vmatprep.subr.bf16.mxu0 0
      %1923 = vmatpush1.bf16.msra.mxu0 %v1865
      %1924 = vmatprep.subr.bf16.mxu0 0
      %1925 = vmatpush1.bf16.msra.mxu0 %v1864
      %1926 = vmatprep.subr.bf16.mxu0 0
      %1927 = vmatpush1.bf16.msra.mxu0 %v1863
      %1928 = vmatprep.subr.bf16.mxu0 0
      %1929 = vmatpush2.bf16.msra.mxu0 0
      %1930 = vmatprep.subr.bf16.mxu0 0
      %1931 = vmatpush2.bf16.msra.mxu0 0
      %1932 = vmatprep.subr.bf16.mxu0 0
      %1933 = vmatpush2.bf16.msra.mxu0 0
      %1934 = vmatprep.subr.bf16.mxu0 0
      %1935 = vmatpush2.bf16.msra.mxu0 0
      %1936 = vmatprep.subr.bf16.mxu0 0
      %1937 = vmatpush2.bf16.msra.mxu0 0
      %1938 = vmatprep.subr.bf16.mxu0 0
      %1939 = vmatpush2.bf16.msra.mxu0 0
      %1940 = vmatprep.subr.bf16.mxu0 0
      %1941 = vmatpush2.bf16.msra.mxu0 0
      %1942 = vmatprep.subr.bf16.mxu0 0
      %1943 = vmatpush2.bf16.msra.mxu0 0
      %1944 = vmatprep.mubr.bf16.mxu0 0
      %1945 = vmatmul.mubr.bf16.gmra.mxu0 %v1854
      %v1946 = vpop.f32.mrf.mxu0
      %v1947 = vadd.f32 0.0, %v1946
      %v1948 = vpop.f32.mrf.mxu0
      %v1949 = vpop.f32.mrf.mxu0
      %v1950 = vadd.f32 0.0, %v1949
      %v1951 = vpop.f32.mrf.mxu0
      %1952 = vdwg.mxu0
      %v1953 = vrcp.pop %v1831
      %v1954 = vrcp.pop %v1852
      %v1955 = vmul.f32 %v1906, %v1953
      %v1956 = vmul.f32 %v1909, %v1953
      %v1957 = vmul.f32 %v1947, %v1954
      %v1958 = vmul.f32 %v1950, %v1954
      %v1959 = vld [vmem:[%s11] sm:$0xf]
      %v1960 = vld [vmem:[%s11 + $0x4] sm:$0xf]
      %v1961 = vld [vmem:[%s11 + $0x8] sm:$0xf]
      %v1962 = vld [vmem:[%s11 + $0xc] sm:$0xf]
      %v1963 = vpack.c.bf16 %v1956, %v1955
      %v1964 = vpack.c.bf16 %v1958, %v1957
      %v1965 = vld [vmem:[%s13] sm:$0xff]
      %v1966 = vld [vmem:[%s13 + $0x8] sm:$0xff]
      %v1967 = vld [vmem:[%s13 + $0x10] sm:$0xff]
      %v1968 = vld [vmem:[%s13 + $0x18] sm:$0xff]
      %1970 = vset.pattern.permute.xlu0 0
      %1971 = vperm.xlu0 %1970, %v1965
      %v1972 = vpop.permute.xlu0 %1971
      %1975 = vset.pattern.permute.xlu0 0
      %1976 = vperm.xlu0 %1975, %v1966
      %v1977 = vpop.permute.xlu0 %1976
      %1980 = vset.pattern.permute.xlu0 0
      %1981 = vperm.xlu0 %1980, %v1967
      %v1982 = vpop.permute.xlu0 %1981
      %1985 = vset.pattern.permute.xlu0 0
      %1986 = vperm.xlu0 %1985, %v1968
      %v1987 = vpop.permute.xlu0 %1986
      %v1993 = vunpack.c.l.b16 %v1959
      %v1994 = vunpack.c.l.b16 %v1960
      %v1995 = vunpack.c.l.b16 %v1961
      %v1996 = vunpack.c.l.b16 %v1962
      %v1997 = vpack.c.b16 %v1994, %v1993
      %v1998 = vpack.c.b16 %v1996, %v1995
      %v2000 = vsel %vm1158, %v1997, 0
      %v2003 = vsel %vm1158, %v1998, 0
      %2005 = vmatprep.subr.bf16.mxu0 0
      %2006 = vmatpush1.bf16.msra.mxu0 0
      %2007 = vmatprep.subr.bf16.mxu0 0
      %2008 = vmatpush1.bf16.msra.mxu0 0
      %2009 = vmatprep.subr.bf16.mxu0 0
      %2010 = vmatpush1.bf16.msra.mxu0 0
      %2011 = vmatprep.subr.bf16.mxu0 0
      %2012 = vmatpush1.bf16.msra.mxu0 0
      %2013 = vmatprep.subr.bf16.mxu0 0
      %2014 = vmatpush1.bf16.msra.mxu0 0
      %2015 = vmatprep.subr.bf16.mxu0 0
      %2016 = vmatpush1.bf16.msra.mxu0 0
      %2017 = vmatprep.subr.bf16.mxu0 0
      %2018 = vmatpush1.bf16.msra.mxu0 %v1964
      %2019 = vmatprep.subr.bf16.mxu0 0
      %2020 = vmatpush1.bf16.msra.mxu0 %v1963
      %2021 = vmatprep.subr.bf16.mxu0 0
      %2022 = vmatpush2.bf16.msra.mxu0 0
      %2023 = vmatprep.subr.bf16.mxu0 0
      %2024 = vmatpush2.bf16.msra.mxu0 0
      %2025 = vmatprep.subr.bf16.mxu0 0
      %2026 = vmatpush2.bf16.msra.mxu0 0
      %2027 = vmatprep.subr.bf16.mxu0 0
      %2028 = vmatpush2.bf16.msra.mxu0 0
      %2029 = vmatprep.subr.bf16.mxu0 0
      %2030 = vmatpush2.bf16.msra.mxu0 0
      %2031 = vmatprep.subr.bf16.mxu0 0
      %2032 = vmatpush2.bf16.msra.mxu0 0
      %2033 = vmatprep.subr.bf16.mxu0 0
      %2034 = vmatpush2.bf16.msra.mxu0 0
      %2035 = vmatprep.subr.bf16.mxu0 0
      %2036 = vmatpush2.bf16.msra.mxu0 0
      %2037 = vmatprep.mubr.bf16.mxu0 0
      %2038 = vmatmul.mubr.bf16.gmra.mxu0 %v2000
      %v2039 = vpop.f32.mrf.mxu0
      %v2040 = vadd.f32 %v1972, %v2039
      %v2041 = vpop.f32.mrf.mxu0
      %v2042 = vpop.f32.mrf.mxu0
      %v2043 = vadd.f32 %v1977, %v2042
      %v2044 = vpop.f32.mrf.mxu0
      %2045 = vmatprep.mubr.bf16.mxu0 0
      %2046 = vmatmul.mubr.bf16.gmra.mxu0 %v2003
      %v2047 = vpop.f32.mrf.mxu0
      %v2048 = vadd.f32 %v1982, %v2047
      %v2049 = vpop.f32.mrf.mxu0
      %v2050 = vpop.f32.mrf.mxu0
      %v2051 = vadd.f32 %v1987, %v2050
      %v2052 = vpop.f32.mrf.mxu0
      %2053 = vdwg.mxu0
      %v2054 = vadd.f32 %v1038, %v2040
      %v2055 = vadd.f32 %v1039, %v2043
      %v2056 = vadd.f32 %v1040, %v2048
      %v2057 = vadd.f32 %v1041, %v2051
      %v2058 = vld [vmem:[%s15] sm:$0xff]
      %v2059 = vld [vmem:[%s15 + $0x8] sm:$0xff]
      %v2060 = vld [vmem:[%s15 + $0x10] sm:$0xff]
      %v2061 = vld [vmem:[%s15 + $0x18] sm:$0xff]
      %v2062 = vld [vmem:[%s17] sm:$0xff]
      %v2063 = vld [vmem:[%s17 + $0x8] sm:$0xff]
      %v2064 = vld [vmem:[%s17 + $0x10] sm:$0xff]
      %v2065 = vld [vmem:[%s17 + $0x18] sm:$0xff]
      %v2066 = vadd.f32 %v2054, %v2055
      %v2067 = vadd.f32 %v2066, %v2056
      %v2068 = vadd.f32 %v2067, %v2057
      %v2069 = vrot.slane %v2068, 4
      %v2070 = vadd.f32 %v2068, %v2069
      %v2071 = vrot.slane %v2070, 2
      %v2072 = vadd.f32 %v2070, %v2071
      %v2073 = vrot.slane %v2072, 1
      %v2074 = vadd.f32 %v2072, %v2073
      %v2075 = vrcp.pop 32.0
      %v2076 = vmul.f32 %v2074, %v2075
      %v2077 = vsub.f32 %v2054, %v2076
      %v2078 = vsub.f32 %v2055, %v2076
      %v2079 = vsub.f32 %v2056, %v2076
      %v2080 = vsub.f32 %v2057, %v2076
      %v2081 = vmul.f32 %v2077, %v2077
      %v2082 = vmul.f32 %v2078, %v2078
      %v2083 = vmul.f32 %v2079, %v2079
      %v2084 = vmul.f32 %v2080, %v2080
      %v2085 = vadd.f32 %v2081, %v2082
      %v2086 = vadd.f32 %v2085, %v2083
      %v2087 = vadd.f32 %v2086, %v2084
      %v2088 = vrot.slane %v2087, 4
      %v2089 = vadd.f32 %v2087, %v2088
      %v2090 = vrot.slane %v2089, 2
      %v2091 = vadd.f32 %v2089, %v2090
      %v2092 = vrot.slane %v2091, 1
      %v2093 = vadd.f32 %v2091, %v2092
      %v2094 = vmul.f32 %v2093, %v2075
      %v2095 = vadd.f32 %v2094, 1e-05
      %v2096 = vrsqrt.pop %v2095
      %v2097 = vmul.f32 %v2077, %v2096
      %v2098 = vmul.f32 %v2078, %v2096
      %v2099 = vmul.f32 %v2079, %v2096
      %v2100 = vmul.f32 %v2080, %v2096
      %2102 = vset.pattern.permute.xlu0 0
      %2103 = vperm.xlu0 %2102, %v2058
      %v2104 = vpop.permute.xlu0 %2103
      %2107 = vset.pattern.permute.xlu0 0
      %2108 = vperm.xlu0 %2107, %v2059
      %v2109 = vpop.permute.xlu0 %2108
      %2112 = vset.pattern.permute.xlu0 0
      %2113 = vperm.xlu0 %2112, %v2060
      %v2114 = vpop.permute.xlu0 %2113
      %2117 = vset.pattern.permute.xlu0 0
      %2118 = vperm.xlu0 %2117, %v2061
      %v2119 = vpop.permute.xlu0 %2118
      %v2121 = vmul.f32 %v2097, %v2104
      %v2122 = vmul.f32 %v2098, %v2109
      %v2123 = vmul.f32 %v2099, %v2114
      %v2124 = vmul.f32 %v2100, %v2119
      %2126 = vset.pattern.permute.xlu0 0
      %2127 = vperm.xlu0 %2126, %v2062
      %v2128 = vpop.permute.xlu0 %2127
      %2131 = vset.pattern.permute.xlu0 0
      %2132 = vperm.xlu0 %2131, %v2063
      %v2133 = vpop.permute.xlu0 %2132
      %2136 = vset.pattern.permute.xlu0 0
      %2137 = vperm.xlu0 %2136, %v2064
      %v2138 = vpop.permute.xlu0 %2137
      %2141 = vset.pattern.permute.xlu0 0
      %2142 = vperm.xlu0 %2141, %v2065
      %v2143 = vpop.permute.xlu0 %2142
      %v2145 = vadd.f32 %v2121, %v2128
      %v2146 = vadd.f32 %v2122, %v2133
      %v2147 = vadd.f32 %v2123, %v2138
      %v2148 = vadd.f32 %v2124, %v2143
      %v2149 = vld [vmem:[%s19] sm:$0xf]
      %v2150 = vld [vmem:[%s19 + $0x4] sm:$0xf]
      %v2151 = vld [vmem:[%s19 + $0x8] sm:$0xf]
      %v2152 = vld [vmem:[%s19 + $0xc] sm:$0xf]
      %v2153 = vld [vmem:[%s19 + $0x10] sm:$0xf]
      %v2154 = vld [vmem:[%s19 + $0x14] sm:$0xf]
      %v2155 = vld [vmem:[%s19 + $0x18] sm:$0xf]
      %v2156 = vld [vmem:[%s19 + $0x1c] sm:$0xf]
      %v2157 = vpack.c.bf16 %v2146, %v2145
      %v2158 = vpack.c.bf16 %v2148, %v2147
      %v2159 = vld [vmem:[%s21] sm:$0xff]
      %v2160 = vld [vmem:[%s21 + $0x8] sm:$0xff]
      %v2161 = vld [vmem:[%s21 + $0x10] sm:$0xff]
      %v2162 = vld [vmem:[%s21 + $0x18] sm:$0xff]
      %v2163 = vld [vmem:[%s21 + $0x20] sm:$0xff]
      %v2164 = vld [vmem:[%s21 + $0x28] sm:$0xff]
      %v2165 = vld [vmem:[%s21 + $0x30] sm:$0xff]
      %v2166 = vld [vmem:[%s21 + $0x38] sm:$0xff]
      %2168 = vset.pattern.permute.xlu0 0
      %2169 = vperm.xlu0 %2168, %v2159
      %v2170 = vpop.permute.xlu0 %2169
      %2173 = vset.pattern.permute.xlu0 0
      %2174 = vperm.xlu0 %2173, %v2160
      %v2175 = vpop.permute.xlu0 %2174
      %2178 = vset.pattern.permute.xlu0 0
      %2179 = vperm.xlu0 %2178, %v2161
      %v2180 = vpop.permute.xlu0 %2179
      %2183 = vset.pattern.permute.xlu0 0
      %2184 = vperm.xlu0 %2183, %v2162
      %v2185 = vpop.permute.xlu0 %2184
      %2188 = vset.pattern.permute.xlu0 0
      %2189 = vperm.xlu0 %2188, %v2163
      %v2190 = vpop.permute.xlu0 %2189
      %2193 = vset.pattern.permute.xlu0 0
      %2194 = vperm.xlu0 %2193, %v2164
      %v2195 = vpop.permute.xlu0 %2194
      %2198 = vset.pattern.permute.xlu0 0
      %2199 = vperm.xlu0 %2198, %v2165
      %v2200 = vpop.permute.xlu0 %2199
      %2203 = vset.pattern.permute.xlu0 0
      %2204 = vperm.xlu0 %2203, %v2166
      %v2205 = vpop.permute.xlu0 %2204
      %v2215 = vunpack.c.l.b16 %v2149
      %v2216 = vunpack.c.l.b16 %v2150
      %v2217 = vunpack.c.l.b16 %v2151
      %v2218 = vunpack.c.l.b16 %v2152
      %v2219 = vunpack.c.l.b16 %v2153
      %v2220 = vunpack.c.l.b16 %v2154
      %v2221 = vunpack.c.l.b16 %v2155
      %v2222 = vunpack.c.l.b16 %v2156
      %v2223 = vpack.c.b16 %v2216, %v2215
      %v2224 = vpack.c.b16 %v2218, %v2217
      %v2225 = vpack.c.b16 %v2220, %v2219
      %v2226 = vpack.c.b16 %v2222, %v2221
      %v2228 = vsel %vm1158, %v2223, 0
      %v2231 = vsel %vm1158, %v2224, 0
      %v2234 = vsel %vm1158, %v2225, 0
      %v2237 = vsel %vm1158, %v2226, 0
      %2239 = vmatprep.subr.bf16.mxu0 0
      %2240 = vmatpush1.bf16.msra.mxu0 0
      %2241 = vmatprep.subr.bf16.mxu0 0
      %2242 = vmatpush1.bf16.msra.mxu0 0
      %2243 = vmatprep.subr.bf16.mxu0 0
      %2244 = vmatpush1.bf16.msra.mxu0 0
      %2245 = vmatprep.subr.bf16.mxu0 0
      %2246 = vmatpush1.bf16.msra.mxu0 0
      %2247 = vmatprep.subr.bf16.mxu0 0
      %2248 = vmatpush1.bf16.msra.mxu0 0
      %2249 = vmatprep.subr.bf16.mxu0 0
      %2250 = vmatpush1.bf16.msra.mxu0 0
      %2251 = vmatprep.subr.bf16.mxu0 0
      %2252 = vmatpush1.bf16.msra.mxu0 %v2158
      %2253 = vmatprep.subr.bf16.mxu0 0
      %2254 = vmatpush1.bf16.msra.mxu0 %v2157
      %2255 = vmatprep.subr.bf16.mxu0 0
      %2256 = vmatpush2.bf16.msra.mxu0 0
      %2257 = vmatprep.subr.bf16.mxu0 0
      %2258 = vmatpush2.bf16.msra.mxu0 0
      %2259 = vmatprep.subr.bf16.mxu0 0
      %2260 = vmatpush2.bf16.msra.mxu0 0
      %2261 = vmatprep.subr.bf16.mxu0 0
      %2262 = vmatpush2.bf16.msra.mxu0 0
      %2263 = vmatprep.subr.bf16.mxu0 0
      %2264 = vmatpush2.bf16.msra.mxu0 0
      %2265 = vmatprep.subr.bf16.mxu0 0
      %2266 = vmatpush2.bf16.msra.mxu0 0
      %2267 = vmatprep.subr.bf16.mxu0 0
      %2268 = vmatpush2.bf16.msra.mxu0 0
      %2269 = vmatprep.subr.bf16.mxu0 0
      %2270 = vmatpush2.bf16.msra.mxu0 0
      %2271 = vmatprep.mubr.bf16.mxu0 0
      %2272 = vmatmul.mubr.bf16.gmra.mxu0 %v2228
      %v2273 = vpop.f32.mrf.mxu0
      %v2274 = vadd.f32 %v2170, %v2273
      %v2275 = vpop.f32.mrf.mxu0
      %v2276 = vpop.f32.mrf.mxu0
      %v2277 = vadd.f32 %v2175, %v2276
      %v2278 = vpop.f32.mrf.mxu0
      %2279 = vmatprep.mubr.bf16.mxu0 0
      %2280 = vmatmul.mubr.bf16.gmra.mxu0 %v2231
      %v2281 = vpop.f32.mrf.mxu0
      %v2282 = vadd.f32 %v2180, %v2281
      %v2283 = vpop.f32.mrf.mxu0
      %v2284 = vpop.f32.mrf.mxu0
      %v2285 = vadd.f32 %v2185, %v2284
      %v2286 = vpop.f32.mrf.mxu0
      %2287 = vmatprep.mubr.bf16.mxu0 0
      %2288 = vmatmul.mubr.bf16.gmra.mxu0 %v2234
      %v2289 = vpop.f32.mrf.mxu0
      %v2290 = vadd.f32 %v2190, %v2289
      %v2291 = vpop.f32.mrf.mxu0
      %v2292 = vpop.f32.mrf.mxu0
      %v2293 = vadd.f32 %v2195, %v2292
      %v2294 = vpop.f32.mrf.mxu0
      %2295 = vmatprep.mubr.bf16.mxu0 0
      %2296 = vmatmul.mubr.bf16.gmra.mxu0 %v2237
      %v2297 = vpop.f32.mrf.mxu0
      %v2298 = vadd.f32 %v2200, %v2297
      %v2299 = vpop.f32.mrf.mxu0
      %v2300 = vpop.f32.mrf.mxu0
      %v2301 = vadd.f32 %v2205, %v2300
      %v2302 = vpop.f32.mrf.mxu0
      %2303 = vdwg.mxu0
      %v2304 = vmul.f32 %v2274, %v2274
      %v2305 = vmul.f32 %v2277, %v2277
      %v2306 = vmul.f32 %v2282, %v2282
      %v2307 = vmul.f32 %v2285, %v2285
      %v2308 = vmul.f32 %v2290, %v2290
      %v2309 = vmul.f32 %v2293, %v2293
      %v2310 = vmul.f32 %v2298, %v2298
      %v2311 = vmul.f32 %v2301, %v2301
      %v2312 = vmul.f32 %v2274, %v2304
      %v2313 = vmul.f32 %v2277, %v2305
      %v2314 = vmul.f32 %v2282, %v2306
      %v2315 = vmul.f32 %v2285, %v2307
      %v2316 = vmul.f32 %v2290, %v2308
      %v2317 = vmul.f32 %v2293, %v2309
      %v2318 = vmul.f32 %v2298, %v2310
      %v2319 = vmul.f32 %v2301, %v2311
      %v2320 = vmul.f32 %v2312, 0.044715
      %v2321 = vmul.f32 %v2313, 0.044715
      %v2322 = vmul.f32 %v2314, 0.044715
      %v2323 = vmul.f32 %v2315, 0.044715
      %v2324 = vmul.f32 %v2316, 0.044715
      %v2325 = vmul.f32 %v2317, 0.044715
      %v2326 = vmul.f32 %v2318, 0.044715
      %v2327 = vmul.f32 %v2319, 0.044715
      %v2328 = vadd.f32 %v2274, %v2320
      %v2329 = vadd.f32 %v2277, %v2321
      %v2330 = vadd.f32 %v2282, %v2322
      %v2331 = vadd.f32 %v2285, %v2323
      %v2332 = vadd.f32 %v2290, %v2324
      %v2333 = vadd.f32 %v2293, %v2325
      %v2334 = vadd.f32 %v2298, %v2326
      %v2335 = vadd.f32 %v2301, %v2327
      %v2336 = vmul.f32 %v2328, 0.7978846
      %v2337 = vmul.f32 %v2329, 0.7978846
      %v2338 = vmul.f32 %v2330, 0.7978846
      %v2339 = vmul.f32 %v2331, 0.7978846
      %v2340 = vmul.f32 %v2332, 0.7978846
      %v2341 = vmul.f32 %v2333, 0.7978846
      %v2342 = vmul.f32 %v2334, 0.7978846
      %v2343 = vmul.f32 %v2335, 0.7978846
      %v2344 = vtanh.pop %v2336
      %v2345 = vtanh.pop %v2337
      %v2346 = vtanh.pop %v2338
      %v2347 = vtanh.pop %v2339
      %v2348 = vtanh.pop %v2340
      %v2349 = vtanh.pop %v2341
      %v2350 = vtanh.pop %v2342
      %v2351 = vtanh.pop %v2343
      %v2352 = vadd.f32 %v2344, 1.0
      %v2353 = vadd.f32 %v2345, 1.0
      %v2354 = vadd.f32 %v2346, 1.0
      %v2355 = vadd.f32 %v2347, 1.0
      %v2356 = vadd.f32 %v2348, 1.0
      %v2357 = vadd.f32 %v2349, 1.0
      %v2358 = vadd.f32 %v2350, 1.0
      %v2359 = vadd.f32 %v2351, 1.0
      %v2360 = vmul.f32 %v2352, 0.5
      %v2361 = vmul.f32 %v2353, 0.5
      %v2362 = vmul.f32 %v2354, 0.5
      %v2363 = vmul.f32 %v2355, 0.5
      %v2364 = vmul.f32 %v2356, 0.5
      %v2365 = vmul.f32 %v2357, 0.5
      %v2366 = vmul.f32 %v2358, 0.5
      %v2367 = vmul.f32 %v2359, 0.5
      %v2368 = vmul.f32 %v2274, %v2360
      %v2369 = vmul.f32 %v2277, %v2361
      %v2370 = vmul.f32 %v2282, %v2362
      %v2371 = vmul.f32 %v2285, %v2363
      %v2372 = vmul.f32 %v2290, %v2364
      %v2373 = vmul.f32 %v2293, %v2365
      %v2374 = vmul.f32 %v2298, %v2366
      %v2375 = vmul.f32 %v2301, %v2367
      %v2376 = vld [vmem:[%s23] sm:$0xf]
      %v2377 = vld [vmem:[%s23 + $0x4] sm:$0xf]
      %v2378 = vld [vmem:[%s23 + $0x8] sm:$0xf]
      %v2379 = vld [vmem:[%s23 + $0xc] sm:$0xf]
      %v2380 = vpack.c.bf16 %v2369, %v2368
      %v2381 = vpack.c.bf16 %v2371, %v2370
      %v2382 = vpack.c.bf16 %v2373, %v2372
      %v2383 = vpack.c.bf16 %v2375, %v2374
      %v2384 = vld [vmem:[%s25] sm:$0xff]
      %v2385 = vld [vmem:[%s25 + $0x8] sm:$0xff]
      %v2386 = vld [vmem:[%s25 + $0x10] sm:$0xff]
      %v2387 = vld [vmem:[%s25 + $0x18] sm:$0xff]
      %2389 = vset.pattern.permute.xlu0 0
      %2390 = vperm.xlu0 %2389, %v2384
      %v2391 = vpop.permute.xlu0 %2390
      %2394 = vset.pattern.permute.xlu0 0
      %2395 = vperm.xlu0 %2394, %v2385
      %v2396 = vpop.permute.xlu0 %2395
      %2399 = vset.pattern.permute.xlu0 0
      %2400 = vperm.xlu0 %2399, %v2386
      %v2401 = vpop.permute.xlu0 %2400
      %2404 = vset.pattern.permute.xlu0 0
      %2405 = vperm.xlu0 %2404, %v2387
      %v2406 = vpop.permute.xlu0 %2405
      %v2412 = vunpack.c.l.b16 %v2376
      %v2413 = vunpack.c.l.b16 %v2377
      %v2414 = vunpack.c.l.b16 %v2378
      %v2415 = vunpack.c.l.b16 %v2379
      %v2416 = vpack.c.b16 %v2413, %v2412
      %v2417 = vpack.c.b16 %v2415, %v2414
      %vm2418 = vcmask 523264
      %v2420 = vsel %vm2418, %v2416, 0
      %v2423 = vsel %vm2418, %v2417, 0
      %2425 = vmatprep.subr.bf16.mxu0 0
      %2426 = vmatpush1.bf16.msra.mxu0 0
      %2427 = vmatprep.subr.bf16.mxu0 0
      %2428 = vmatpush1.bf16.msra.mxu0 0
      %2429 = vmatprep.subr.bf16.mxu0 0
      %2430 = vmatpush1.bf16.msra.mxu0 0
      %2431 = vmatprep.subr.bf16.mxu0 0
      %2432 = vmatpush1.bf16.msra.mxu0 0
      %2433 = vmatprep.subr.bf16.mxu0 0
      %2434 = vmatpush1.bf16.msra.mxu0 %v2383
      %2435 = vmatprep.subr.bf16.mxu0 0
      %2436 = vmatpush1.bf16.msra.mxu0 %v2382
      %2437 = vmatprep.subr.bf16.mxu0 0
      %2438 = vmatpush1.bf16.msra.mxu0 %v2381
      %2439 = vmatprep.subr.bf16.mxu0 0
      %2440 = vmatpush1.bf16.msra.mxu0 %v2380
      %2441 = vmatprep.subr.bf16.mxu0 0
      %2442 = vmatpush2.bf16.msra.mxu0 0
      %2443 = vmatprep.subr.bf16.mxu0 0
      %2444 = vmatpush2.bf16.msra.mxu0 0
      %2445 = vmatprep.subr.bf16.mxu0 0
      %2446 = vmatpush2.bf16.msra.mxu0 0
      %2447 = vmatprep.subr.bf16.mxu0 0
      %2448 = vmatpush2.bf16.msra.mxu0 0
      %2449 = vmatprep.subr.bf16.mxu0 0
      %2450 = vmatpush2.bf16.msra.mxu0 0
      %2451 = vmatprep.subr.bf16.mxu0 0
      %2452 = vmatpush2.bf16.msra.mxu0 0
      %2453 = vmatprep.subr.bf16.mxu0 0
      %2454 = vmatpush2.bf16.msra.mxu0 0
      %2455 = vmatprep.subr.bf16.mxu0 0
      %2456 = vmatpush2.bf16.msra.mxu0 0
      %2457 = vmatprep.mubr.bf16.mxu0 0
      %2458 = vmatmul.mubr.bf16.gmra.mxu0 %v2420
      %v2459 = vpop.f32.mrf.mxu0
      %v2460 = vadd.f32 %v2391, %v2459
      %v2461 = vpop.f32.mrf.mxu0
      %v2462 = vpop.f32.mrf.mxu0
      %v2463 = vadd.f32 %v2396, %v2462
      %v2464 = vpop.f32.mrf.mxu0
      %2465 = vmatprep.mubr.bf16.mxu0 0
      %2466 = vmatmul.mubr.bf16.gmra.mxu0 %v2423
      %v2467 = vpop.f32.mrf.mxu0
      %v2468 = vadd.f32 %v2401, %v2467
      %v2469 = vpop.f32.mrf.mxu0
      %v2470 = vpop.f32.mrf.mxu0
      %v2471 = vadd.f32 %v2406, %v2470
      %v2472 = vpop.f32.mrf.mxu0
      %2473 = vdwg.mxu0
      %v2474 = vadd.f32 %v2145, %v2460
      %v2475 = vadd.f32 %v2146, %v2463
      %v2476 = vadd.f32 %v2147, %v2468
      %v2477 = vadd.f32 %v2148, %v2471
      %v2478 = vld [vmem:[%s27] sm:$0xff]
      %v2479 = vld [vmem:[%s27 + $0x8] sm:$0xff]
      %v2480 = vld [vmem:[%s27 + $0x10] sm:$0xff]
      %v2481 = vld [vmem:[%s27 + $0x18] sm:$0xff]
      %v2482 = vld [vmem:[%s29] sm:$0xff]
      %v2483 = vld [vmem:[%s29 + $0x8] sm:$0xff]
      %v2484 = vld [vmem:[%s29 + $0x10] sm:$0xff]
      %v2485 = vld [vmem:[%s29 + $0x18] sm:$0xff]
      %v2486 = vadd.f32 %v2474, %v2475
      %v2487 = vadd.f32 %v2486, %v2476
      %v2488 = vadd.f32 %v2487, %v2477
      %v2489 = vrot.slane %v2488, 4
      %v2490 = vadd.f32 %v2488, %v2489
      %v2491 = vrot.slane %v2490, 2
      %v2492 = vadd.f32 %v2490, %v2491
      %v2493 = vrot.slane %v2492, 1
      %v2494 = vadd.f32 %v2492, %v2493
      %v2495 = vmul.f32 %v2494, %v2075
      %v2496 = vsub.f32 %v2474, %v2495
      %v2497 = vsub.f32 %v2475, %v2495
      %v2498 = vsub.f32 %v2476, %v2495
      %v2499 = vsub.f32 %v2477, %v2495
      %v2500 = vmul.f32 %v2496, %v2496
      %v2501 = vmul.f32 %v2497, %v2497
      %v2502 = vmul.f32 %v2498, %v2498
      %v2503 = vmul.f32 %v2499, %v2499
      %v2504 = vadd.f32 %v2500, %v2501
      %v2505 = vadd.f32 %v2504, %v2502
      %v2506 = vadd.f32 %v2505, %v2503
      %v2507 = vrot.slane %v2506, 4
      %v2508 = vadd.f32 %v2506, %v2507
      %v2509 = vrot.slane %v2508, 2
      %v2510 = vadd.f32 %v2508, %v2509
      %v2511 = vrot.slane %v2510, 1
      %v2512 = vadd.f32 %v2510, %v2511
      %v2513 = vmul.f32 %v2512, %v2075
      %v2514 = vadd.f32 %v2513, 1e-05
      %v2515 = vrsqrt.pop %v2514
      %v2516 = vmul.f32 %v2496, %v2515
      %v2517 = vmul.f32 %v2497, %v2515
      %v2518 = vmul.f32 %v2498, %v2515
      %v2519 = vmul.f32 %v2499, %v2515
      %2521 = vset.pattern.permute.xlu0 0
      %2522 = vperm.xlu0 %2521, %v2478
      %v2523 = vpop.permute.xlu0 %2522
      %2526 = vset.pattern.permute.xlu0 0
      %2527 = vperm.xlu0 %2526, %v2479
      %v2528 = vpop.permute.xlu0 %2527
      %2531 = vset.pattern.permute.xlu0 0
      %2532 = vperm.xlu0 %2531, %v2480
      %v2533 = vpop.permute.xlu0 %2532
      %2536 = vset.pattern.permute.xlu0 0
      %2537 = vperm.xlu0 %2536, %v2481
      %v2538 = vpop.permute.xlu0 %2537
      %v2540 = vmul.f32 %v2516, %v2523
      %v2541 = vmul.f32 %v2517, %v2528
      %v2542 = vmul.f32 %v2518, %v2533
      %v2543 = vmul.f32 %v2519, %v2538
      %2545 = vset.pattern.permute.xlu0 0
      %2546 = vperm.xlu0 %2545, %v2482
      %v2547 = vpop.permute.xlu0 %2546
      %2550 = vset.pattern.permute.xlu0 0
      %2551 = vperm.xlu0 %2550, %v2483
      %v2552 = vpop.permute.xlu0 %2551
      %2555 = vset.pattern.permute.xlu0 0
      %2556 = vperm.xlu0 %2555, %v2484
      %v2557 = vpop.permute.xlu0 %2556
      %2560 = vset.pattern.permute.xlu0 0
      %2561 = vperm.xlu0 %2560, %v2485
      %v2562 = vpop.permute.xlu0 %2561
      %v2564 = vadd.f32 %v2540, %v2547
      %v2565 = vadd.f32 %v2541, %v2552
      %v2566 = vadd.f32 %v2542, %v2557
      %v2567 = vadd.f32 %v2543, %v2562
      %2568 = vst [vmem:[%s1031] sm:$0xff] %v2564
      %2569 = vst [vmem:[%s1031 + $0x8] sm:$0xff] %v2565
      %2570 = vst [vmem:[%s1031 + $0x10] sm:$0xff] %v2566
      %2571 = vst [vmem:[%s1031 + $0x18] sm:$0xff] %v2567
      %v2572 = vld [vmem:[%s1022] sm:$0xff]
      %v2573 = vld [vmem:[%s1022 + $0x8] sm:$0xff]
      %v2574 = vld [vmem:[%s1022 + $0x10] sm:$0xff]
      %v2575 = vld [vmem:[%s1022 + $0x18] sm:$0xff]
      %v2576 = vld [vmem:[%s1022 + $0x20] sm:$0xff]
      %v2577 = vld [vmem:[%s1022 + $0x28] sm:$0xff]
      %v2578 = vld [vmem:[%s1026] sm:$0xff]
      %v2579 = vld [vmem:[%s31] sm:$0xf]
      %v2580 = vld [vmem:[%s31 + $0x4] sm:$0xf]
      %v2581 = vld [vmem:[%s31 + $0x8] sm:$0xf]
      %v2582 = vld [vmem:[%s31 + $0xc] sm:$0xf]
      %v2583 = vld [vmem:[%s31 + $0x10] sm:$0xf]
      %v2584 = vld [vmem:[%s31 + $0x14] sm:$0xf]
      %v2585 = vpack.c.bf16 %v2578, %v2578
      %v2592 = vunpack.c.l.b16 %v2579
      %v2593 = vunpack.c.l.b16 %v2580
      %v2594 = vunpack.c.l.b16 %v2581
      %v2595 = vunpack.c.l.b16 %v2582
      %v2596 = vunpack.c.l.b16 %v2583
      %v2597 = vunpack.c.l.b16 %v2584
      %v2598 = vpack.c.b16 %v2593, %v2592
      %v2599 = vpack.c.b16 %v2595, %v2594
      %v2600 = vpack.c.b16 %v2597, %v2596
      %vm2601 = vcmask 64512
      %v2603 = vsel %vm2601, %v2598, 0
      %v2606 = vsel %vm2601, %v2599, 0
      %v2609 = vsel %vm2601, %v2600, 0
      %vm2611 = vcmask 1043456
      %v2613 = vsel %vm2611, %v2585, 0
      %2615 = vmatprep.subr.bf16.mxu0 0
      %2616 = vmatpush1.bf16.msra.mxu0 0
      %2617 = vmatprep.subr.bf16.mxu0 0
      %2618 = vmatpush1.bf16.msra.mxu0 0
      %2619 = vmatprep.subr.bf16.mxu0 0
      %2620 = vmatpush1.bf16.msra.mxu0 0
      %2621 = vmatprep.subr.bf16.mxu0 0
      %2622 = vmatpush1.bf16.msra.mxu0 0
      %2623 = vmatprep.subr.bf16.mxu0 0
      %2624 = vmatpush1.bf16.msra.mxu0 0
      %2625 = vmatprep.subr.bf16.mxu0 0
      %2626 = vmatpush1.bf16.msra.mxu0 0
      %2627 = vmatprep.subr.bf16.mxu0 0
      %2628 = vmatpush1.bf16.msra.mxu0 0
      %2629 = vmatprep.subr.bf16.mxu0 0
      %2630 = vmatpush1.bf16.msra.mxu0 %v2613
      %2631 = vmatprep.subr.bf16.mxu0 0
      %2632 = vmatpush2.bf16.msra.mxu0 0
      %2633 = vmatprep.subr.bf16.mxu0 0
      %2634 = vmatpush2.bf16.msra.mxu0 0
      %2635 = vmatprep.subr.bf16.mxu0 0
      %2636 = vmatpush2.bf16.msra.mxu0 0
      %2637 = vmatprep.subr.bf16.mxu0 0
      %2638 = vmatpush2.bf16.msra.mxu0 0
      %2639 = vmatprep.subr.bf16.mxu0 0
      %2640 = vmatpush2.bf16.msra.mxu0 0
      %2641 = vmatprep.subr.bf16.mxu0 0
      %2642 = vmatpush2.bf16.msra.mxu0 0
      %2643 = vmatprep.subr.bf16.mxu0 0
      %2644 = vmatpush2.bf16.msra.mxu0 0
      %2645 = vmatprep.subr.bf16.mxu0 0
      %2646 = vmatpush2.bf16.msra.mxu0 0
      %2647 = vmatprep.mubr.bf16.mxu0 0
      %2648 = vmatmul.mubr.bf16.gmra.mxu0 %v2603
      %v2649 = vpop.f32.mrf.mxu0
      %v2650 = vadd.f32 0.0, %v2649
      %v2651 = vpop.f32.mrf.mxu0
      %v2652 = vpop.f32.mrf.mxu0
      %v2653 = vadd.f32 0.0, %v2652
      %v2654 = vpop.f32.mrf.mxu0
      %2655 = vmatprep.mubr.bf16.mxu0 0
      %2656 = vmatmul.mubr.bf16.gmra.mxu0 %v2606
      %v2657 = vpop.f32.mrf.mxu0
      %v2658 = vadd.f32 0.0, %v2657
      %v2659 = vpop.f32.mrf.mxu0
      %v2660 = vpop.f32.mrf.mxu0
      %v2661 = vadd.f32 0.0, %v2660
      %v2662 = vpop.f32.mrf.mxu0
      %2663 = vmatprep.mubr.bf16.mxu0 0
      %2664 = vmatmul.mubr.bf16.gmra.mxu0 %v2609
      %v2665 = vpop.f32.mrf.mxu0
      %v2666 = vadd.f32 0.0, %v2665
      %v2667 = vpop.f32.mrf.mxu0
      %v2668 = vpop.f32.mrf.mxu0
      %v2669 = vadd.f32 0.0, %v2668
      %v2670 = vpop.f32.mrf.mxu0
      %2671 = vdwg.mxu0
      %v2672 = vadd.f32 %v2572, %v2650
      %v2673 = vadd.f32 %v2573, %v2653
      %v2674 = vadd.f32 %v2574, %v2658
      %v2675 = vadd.f32 %v2575, %v2661
      %v2676 = vadd.f32 %v2576, %v2666
      %v2677 = vadd.f32 %v2577, %v2669
      %v2678 = vld [vmem:[%s33] sm:$0xff]
      %v2679 = vld [vmem:[%s33 + $0x8] sm:$0xff]
      %v2680 = vld [vmem:[%s33 + $0x10] sm:$0xff]
      %v2681 = vld [vmem:[%s33 + $0x18] sm:$0xff]
      %v2682 = vld [vmem:[%s33 + $0x20] sm:$0xff]
      %v2683 = vld [vmem:[%s33 + $0x28] sm:$0xff]
      %2685 = vset.pattern.permute.xlu0 0
      %2686 = vperm.xlu0 %2685, %v2678
      %v2687 = vpop.permute.xlu0 %2686
      %2690 = vset.pattern.permute.xlu0 0
      %2691 = vperm.xlu0 %2690, %v2679
      %v2692 = vpop.permute.xlu0 %2691
      %2695 = vset.pattern.permute.xlu0 0
      %2696 = vperm.xlu0 %2695, %v2680
      %v2697 = vpop.permute.xlu0 %2696
      %2700 = vset.pattern.permute.xlu0 0
      %2701 = vperm.xlu0 %2700, %v2681
      %v2702 = vpop.permute.xlu0 %2701
      %2705 = vset.pattern.permute.xlu0 0
      %2706 = vperm.xlu0 %2705, %v2682
      %v2707 = vpop.permute.xlu0 %2706
      %2710 = vset.pattern.permute.xlu0 0
      %2711 = vperm.xlu0 %2710, %v2683
      %v2712 = vpop.permute.xlu0 %2711
      %v2714 = vadd.f32 %v2672, %v2687
      %v2715 = vadd.f32 %v2673, %v2692
      %v2716 = vadd.f32 %v2674, %v2697
      %v2717 = vadd.f32 %v2675, %v2702
      %v2718 = vadd.f32 %v2676, %v2707
      %v2719 = vadd.f32 %v2677, %v2712
      %v2720 = vld [vmem:[%s35] sm:$0xf]
      %v2721 = vld [vmem:[%s35 + $0x4] sm:$0xf]
      %v2722 = vld [vmem:[%s35 + $0x8] sm:$0xf]
      %v2723 = vld [vmem:[%s35 + $0xc] sm:$0xf]
      %v2724 = vld [vmem:[%s37] sm:$0xff]
      %v2725 = vld [vmem:[%s37 + $0x8] sm:$0xff]
      %v2726 = vld [vmem:[%s37 + $0x10] sm:$0xff]
      %v2727 = vld [vmem:[%s37 + $0x18] sm:$0xff]
      %2729 = vset.pattern.permute.xlu0 0
      %2730 = vperm.xlu0 %2729, %v2724
      %v2731 = vpop.permute.xlu0 %2730
      %2734 = vset.pattern.permute.xlu0 0
      %2735 = vperm.xlu0 %2734, %v2725
      %v2736 = vpop.permute.xlu0 %2735
      %2739 = vset.pattern.permute.xlu0 0
      %2740 = vperm.xlu0 %2739, %v2726
      %v2741 = vpop.permute.xlu0 %2740
      %2744 = vset.pattern.permute.xlu0 0
      %2745 = vperm.xlu0 %2744, %v2727
      %v2746 = vpop.permute.xlu0 %2745
      %v2752 = vunpack.c.l.b16 %v2720
      %v2753 = vunpack.c.l.b16 %v2721
      %v2754 = vunpack.c.l.b16 %v2722
      %v2755 = vunpack.c.l.b16 %v2723
      %v2756 = vpack.c.b16 %v2753, %v2752
      %v2757 = vpack.c.b16 %v2755, %v2754
      %v2759 = vsel %vm1158, %v2756, 0
      %v2762 = vsel %vm1158, %v2757, 0
      %2764 = vmatprep.subr.bf16.mxu0 0
      %2765 = vmatpush1.bf16.msra.mxu0 0
      %2766 = vmatprep.subr.bf16.mxu0 0
      %2767 = vmatpush1.bf16.msra.mxu0 0
      %2768 = vmatprep.subr.bf16.mxu0 0
      %2769 = vmatpush1.bf16.msra.mxu0 0
      %2770 = vmatprep.subr.bf16.mxu0 0
      %2771 = vmatpush1.bf16.msra.mxu0 0
      %2772 = vmatprep.subr.bf16.mxu0 0
      %2773 = vmatpush1.bf16.msra.mxu0 0
      %2774 = vmatprep.subr.bf16.mxu0 0
      %2775 = vmatpush1.bf16.msra.mxu0 0
      %2776 = vmatprep.subr.bf16.mxu0 0
      %2777 = vmatpush1.bf16.msra.mxu0 %v1043
      %2778 = vmatprep.subr.bf16.mxu0 0
      %2779 = vmatpush1.bf16.msra.mxu0 %v1042
      %2780 = vmatprep.subr.bf16.mxu0 0
      %2781 = vmatpush2.bf16.msra.mxu0 0
      %2782 = vmatprep.subr.bf16.mxu0 0
      %2783 = vmatpush2.bf16.msra.mxu0 0
      %2784 = vmatprep.subr.bf16.mxu0 0
      %2785 = vmatpush2.bf16.msra.mxu0 0
      %2786 = vmatprep.subr.bf16.mxu0 0
      %2787 = vmatpush2.bf16.msra.mxu0 0
      %2788 = vmatprep.subr.bf16.mxu0 0
      %2789 = vmatpush2.bf16.msra.mxu0 0
      %2790 = vmatprep.subr.bf16.mxu0 0
      %2791 = vmatpush2.bf16.msra.mxu0 0
      %2792 = vmatprep.subr.bf16.mxu0 0
      %2793 = vmatpush2.bf16.msra.mxu0 0
      %2794 = vmatprep.subr.bf16.mxu0 0
      %2795 = vmatpush2.bf16.msra.mxu0 0
      %2796 = vmatprep.mubr.bf16.mxu0 0
      %2797 = vmatmul.mubr.bf16.gmra.mxu0 %v2759
      %v2798 = vpop.f32.mrf.mxu0
      %v2799 = vadd.f32 %v2731, %v2798
      %v2800 = vpop.f32.mrf.mxu0
      %v2801 = vpop.f32.mrf.mxu0
      %v2802 = vadd.f32 %v2736, %v2801
      %v2803 = vpop.f32.mrf.mxu0
      %2804 = vmatprep.mubr.bf16.mxu0 0
      %2805 = vmatmul.mubr.bf16.gmra.mxu0 %v2762
      %v2806 = vpop.f32.mrf.mxu0
      %v2807 = vadd.f32 %v2741, %v2806
      %v2808 = vpop.f32.mrf.mxu0
      %v2809 = vpop.f32.mrf.mxu0
      %v2810 = vadd.f32 %v2746, %v2809
      %v2811 = vpop.f32.mrf.mxu0
      %2812 = vdwg.mxu0
      %v2813 = vld [vmem:[%s39] sm:$0xf]
      %v2814 = vld [vmem:[%s39 + $0x4] sm:$0xf]
      %v2815 = vld [vmem:[%s39 + $0x8] sm:$0xf]
      %v2816 = vld [vmem:[%s39 + $0xc] sm:$0xf]
      %v2817 = vld [vmem:[%s39 + $0x10] sm:$0xf]
      %v2818 = vld [vmem:[%s39 + $0x14] sm:$0xf]
      %v2819 = vld [vmem:[%s39 + $0x18] sm:$0xf]
      %v2820 = vld [vmem:[%s39 + $0x1c] sm:$0xf]
      %v2821 = vpack.c.bf16 %v2715, %v2714
      %v2822 = vpack.c.bf16 %v2717, %v2716
      %v2823 = vpack.c.bf16 %v2719, %v2718
      %v2824 = vld [vmem:[%s41] sm:$0xff]
      %v2825 = vld [vmem:[%s41 + $0x8] sm:$0xff]
      %v2826 = vld [vmem:[%s41 + $0x10] sm:$0xff]
      %v2827 = vld [vmem:[%s41 + $0x18] sm:$0xff]
      %v2828 = vld [vmem:[%s41 + $0x20] sm:$0xff]
      %v2829 = vld [vmem:[%s41 + $0x28] sm:$0xff]
      %v2830 = vld [vmem:[%s41 + $0x30] sm:$0xff]
      %v2831 = vld [vmem:[%s41 + $0x38] sm:$0xff]
      %2833 = vset.pattern.permute.xlu0 0
      %2834 = vperm.xlu0 %2833, %v2824
      %v2835 = vpop.permute.xlu0 %2834
      %2838 = vset.pattern.permute.xlu0 0
      %2839 = vperm.xlu0 %2838, %v2825
      %v2840 = vpop.permute.xlu0 %2839
      %2843 = vset.pattern.permute.xlu0 0
      %2844 = vperm.xlu0 %2843, %v2826
      %v2845 = vpop.permute.xlu0 %2844
      %2848 = vset.pattern.permute.xlu0 0
      %2849 = vperm.xlu0 %2848, %v2827
      %v2850 = vpop.permute.xlu0 %2849
      %2853 = vset.pattern.permute.xlu0 0
      %2854 = vperm.xlu0 %2853, %v2828
      %v2855 = vpop.permute.xlu0 %2854
      %2858 = vset.pattern.permute.xlu0 0
      %2859 = vperm.xlu0 %2858, %v2829
      %v2860 = vpop.permute.xlu0 %2859
      %2863 = vset.pattern.permute.xlu0 0
      %2864 = vperm.xlu0 %2863, %v2830
      %v2865 = vpop.permute.xlu0 %2864
      %2868 = vset.pattern.permute.xlu0 0
      %2869 = vperm.xlu0 %2868, %v2831
      %v2870 = vpop.permute.xlu0 %2869
      %v2880 = vunpack.c.l.b16 %v2813
      %v2881 = vunpack.c.l.b16 %v2814
      %v2882 = vunpack.c.l.b16 %v2815
      %v2883 = vunpack.c.l.b16 %v2816
      %v2884 = vunpack.c.l.b16 %v2817
      %v2885 = vunpack.c.l.b16 %v2818
      %v2886 = vunpack.c.l.b16 %v2819
      %v2887 = vunpack.c.l.b16 %v2820
      %v2888 = vpack.c.b16 %v2881, %v2880
      %v2889 = vpack.c.b16 %v2883, %v2882
      %v2890 = vpack.c.b16 %v2885, %v2884
      %v2891 = vpack.c.b16 %v2887, %v2886
      %vm2892 = vcmask 392192
      %v2894 = vsel %vm2892, %v2888, 0
      %v2897 = vsel %vm2892, %v2889, 0
      %v2900 = vsel %vm2892, %v2890, 0
      %v2903 = vsel %vm2892, %v2891, 0
      %2905 = vmatprep.subr.bf16.mxu0 0
      %2906 = vmatpush1.bf16.msra.mxu0 0
      %2907 = vmatprep.subr.bf16.mxu0 0
      %2908 = vmatpush1.bf16.msra.mxu0 0
      %2909 = vmatprep.subr.bf16.mxu0 0
      %2910 = vmatpush1.bf16.msra.mxu0 0
      %2911 = vmatprep.subr.bf16.mxu0 0
      %2912 = vmatpush1.bf16.msra.mxu0 0
      %2913 = vmatprep.subr.bf16.mxu0 0
      %2914 = vmatpush1.bf16.msra.mxu0 0
      %2915 = vmatprep.subr.bf16.mxu0 0
      %2916 = vmatpush1.bf16.msra.mxu0 %v2823
      %2917 = vmatprep.subr.bf16.mxu0 0
      %2918 = vmatpush1.bf16.msra.mxu0 %v2822
      %2919 = vmatprep.subr.bf16.mxu0 0
      %2920 = vmatpush1.bf16.msra.mxu0 %v2821
      %2921 = vmatprep.subr.bf16.mxu0 0
      %2922 = vmatpush2.bf16.msra.mxu0 0
      %2923 = vmatprep.subr.bf16.mxu0 0
      %2924 = vmatpush2.bf16.msra.mxu0 0
      %2925 = vmatprep.subr.bf16.mxu0 0
      %2926 = vmatpush2.bf16.msra.mxu0 0
      %2927 = vmatprep.subr.bf16.mxu0 0
      %2928 = vmatpush2.bf16.msra.mxu0 0
      %2929 = vmatprep.subr.bf16.mxu0 0
      %2930 = vmatpush2.bf16.msra.mxu0 0
      %2931 = vmatprep.subr.bf16.mxu0 0
      %2932 = vmatpush2.bf16.msra.mxu0 0
      %2933 = vmatprep.subr.bf16.mxu0 0
      %2934 = vmatpush2.bf16.msra.mxu0 0
      %2935 = vmatprep.subr.bf16.mxu0 0
      %2936 = vmatpush2.bf16.msra.mxu0 0
      %2937 = vmatprep.mubr.bf16.mxu0 0
      %2938 = vmatmul.mubr.bf16.gmra.mxu0 %v2894
      %v2939 = vpop.f32.mrf.mxu0
      %v2940 = vadd.f32 %v2835, %v2939
      %v2941 = vpop.f32.mrf.mxu0
      %v2942 = vpop.f32.mrf.mxu0
      %v2943 = vadd.f32 %v2840, %v2942
      %v2944 = vpop.f32.mrf.mxu0
      %2945 = vmatprep.mubr.bf16.mxu0 0
      %2946 = vmatmul.mubr.bf16.gmra.mxu0 %v2897
      %v2947 = vpop.f32.mrf.mxu0
      %v2948 = vadd.f32 %v2845, %v2947
      %v2949 = vpop.f32.mrf.mxu0
      %v2950 = vpop.f32.mrf.mxu0
      %v2951 = vadd.f32 %v2850, %v2950
      %v2952 = vpop.f32.mrf.mxu0
      %2953 = vmatprep.mubr.bf16.mxu0 0
      %2954 = vmatmul.mubr.bf16.gmra.mxu0 %v2900
      %v2955 = vpop.f32.mrf.mxu0
      %v2956 = vadd.f32 %v2855, %v2955
      %v2957 = vpop.f32.mrf.mxu0
      %v2958 = vpop.f32.mrf.mxu0
      %v2959 = vadd.f32 %v2860, %v2958
      %v2960 = vpop.f32.mrf.mxu0
      %2961 = vmatprep.mubr.bf16.mxu0 0
      %2962 = vmatmul.mubr.bf16.gmra.mxu0 %v2903
      %v2963 = vpop.f32.mrf.mxu0
      %v2964 = vadd.f32 %v2865, %v2963
      %v2965 = vpop.f32.mrf.mxu0
      %v2966 = vpop.f32.mrf.mxu0
      %v2967 = vadd.f32 %v2870, %v2966
      %v2968 = vpop.f32.mrf.mxu0
      %2969 = vdwg.mxu0
      %v2970 = vpack.c.bf16 %v2943, %v2940
      %v2971 = vpack.c.bf16 %v2951, %v2948
      %v2972 = vpack.c.bf16 %v2802, %v2799
      %v2973 = vpack.c.bf16 %v2810, %v2807
      %2974 = vxpose.xlu0.c.b16.start [1/8] %v2970, 128
      %2975 = vxpose.xlu0.c.b16.cont [2/8] 0, 128
      %2976 = vxpose.xlu0.c.b16.cont [3/8] 0, 128
      %2977 = vxpose.xlu0.c.b16.cont [4/8] 0, 128
      %2978 = vxpose.xlu0.c.b16.cont [5/8] 0, 128
      %2979 = vxpose.xlu0.c.b16.cont [6/8] 0, 128
      %2980 = vxpose.xlu0.c.b16.cont [7/8] 0, 128
      %2981 = vxpose.xlu0.c.b16.end [8/8] 0, 128
      %v2982 = vpop.trf.xlu0
      %v2983 = vpop.trf.xlu0
      %v2984 = vpop.trf.xlu0
      %v2985 = vpop.trf.xlu0
      %v2986 = vpop.trf.xlu0
      %v2987 = vpop.trf.xlu0
      %v2988 = vpop.trf.xlu0
      %v2989 = vpop.trf.xlu0
      %v2991 = vsel %vm1414, %v2982, 0
      %v2994 = vsel %vm1414, %v2983, 0
      %v2997 = vsel %vm1414, %v2984, 0
      %v3000 = vsel %vm1414, %v2985, 0
      %3002 = vmatprep.subr.bf16.mxu0 0
      %3003 = vmatpush1.bf16.msra.mxu0 0
      %3004 = vmatprep.subr.bf16.mxu0 0
      %3005 = vmatpush1.bf16.msra.mxu0 0
      %3006 = vmatprep.subr.bf16.mxu0 0
      %3007 = vmatpush1.bf16.msra.mxu0 0
      %3008 = vmatprep.subr.bf16.mxu0 0
      %3009 = vmatpush1.bf16.msra.mxu0 0
      %3010 = vmatprep.subr.bf16.mxu0 0
      %3011 = vmatpush1.bf16.msra.mxu0 0
      %3012 = vmatprep.subr.bf16.mxu0 0
      %3013 = vmatpush1.bf16.msra.mxu0 0
      %3014 = vmatprep.subr.bf16.mxu0 0
      %3015 = vmatpush1.bf16.msra.mxu0 0
      %3016 = vmatprep.subr.bf16.mxu0 0
      %3017 = vmatpush1.bf16.msra.mxu0 %v2972
      %3018 = vmatprep.subr.bf16.mxu0 0
      %3019 = vmatpush2.bf16.msra.mxu0 0
      %3020 = vmatprep.subr.bf16.mxu0 0
      %3021 = vmatpush2.bf16.msra.mxu0 0
      %3022 = vmatprep.subr.bf16.mxu0 0
      %3023 = vmatpush2.bf16.msra.mxu0 0
      %3024 = vmatprep.subr.bf16.mxu0 0
      %3025 = vmatpush2.bf16.msra.mxu0 0
      %3026 = vmatprep.subr.bf16.mxu0 0
      %3027 = vmatpush2.bf16.msra.mxu0 0
      %3028 = vmatprep.subr.bf16.mxu0 0
      %3029 = vmatpush2.bf16.msra.mxu0 0
      %3030 = vmatprep.subr.bf16.mxu0 0
      %3031 = vmatpush2.bf16.msra.mxu0 0
      %3032 = vmatprep.subr.bf16.mxu0 0
      %3033 = vmatpush2.bf16.msra.mxu0 0
      %3034 = vmatprep.mubr.bf16.mxu0 0
      %3035 = vmatmul.mubr.bf16.gmra.mxu0 %v2991
      %v3036 = vpop.f32.mrf.mxu0
      %v3037 = vadd.f32 0.0, %v3036
      %v3038 = vpop.f32.mrf.mxu0
      %v3039 = vpop.f32.mrf.mxu0
      %v3040 = vadd.f32 0.0, %v3039
      %v3041 = vpop.f32.mrf.mxu0
      %3042 = vmatprep.mubr.bf16.mxu0 0
      %3043 = vmatmul.mubr.bf16.gmra.mxu0 %v2994
      %v3044 = vpop.f32.mrf.mxu0
      %v3045 = vadd.f32 0.0, %v3044
      %v3046 = vpop.f32.mrf.mxu0
      %v3047 = vpop.f32.mrf.mxu0
      %v3048 = vadd.f32 0.0, %v3047
      %v3049 = vpop.f32.mrf.mxu0
      %3050 = vmatprep.mubr.bf16.mxu0 0
      %3051 = vmatmul.mubr.bf16.gmra.mxu0 %v2997
      %v3052 = vpop.f32.mrf.mxu0
      %v3053 = vadd.f32 0.0, %v3052
      %v3054 = vpop.f32.mrf.mxu0
      %v3055 = vpop.f32.mrf.mxu0
      %v3056 = vadd.f32 0.0, %v3055
      %v3057 = vpop.f32.mrf.mxu0
      %3058 = vmatprep.mubr.bf16.mxu0 0
      %3059 = vmatmul.mubr.bf16.gmra.mxu0 %v3000
      %v3060 = vpop.f32.mrf.mxu0
      %v3061 = vadd.f32 0.0, %v3060
      %v3062 = vpop.f32.mrf.mxu0
      %v3063 = vpop.f32.mrf.mxu0
      %v3064 = vadd.f32 0.0, %v3063
      %v3065 = vpop.f32.mrf.mxu0
      %3066 = vdwg.mxu0
      %3067 = vxpose.xlu0.c.b16.start [1/8] %v2971, 128
      %3068 = vxpose.xlu0.c.b16.cont [2/8] 0, 128
      %3069 = vxpose.xlu0.c.b16.cont [3/8] 0, 128
      %3070 = vxpose.xlu0.c.b16.cont [4/8] 0, 128
      %3071 = vxpose.xlu0.c.b16.cont [5/8] 0, 128
      %3072 = vxpose.xlu0.c.b16.cont [6/8] 0, 128
      %3073 = vxpose.xlu0.c.b16.cont [7/8] 0, 128
      %3074 = vxpose.xlu0.c.b16.end [8/8] 0, 128
      %v3075 = vpop.trf.xlu0
      %v3076 = vpop.trf.xlu0
      %v3077 = vpop.trf.xlu0
      %v3078 = vpop.trf.xlu0
      %v3079 = vpop.trf.xlu0
      %v3080 = vpop.trf.xlu0
      %v3081 = vpop.trf.xlu0
      %v3082 = vpop.trf.xlu0
      %v3084 = vsel %vm1414, %v3075, 0
      %v3087 = vsel %vm1414, %v3076, 0
      %v3090 = vsel %vm1414, %v3077, 0
      %v3093 = vsel %vm1414, %v3078, 0
      %3095 = vmatprep.subr.bf16.mxu0 0
      %3096 = vmatpush1.bf16.msra.mxu0 0
      %3097 = vmatprep.subr.bf16.mxu0 0
      %3098 = vmatpush1.bf16.msra.mxu0 0
      %3099 = vmatprep.subr.bf16.mxu0 0
      %3100 = vmatpush1.bf16.msra.mxu0 0
      %3101 = vmatprep.subr.bf16.mxu0 0
      %3102 = vmatpush1.bf16.msra.mxu0 0
      %3103 = vmatprep.subr.bf16.mxu0 0
      %3104 = vmatpush1.bf16.msra.mxu0 0
      %3105 = vmatprep.subr.bf16.mxu0 0
      %3106 = vmatpush1.bf16.msra.mxu0 0
      %3107 = vmatprep.subr.bf16.mxu0 0
      %3108 = vmatpush1.bf16.msra.mxu0 0
      %3109 = vmatprep.subr.bf16.mxu0 0
      %3110 = vmatpush1.bf16.msra.mxu0 %v2973
      %3111 = vmatprep.subr.bf16.mxu0 0
      %3112 = vmatpush2.bf16.msra.mxu0 0
      %3113 = vmatprep.subr.bf16.mxu0 0
      %3114 = vmatpush2.bf16.msra.mxu0 0
      %3115 = vmatprep.subr.bf16.mxu0 0
      %3116 = vmatpush2.bf16.msra.mxu0 0
      %3117 = vmatprep.subr.bf16.mxu0 0
      %3118 = vmatpush2.bf16.msra.mxu0 0
      %3119 = vmatprep.subr.bf16.mxu0 0
      %3120 = vmatpush2.bf16.msra.mxu0 0
      %3121 = vmatprep.subr.bf16.mxu0 0
      %3122 = vmatpush2.bf16.msra.mxu0 0
      %3123 = vmatprep.subr.bf16.mxu0 0
      %3124 = vmatpush2.bf16.msra.mxu0 0
      %3125 = vmatprep.subr.bf16.mxu0 0
      %3126 = vmatpush2.bf16.msra.mxu0 0
      %3127 = vmatprep.mubr.bf16.mxu0 0
      %3128 = vmatmul.mubr.bf16.gmra.mxu0 %v3084
      %v3129 = vpop.f32.mrf.mxu0
      %v3130 = vadd.f32 0.0, %v3129
      %v3131 = vpop.f32.mrf.mxu0
      %v3132 = vpop.f32.mrf.mxu0
      %v3133 = vadd.f32 0.0, %v3132
      %v3134 = vpop.f32.mrf.mxu0
      %3135 = vmatprep.mubr.bf16.mxu0 0
      %3136 = vmatmul.mubr.bf16.gmra.mxu0 %v3087
      %v3137 = vpop.f32.mrf.mxu0
      %v3138 = vadd.f32 0.0, %v3137
      %v3139 = vpop.f32.mrf.mxu0
      %v3140 = vpop.f32.mrf.mxu0
      %v3141 = vadd.f32 0.0, %v3140
      %v3142 = vpop.f32.mrf.mxu0
      %3143 = vmatprep.mubr.bf16.mxu0 0
      %3144 = vmatmul.mubr.bf16.gmra.mxu0 %v3090
      %v3145 = vpop.f32.mrf.mxu0
      %v3146 = vadd.f32 0.0, %v3145
      %v3147 = vpop.f32.mrf.mxu0
      %v3148 = vpop.f32.mrf.mxu0
      %v3149 = vadd.f32 0.0, %v3148
      %v3150 = vpop.f32.mrf.mxu0
      %3151 = vmatprep.mubr.bf16.mxu0 0
      %3152 = vmatmul.mubr.bf16.gmra.mxu0 %v3093
      %v3153 = vpop.f32.mrf.mxu0
      %v3154 = vadd.f32 0.0, %v3153
      %v3155 = vpop.f32.mrf.mxu0
      %v3156 = vpop.f32.mrf.mxu0
      %v3157 = vadd.f32 0.0, %v3156
      %v3158 = vpop.f32.mrf.mxu0
      %3159 = vdwg.mxu0
      %v3160 = vmax.f32 %v3037, %v3045
      %v3161 = vmax.f32 %v3040, %v3048
      %v3162 = vmax.f32 %v3160, %v3053
      %v3163 = vmax.f32 %v3161, %v3056
      %v3164 = vmax.f32 %v3162, %v3061
      %v3165 = vmax.f32 %v3163, %v3064
      %v3166 = vmax.f32 %v3164, %v3165
      %v3167 = vrot.slane %v3166, 4
      %v3168 = vmax.f32 %v3166, %v3167
      %v3169 = vrot.slane %v3168, 2
      %v3170 = vmax.f32 %v3168, %v3169
      %v3171 = vrot.slane %v3170, 1
      %v3172 = vmax.f32 %v3170, %v3171
      %v3173 = vmax.f32 %v3130, %v3138
      %v3174 = vmax.f32 %v3133, %v3141
      %v3175 = vmax.f32 %v3173, %v3146
      %v3176 = vmax.f32 %v3174, %v3149
      %v3177 = vmax.f32 %v3175, %v3154
      %v3178 = vmax.f32 %v3176, %v3157
      %v3179 = vmax.f32 %v3177, %v3178
      %v3180 = vrot.slane %v3179, 4
      %v3181 = vmax.f32 %v3179, %v3180
      %v3182 = vrot.slane %v3181, 2
      %v3183 = vmax.f32 %v3181, %v3182
      %v3184 = vrot.slane %v3183, 1
      %v3185 = vmax.f32 %v3183, %v3184
      %v3186 = vsub.f32 %v3037, %v3172
      %v3187 = vsub.f32 %v3040, %v3172
      %v3188 = vsub.f32 %v3045, %v3172
      %v3189 = vsub.f32 %v3048, %v3172
      %v3190 = vsub.f32 %v3053, %v3172
      %v3191 = vsub.f32 %v3056, %v3172
      %v3192 = vsub.f32 %v3061, %v3172
      %v3193 = vsub.f32 %v3064, %v3172
      %v3194 = vsub.f32 %v3130, %v3185
      %v3195 = vsub.f32 %v3133, %v3185
      %v3196 = vsub.f32 %v3138, %v3185
      %v3197 = vsub.f32 %v3141, %v3185
      %v3198 = vsub.f32 %v3146, %v3185
      %v3199 = vsub.f32 %v3149, %v3185
      %v3200 = vsub.f32 %v3154, %v3185
      %v3201 = vsub.f32 %v3157, %v3185
      %v3202 = vmul.f32 %v3186, 1.442695
      %v3203 = vpow.pop %v3202
      %v3204 = vmul.f32 %v3187, 1.442695
      %v3205 = vpow.pop %v3204
      %v3206 = vmul.f32 %v3188, 1.442695
      %v3207 = vpow.pop %v3206
      %v3208 = vmul.f32 %v3189, 1.442695
      %v3209 = vpow.pop %v3208
      %v3210 = vmul.f32 %v3190, 1.442695
      %v3211 = vpow.pop %v3210
      %v3212 = vmul.f32 %v3191, 1.442695
      %v3213 = vpow.pop %v3212
      %v3214 = vmul.f32 %v3192, 1.442695
      %v3215 = vpow.pop %v3214
      %v3216 = vmul.f32 %v3193, 1.442695
      %v3217 = vpow.pop %v3216
      %v3218 = vmul.f32 %v3194, 1.442695
      %v3219 = vpow.pop %v3218
      %v3220 = vmul.f32 %v3195, 1.442695
      %v3221 = vpow.pop %v3220
      %v3222 = vmul.f32 %v3196, 1.442695
      %v3223 = vpow.pop %v3222
      %v3224 = vmul.f32 %v3197, 1.442695
      %v3225 = vpow.pop %v3224
      %v3226 = vmul.f32 %v3198, 1.442695
      %v3227 = vpow.pop %v3226
      %v3228 = vmul.f32 %v3199, 1.442695
      %v3229 = vpow.pop %v3228
      %v3230 = vmul.f32 %v3200, 1.442695
      %v3231 = vpow.pop %v3230
      %v3232 = vmul.f32 %v3201, 1.442695
      %v3233 = vpow.pop %v3232
      %v3234 = vadd.f32 %v3203, %v3205
      %v3235 = vadd.f32 %v3234, %v3207
      %v3236 = vadd.f32 %v3235, %v3209
      %v3237 = vadd.f32 %v3236, %v3211
      %v3238 = vadd.f32 %v3237, %v3213
      %v3239 = vadd.f32 %v3238, %v3215
      %v3240 = vadd.f32 %v3239, %v3217
      %v3241 = vrot.slane %v3240, 4
      %v3242 = vadd.f32 %v3240, %v3241
      %v3243 = vrot.slane %v3242, 2
      %v3244 = vadd.f32 %v3242, %v3243
      %v3245 = vrot.slane %v3244, 1
      %v3246 = vadd.f32 %v3244, %v3245
      %v3247 = vadd.f32 %v3219, %v3221
      %v3248 = vadd.f32 %v3247, %v3223
      %v3249 = vadd.f32 %v3248, %v3225
      %v3250 = vadd.f32 %v3249, %v3227
      %v3251 = vadd.f32 %v3250, %v3229
      %v3252 = vadd.f32 %v3251, %v3231
      %v3253 = vadd.f32 %v3252, %v3233
      %v3254 = vrot.slane %v3253, 4
      %v3255 = vadd.f32 %v3253, %v3254
      %v3256 = vrot.slane %v3255, 2
      %v3257 = vadd.f32 %v3255, %v3256
      %v3258 = vrot.slane %v3257, 1
      %v3259 = vadd.f32 %v3257, %v3258
      %v3260 = vpack.c.bf16 %v2959, %v2956
      %v3261 = vpack.c.bf16 %v2967, %v2964
      %v3262 = vpack.c.bf16 %v3205, %v3203
      %v3263 = vpack.c.bf16 %v3209, %v3207
      %v3264 = vpack.c.bf16 %v3213, %v3211
      %v3265 = vpack.c.bf16 %v3217, %v3215
      %v3266 = vpack.c.bf16 %v3221, %v3219
      %v3267 = vpack.c.bf16 %v3225, %v3223
      %v3268 = vpack.c.bf16 %v3229, %v3227
      %v3269 = vpack.c.bf16 %v3233, %v3231
      %v3271 = vsel %vm2418, %v3260, 0
      %3273 = vmatprep.subr.bf16.mxu0 0
      %3274 = vmatpush1.bf16.msra.mxu0 0
      %3275 = vmatprep.subr.bf16.mxu0 0
      %3276 = vmatpush1.bf16.msra.mxu0 0
      %3277 = vmatprep.subr.bf16.mxu0 0
      %3278 = vmatpush1.bf16.msra.mxu0 0
      %3279 = vmatprep.subr.bf16.mxu0 0
      %3280 = vmatpush1.bf16.msra.mxu0 0
      %3281 = vmatprep.subr.bf16.mxu0 0
      %3282 = vmatpush1.bf16.msra.mxu0 %v3265
      %3283 = vmatprep.subr.bf16.mxu0 0
      %3284 = vmatpush1.bf16.msra.mxu0 %v3264
      %3285 = vmatprep.subr.bf16.mxu0 0
      %3286 = vmatpush1.bf16.msra.mxu0 %v3263
      %3287 = vmatprep.subr.bf16.mxu0 0
      %3288 = vmatpush1.bf16.msra.mxu0 %v3262
      %3289 = vmatprep.subr.bf16.mxu0 0
      %3290 = vmatpush2.bf16.msra.mxu0 0
      %3291 = vmatprep.subr.bf16.mxu0 0
      %3292 = vmatpush2.bf16.msra.mxu0 0
      %3293 = vmatprep.subr.bf16.mxu0 0
      %3294 = vmatpush2.bf16.msra.mxu0 0
      %3295 = vmatprep.subr.bf16.mxu0 0
      %3296 = vmatpush2.bf16.msra.mxu0 0
      %3297 = vmatprep.subr.bf16.mxu0 0
      %3298 = vmatpush2.bf16.msra.mxu0 0
      %3299 = vmatprep.subr.bf16.mxu0 0
      %3300 = vmatpush2.bf16.msra.mxu0 0
      %3301 = vmatprep.subr.bf16.mxu0 0
      %3302 = vmatpush2.bf16.msra.mxu0 0
      %3303 = vmatprep.subr.bf16.mxu0 0
      %3304 = vmatpush2.bf16.msra.mxu0 0
      %3305 = vmatprep.mubr.bf16.mxu0 0
      %3306 = vmatmul.mubr.bf16.gmra.mxu0 %v3271
      %v3307 = vpop.f32.mrf.mxu0
      %v3308 = vadd.f32 0.0, %v3307
      %v3309 = vpop.f32.mrf.mxu0
      %v3310 = vpop.f32.mrf.mxu0
      %v3311 = vadd.f32 0.0, %v3310
      %v3312 = vpop.f32.mrf.mxu0
      %3313 = vdwg.mxu0
      %v3315 = vsel %vm2418, %v3261, 0
      %3317 = vmatprep.subr.bf16.mxu0 0
      %3318 = vmatpush1.bf16.msra.mxu0 0
      %3319 = vmatprep.subr.bf16.mxu0 0
      %3320 = vmatpush1.bf16.msra.mxu0 0
      %3321 = vmatprep.subr.bf16.mxu0 0
      %3322 = vmatpush1.bf16.msra.mxu0 0
      %3323 = vmatprep.subr.bf16.mxu0 0
      %3324 = vmatpush1.bf16.msra.mxu0 0
      %3325 = vmatprep.subr.bf16.mxu0 0
      %3326 = vmatpush1.bf16.msra.mxu0 %v3269
      %3327 = vmatprep.subr.bf16.mxu0 0
      %3328 = vmatpush1.bf16.msra.mxu0 %v3268
      %3329 = vmatprep.subr.bf16.mxu0 0
      %3330 = vmatpush1.bf16.msra.mxu0 %v3267
      %3331 = vmatprep.subr.bf16.mxu0 0
      %3332 = vmatpush1.bf16.msra.mxu0 %v3266
      %3333 = vmatprep.subr.bf16.mxu0 0
      %3334 = vmatpush2.bf16.msra.mxu0 0
      %3335 = vmatprep.subr.bf16.mxu0 0
      %3336 = vmatpush2.bf16.msra.mxu0 0
      %3337 = vmatprep.subr.bf16.mxu0 0
      %3338 = vmatpush2.bf16.msra.mxu0 0
      %3339 = vmatprep.subr.bf16.mxu0 0
      %3340 = vmatpush2.bf16.msra.mxu0 0
      %3341 = vmatprep.subr.bf16.mxu0 0
      %3342 = vmatpush2.bf16.msra.mxu0 0
      %3343 = vmatprep.subr.bf16.mxu0 0
      %3344 = vmatpush2.bf16.msra.mxu0 0
      %3345 = vmatprep.subr.bf16.mxu0 0
      %3346 = vmatpush2.bf16.msra.mxu0 0
      %3347 = vmatprep.subr.bf16.mxu0 0
      %3348 = vmatpush2.bf16.msra.mxu0 0
      %3349 = vmatprep.mubr.bf16.mxu0 0
      %3350 = vmatmul.mubr.bf16.gmra.mxu0 %v3315
      %v3351 = vpop.f32.mrf.mxu0
      %v3352 = vadd.f32 0.0, %v3351
      %v3353 = vpop.f32.mrf.mxu0
      %v3354 = vpop.f32.mrf.mxu0
      %v3355 = vadd.f32 0.0, %v3354
      %v3356 = vpop.f32.mrf.mxu0
      %3357 = vdwg.mxu0
      %v3358 = vrcp.pop %v3246
      %v3359 = vrcp.pop %v3259
      %v3360 = vmul.f32 %v3308, %v3358
      %v3361 = vmul.f32 %v3311, %v3358
      %v3362 = vmul.f32 %v3352, %v3359
      %v3363 = vmul.f32 %v3355, %v3359
      %v3364 = vld [vmem:[%s43] sm:$0xf]
      %v3365 = vld [vmem:[%s43 + $0x4] sm:$0xf]
      %v3366 = vld [vmem:[%s43 + $0x8] sm:$0xf]
      %v3367 = vld [vmem:[%s43 + $0xc] sm:$0xf]
      %v3368 = vpack.c.bf16 %v3361, %v3360
      %v3369 = vpack.c.bf16 %v3363, %v3362
      %v3370 = vld [vmem:[%s45] sm:$0xff]
      %v3371 = vld [vmem:[%s45 + $0x8] sm:$0xff]
      %v3372 = vld [vmem:[%s45 + $0x10] sm:$0xff]
      %v3373 = vld [vmem:[%s45 + $0x18] sm:$0xff]
      %3375 = vset.pattern.permute.xlu0 0
      %3376 = vperm.xlu0 %3375, %v3370
      %v3377 = vpop.permute.xlu0 %3376
      %3380 = vset.pattern.permute.xlu0 0
      %3381 = vperm.xlu0 %3380, %v3371
      %v3382 = vpop.permute.xlu0 %3381
      %3385 = vset.pattern.permute.xlu0 0
      %3386 = vperm.xlu0 %3385, %v3372
      %v3387 = vpop.permute.xlu0 %3386
      %3390 = vset.pattern.permute.xlu0 0
      %3391 = vperm.xlu0 %3390, %v3373
      %v3392 = vpop.permute.xlu0 %3391
      %v3398 = vunpack.c.l.b16 %v3364
      %v3399 = vunpack.c.l.b16 %v3365
      %v3400 = vunpack.c.l.b16 %v3366
      %v3401 = vunpack.c.l.b16 %v3367
      %v3402 = vpack.c.b16 %v3399, %v3398
      %v3403 = vpack.c.b16 %v3401, %v3400
      %v3405 = vsel %vm1158, %v3402, 0
      %v3408 = vsel %vm1158, %v3403, 0
      %3410 = vmatprep.subr.bf16.mxu0 0
      %3411 = vmatpush1.bf16.msra.mxu0 0
      %3412 = vmatprep.subr.bf16.mxu0 0
      %3413 = vmatpush1.bf16.msra.mxu0 0
      %3414 = vmatprep.subr.bf16.mxu0 0
      %3415 = vmatpush1.bf16.msra.mxu0 0
      %3416 = vmatprep.subr.bf16.mxu0 0
      %3417 = vmatpush1.bf16.msra.mxu0 0
      %3418 = vmatprep.subr.bf16.mxu0 0
      %3419 = vmatpush1.bf16.msra.mxu0 0
      %3420 = vmatprep.subr.bf16.mxu0 0
      %3421 = vmatpush1.bf16.msra.mxu0 0
      %3422 = vmatprep.subr.bf16.mxu0 0
      %3423 = vmatpush1.bf16.msra.mxu0 %v3369
      %3424 = vmatprep.subr.bf16.mxu0 0
      %3425 = vmatpush1.bf16.msra.mxu0 %v3368
      %3426 = vmatprep.subr.bf16.mxu0 0
      %3427 = vmatpush2.bf16.msra.mxu0 0
      %3428 = vmatprep.subr.bf16.mxu0 0
      %3429 = vmatpush2.bf16.msra.mxu0 0
      %3430 = vmatprep.subr.bf16.mxu0 0
      %3431 = vmatpush2.bf16.msra.mxu0 0
      %3432 = vmatprep.subr.bf16.mxu0 0
      %3433 = vmatpush2.bf16.msra.mxu0 0
      %3434 = vmatprep.subr.bf16.mxu0 0
      %3435 = vmatpush2.bf16.msra.mxu0 0
      %3436 = vmatprep.subr.bf16.mxu0 0
      %3437 = vmatpush2.bf16.msra.mxu0 0
      %3438 = vmatprep.subr.bf16.mxu0 0
      %3439 = vmatpush2.bf16.msra.mxu0 0
      %3440 = vmatprep.subr.bf16.mxu0 0
      %3441 = vmatpush2.bf16.msra.mxu0 0
      %3442 = vmatprep.mubr.bf16.mxu0 0
      %3443 = vmatmul.mubr.bf16.gmra.mxu0 %v3405
      %v3444 = vpop.f32.mrf.mxu0
      %v3445 = vadd.f32 %v3377, %v3444
      %v3446 = vpop.f32.mrf.mxu0
      %v3447 = vpop.f32.mrf.mxu0
      %v3448 = vadd.f32 %v3382, %v3447
      %v3449 = vpop.f32.mrf.mxu0
      %3450 = vmatprep.mubr.bf16.mxu0 0
      %3451 = vmatmul.mubr.bf16.gmra.mxu0 %v3408
      %v3452 = vpop.f32.mrf.mxu0
      %v3453 = vadd.f32 %v3387, %v3452
      %v3454 = vpop.f32.mrf.mxu0
      %v3455 = vpop.f32.mrf.mxu0
      %v3456 = vadd.f32 %v3392, %v3455
      %v3457 = vpop.f32.mrf.mxu0
      %3458 = vdwg.mxu0
      %v3459 = vadd.f32 %v1038, %v3445
      %v3460 = vadd.f32 %v1039, %v3448
      %v3461 = vadd.f32 %v1040, %v3453
      %v3462 = vadd.f32 %v1041, %v3456
      %v3463 = vld [vmem:[%s47] sm:$0xff]
      %v3464 = vld [vmem:[%s47 + $0x8] sm:$0xff]
      %v3465 = vld [vmem:[%s47 + $0x10] sm:$0xff]
      %v3466 = vld [vmem:[%s47 + $0x18] sm:$0xff]
      %v3467 = vld [vmem:[%s49] sm:$0xff]
      %v3468 = vld [vmem:[%s49 + $0x8] sm:$0xff]
      %v3469 = vld [vmem:[%s49 + $0x10] sm:$0xff]
      %v3470 = vld [vmem:[%s49 + $0x18] sm:$0xff]
      %v3471 = vadd.f32 %v3459, %v3460
      %v3472 = vadd.f32 %v3471, %v3461
      %v3473 = vadd.f32 %v3472, %v3462
      %v3474 = vrot.slane %v3473, 4
      %v3475 = vadd.f32 %v3473, %v3474
      %v3476 = vrot.slane %v3475, 2
      %v3477 = vadd.f32 %v3475, %v3476
      %v3478 = vrot.slane %v3477, 1
      %v3479 = vadd.f32 %v3477, %v3478
      %v3480 = vmul.f32 %v3479, %v2075
      %v3481 = vsub.f32 %v3459, %v3480
      %v3482 = vsub.f32 %v3460, %v3480
      %v3483 = vsub.f32 %v3461, %v3480
      %v3484 = vsub.f32 %v3462, %v3480
      %v3485 = vmul.f32 %v3481, %v3481
      %v3486 = vmul.f32 %v3482, %v3482
      %v3487 = vmul.f32 %v3483, %v3483
      %v3488 = vmul.f32 %v3484, %v3484
      %v3489 = vadd.f32 %v3485, %v3486
      %v3490 = vadd.f32 %v3489, %v3487
      %v3491 = vadd.f32 %v3490, %v3488
      %v3492 = vrot.slane %v3491, 4
      %v3493 = vadd.f32 %v3491, %v3492
      %v3494 = vrot.slane %v3493, 2
      %v3495 = vadd.f32 %v3493, %v3494
      %v3496 = vrot.slane %v3495, 1
      %v3497 = vadd.f32 %v3495, %v3496
      %v3498 = vmul.f32 %v3497, %v2075
      %v3499 = vadd.f32 %v3498, 1e-05
      %v3500 = vrsqrt.pop %v3499
      %v3501 = vmul.f32 %v3481, %v3500
      %v3502 = vmul.f32 %v3482, %v3500
      %v3503 = vmul.f32 %v3483, %v3500
      %v3504 = vmul.f32 %v3484, %v3500
      %3506 = vset.pattern.permute.xlu0 0
      %3507 = vperm.xlu0 %3506, %v3463
      %v3508 = vpop.permute.xlu0 %3507
      %3511 = vset.pattern.permute.xlu0 0
      %3512 = vperm.xlu0 %3511, %v3464
      %v3513 = vpop.permute.xlu0 %3512
      %3516 = vset.pattern.permute.xlu0 0
      %3517 = vperm.xlu0 %3516, %v3465
      %v3518 = vpop.permute.xlu0 %3517
      %3521 = vset.pattern.permute.xlu0 0
      %3522 = vperm.xlu0 %3521, %v3466
      %v3523 = vpop.permute.xlu0 %3522
      %v3525 = vmul.f32 %v3501, %v3508
      %v3526 = vmul.f32 %v3502, %v3513
      %v3527 = vmul.f32 %v3503, %v3518
      %v3528 = vmul.f32 %v3504, %v3523
      %3530 = vset.pattern.permute.xlu0 0
      %3531 = vperm.xlu0 %3530, %v3467
      %v3532 = vpop.permute.xlu0 %3531
      %3535 = vset.pattern.permute.xlu0 0
      %3536 = vperm.xlu0 %3535, %v3468
      %v3537 = vpop.permute.xlu0 %3536
      %3540 = vset.pattern.permute.xlu0 0
      %3541 = vperm.xlu0 %3540, %v3469
      %v3542 = vpop.permute.xlu0 %3541
      %3545 = vset.pattern.permute.xlu0 0
      %3546 = vperm.xlu0 %3545, %v3470
      %v3547 = vpop.permute.xlu0 %3546
      %v3549 = vadd.f32 %v3525, %v3532
      %v3550 = vadd.f32 %v3526, %v3537
      %v3551 = vadd.f32 %v3527, %v3542
      %v3552 = vadd.f32 %v3528, %v3547
      %v3553 = vld [vmem:[%s51] sm:$0xf]
      %v3554 = vld [vmem:[%s51 + $0x4] sm:$0xf]
      %v3555 = vld [vmem:[%s51 + $0x8] sm:$0xf]
      %v3556 = vld [vmem:[%s51 + $0xc] sm:$0xf]
      %v3557 = vld [vmem:[%s51 + $0x10] sm:$0xf]
      %v3558 = vld [vmem:[%s51 + $0x14] sm:$0xf]
      %v3559 = vld [vmem:[%s51 + $0x18] sm:$0xf]
      %v3560 = vld [vmem:[%s51 + $0x1c] sm:$0xf]
      %v3561 = vpack.c.bf16 %v3550, %v3549
      %v3562 = vpack.c.bf16 %v3552, %v3551
      %v3563 = vld [vmem:[%s53] sm:$0xff]
      %v3564 = vld [vmem:[%s53 + $0x8] sm:$0xff]
      %v3565 = vld [vmem:[%s53 + $0x10] sm:$0xff]
      %v3566 = vld [vmem:[%s53 + $0x18] sm:$0xff]
      %v3567 = vld [vmem:[%s53 + $0x20] sm:$0xff]
      %v3568 = vld [vmem:[%s53 + $0x28] sm:$0xff]
      %v3569 = vld [vmem:[%s53 + $0x30] sm:$0xff]
      %v3570 = vld [vmem:[%s53 + $0x38] sm:$0xff]
      %3572 = vset.pattern.permute.xlu0 0
      %3573 = vperm.xlu0 %3572, %v3563
      %v3574 = vpop.permute.xlu0 %3573
      %3577 = vset.pattern.permute.xlu0 0
      %3578 = vperm.xlu0 %3577, %v3564
      %v3579 = vpop.permute.xlu0 %3578
      %3582 = vset.pattern.permute.xlu0 0
      %3583 = vperm.xlu0 %3582, %v3565
      %v3584 = vpop.permute.xlu0 %3583
      %3587 = vset.pattern.permute.xlu0 0
      %3588 = vperm.xlu0 %3587, %v3566
      %v3589 = vpop.permute.xlu0 %3588
      %3592 = vset.pattern.permute.xlu0 0
      %3593 = vperm.xlu0 %3592, %v3567
      %v3594 = vpop.permute.xlu0 %3593
      %3597 = vset.pattern.permute.xlu0 0
      %3598 = vperm.xlu0 %3597, %v3568
      %v3599 = vpop.permute.xlu0 %3598
      %3602 = vset.pattern.permute.xlu0 0
      %3603 = vperm.xlu0 %3602, %v3569
      %v3604 = vpop.permute.xlu0 %3603
      %3607 = vset.pattern.permute.xlu0 0
      %3608 = vperm.xlu0 %3607, %v3570
      %v3609 = vpop.permute.xlu0 %3608
      %v3619 = vunpack.c.l.b16 %v3553
      %v3620 = vunpack.c.l.b16 %v3554
      %v3621 = vunpack.c.l.b16 %v3555
      %v3622 = vunpack.c.l.b16 %v3556
      %v3623 = vunpack.c.l.b16 %v3557
      %v3624 = vunpack.c.l.b16 %v3558
      %v3625 = vunpack.c.l.b16 %v3559
      %v3626 = vunpack.c.l.b16 %v3560
      %v3627 = vpack.c.b16 %v3620, %v3619
      %v3628 = vpack.c.b16 %v3622, %v3621
      %v3629 = vpack.c.b16 %v3624, %v3623
      %v3630 = vpack.c.b16 %v3626, %v3625
      %v3632 = vsel %vm1158, %v3627, 0
      %v3635 = vsel %vm1158, %v3628, 0
      %v3638 = vsel %vm1158, %v3629, 0
      %v3641 = vsel %vm1158, %v3630, 0
      %3643 = vmatprep.subr.bf16.mxu0 0
      %3644 = vmatpush1.bf16.msra.mxu0 0
      %3645 = vmatprep.subr.bf16.mxu0 0
      %3646 = vmatpush1.bf16.msra.mxu0 0
      %3647 = vmatprep.subr.bf16.mxu0 0
      %3648 = vmatpush1.bf16.msra.mxu0 0
      %3649 = vmatprep.subr.bf16.mxu0 0
      %3650 = vmatpush1.bf16.msra.mxu0 0
      %3651 = vmatprep.subr.bf16.mxu0 0
      %3652 = vmatpush1.bf16.msra.mxu0 0
      %3653 = vmatprep.subr.bf16.mxu0 0
      %3654 = vmatpush1.bf16.msra.mxu0 0
      %3655 = vmatprep.subr.bf16.mxu0 0
      %3656 = vmatpush1.bf16.msra.mxu0 %v3562
      %3657 = vmatprep.subr.bf16.mxu0 0
      %3658 = vmatpush1.bf16.msra.mxu0 %v3561
      %3659 = vmatprep.subr.bf16.mxu0 0
      %3660 = vmatpush2.bf16.msra.mxu0 0
      %3661 = vmatprep.subr.bf16.mxu0 0
      %3662 = vmatpush2.bf16.msra.mxu0 0
      %3663 = vmatprep.subr.bf16.mxu0 0
      %3664 = vmatpush2.bf16.msra.mxu0 0
      %3665 = vmatprep.subr.bf16.mxu0 0
      %3666 = vmatpush2.bf16.msra.mxu0 0
      %3667 = vmatprep.subr.bf16.mxu0 0
      %3668 = vmatpush2.bf16.msra.mxu0 0
      %3669 = vmatprep.subr.bf16.mxu0 0
      %3670 = vmatpush2.bf16.msra.mxu0 0
      %3671 = vmatprep.subr.bf16.mxu0 0
      %3672 = vmatpush2.bf16.msra.mxu0 0
      %3673 = vmatprep.subr.bf16.mxu0 0
      %3674 = vmatpush2.bf16.msra.mxu0 0
      %3675 = vmatprep.mubr.bf16.mxu0 0
      %3676 = vmatmul.mubr.bf16.gmra.mxu0 %v3632
      %v3677 = vpop.f32.mrf.mxu0
      %v3678 = vadd.f32 %v3574, %v3677
      %v3679 = vpop.f32.mrf.mxu0
      %v3680 = vpop.f32.mrf.mxu0
      %v3681 = vadd.f32 %v3579, %v3680
      %v3682 = vpop.f32.mrf.mxu0
      %3683 = vmatprep.mubr.bf16.mxu0 0
      %3684 = vmatmul.mubr.bf16.gmra.mxu0 %v3635
      %v3685 = vpop.f32.mrf.mxu0
      %v3686 = vadd.f32 %v3584, %v3685
      %v3687 = vpop.f32.mrf.mxu0
      %v3688 = vpop.f32.mrf.mxu0
      %v3689 = vadd.f32 %v3589, %v3688
      %v3690 = vpop.f32.mrf.mxu0
      %3691 = vmatprep.mubr.bf16.mxu0 0
      %3692 = vmatmul.mubr.bf16.gmra.mxu0 %v3638
      %v3693 = vpop.f32.mrf.mxu0
      %v3694 = vadd.f32 %v3594, %v3693
      %v3695 = vpop.f32.mrf.mxu0
      %v3696 = vpop.f32.mrf.mxu0
      %v3697 = vadd.f32 %v3599, %v3696
      %v3698 = vpop.f32.mrf.mxu0
      %3699 = vmatprep.mubr.bf16.mxu0 0
      %3700 = vmatmul.mubr.bf16.gmra.mxu0 %v3641
      %v3701 = vpop.f32.mrf.mxu0
      %v3702 = vadd.f32 %v3604, %v3701
      %v3703 = vpop.f32.mrf.mxu0
      %v3704 = vpop.f32.mrf.mxu0
      %v3705 = vadd.f32 %v3609, %v3704
      %v3706 = vpop.f32.mrf.mxu0
      %3707 = vdwg.mxu0
      %v3708 = vmul.f32 %v3678, %v3678
      %v3709 = vmul.f32 %v3681, %v3681
      %v3710 = vmul.f32 %v3686, %v3686
      %v3711 = vmul.f32 %v3689, %v3689
      %v3712 = vmul.f32 %v3694, %v3694
      %v3713 = vmul.f32 %v3697, %v3697
      %v3714 = vmul.f32 %v3702, %v3702
      %v3715 = vmul.f32 %v3705, %v3705
      %v3716 = vmul.f32 %v3678, %v3708
      %v3717 = vmul.f32 %v3681, %v3709
      %v3718 = vmul.f32 %v3686, %v3710
      %v3719 = vmul.f32 %v3689, %v3711
      %v3720 = vmul.f32 %v3694, %v3712
      %v3721 = vmul.f32 %v3697, %v3713
      %v3722 = vmul.f32 %v3702, %v3714
      %v3723 = vmul.f32 %v3705, %v3715
      %v3724 = vmul.f32 %v3716, 0.044715
      %v3725 = vmul.f32 %v3717, 0.044715
      %v3726 = vmul.f32 %v3718, 0.044715
      %v3727 = vmul.f32 %v3719, 0.044715
      %v3728 = vmul.f32 %v3720, 0.044715
      %v3729 = vmul.f32 %v3721, 0.044715
      %v3730 = vmul.f32 %v3722, 0.044715
      %v3731 = vmul.f32 %v3723, 0.044715
      %v3732 = vadd.f32 %v3678, %v3724
      %v3733 = vadd.f32 %v3681, %v3725
      %v3734 = vadd.f32 %v3686, %v3726
      %v3735 = vadd.f32 %v3689, %v3727
      %v3736 = vadd.f32 %v3694, %v3728
      %v3737 = vadd.f32 %v3697, %v3729
      %v3738 = vadd.f32 %v3702, %v3730
      %v3739 = vadd.f32 %v3705, %v3731
      %v3740 = vmul.f32 %v3732, 0.7978846
      %v3741 = vmul.f32 %v3733, 0.7978846
      %v3742 = vmul.f32 %v3734, 0.7978846
      %v3743 = vmul.f32 %v3735, 0.7978846
      %v3744 = vmul.f32 %v3736, 0.7978846
      %v3745 = vmul.f32 %v3737, 0.7978846
      %v3746 = vmul.f32 %v3738, 0.7978846
      %v3747 = vmul.f32 %v3739, 0.7978846
      %v3748 = vtanh.pop %v3740
      %v3749 = vtanh.pop %v3741
      %v3750 = vtanh.pop %v3742
      %v3751 = vtanh.pop %v3743
      %v3752 = vtanh.pop %v3744
      %v3753 = vtanh.pop %v3745
      %v3754 = vtanh.pop %v3746
      %v3755 = vtanh.pop %v3747
      %v3756 = vadd.f32 %v3748, 1.0
      %v3757 = vadd.f32 %v3749, 1.0
      %v3758 = vadd.f32 %v3750, 1.0
      %v3759 = vadd.f32 %v3751, 1.0
      %v3760 = vadd.f32 %v3752, 1.0
      %v3761 = vadd.f32 %v3753, 1.0
      %v3762 = vadd.f32 %v3754, 1.0
      %v3763 = vadd.f32 %v3755, 1.0
      %v3764 = vmul.f32 %v3756, 0.5
      %v3765 = vmul.f32 %v3757, 0.5
      %v3766 = vmul.f32 %v3758, 0.5
      %v3767 = vmul.f32 %v3759, 0.5
      %v3768 = vmul.f32 %v3760, 0.5
      %v3769 = vmul.f32 %v3761, 0.5
      %v3770 = vmul.f32 %v3762, 0.5
      %v3771 = vmul.f32 %v3763, 0.5
      %v3772 = vmul.f32 %v3678, %v3764
      %v3773 = vmul.f32 %v3681, %v3765
      %v3774 = vmul.f32 %v3686, %v3766
      %v3775 = vmul.f32 %v3689, %v3767
      %v3776 = vmul.f32 %v3694, %v3768
      %v3777 = vmul.f32 %v3697, %v3769
      %v3778 = vmul.f32 %v3702, %v3770
      %v3779 = vmul.f32 %v3705, %v3771
      %v3780 = vld [vmem:[%s55] sm:$0xf]
      %v3781 = vld [vmem:[%s55 + $0x4] sm:$0xf]
      %v3782 = vld [vmem:[%s55 + $0x8] sm:$0xf]
      %v3783 = vld [vmem:[%s55 + $0xc] sm:$0xf]
      %v3784 = vpack.c.bf16 %v3773, %v3772
      %v3785 = vpack.c.bf16 %v3775, %v3774
      %v3786 = vpack.c.bf16 %v3777, %v3776
      %v3787 = vpack.c.bf16 %v3779, %v3778
      %v3788 = vld [vmem:[%s57] sm:$0xff]
      %v3789 = vld [vmem:[%s57 + $0x8] sm:$0xff]
      %v3790 = vld [vmem:[%s57 + $0x10] sm:$0xff]
      %v3791 = vld [vmem:[%s57 + $0x18] sm:$0xff]
      %3793 = vset.pattern.permute.xlu0 0
      %3794 = vperm.xlu0 %3793, %v3788
      %v3795 = vpop.permute.xlu0 %3794
      %3798 = vset.pattern.permute.xlu0 0
      %3799 = vperm.xlu0 %3798, %v3789
      %v3800 = vpop.permute.xlu0 %3799
      %3803 = vset.pattern.permute.xlu0 0
      %3804 = vperm.xlu0 %3803, %v3790
      %v3805 = vpop.permute.xlu0 %3804
      %3808 = vset.pattern.permute.xlu0 0
      %3809 = vperm.xlu0 %3808, %v3791
      %v3810 = vpop.permute.xlu0 %3809
      %v3816 = vunpack.c.l.b16 %v3780
      %v3817 = vunpack.c.l.b16 %v3781
      %v3818 = vunpack.c.l.b16 %v3782
      %v3819 = vunpack.c.l.b16 %v3783
      %v3820 = vpack.c.b16 %v3817, %v3816
      %v3821 = vpack.c.b16 %v3819, %v3818
      %v3823 = vsel %vm2418, %v3820, 0
      %v3826 = vsel %vm2418, %v3821, 0
      %3828 = vmatprep.subr.bf16.mxu0 0
      %3829 = vmatpush1.bf16.msra.mxu0 0
      %3830 = vmatprep.subr.bf16.mxu0 0
      %3831 = vmatpush1.bf16.msra.mxu0 0
      %3832 = vmatprep.subr.bf16.mxu0 0
      %3833 = vmatpush1.bf16.msra.mxu0 0
      %3834 = vmatprep.subr.bf16.mxu0 0
      %3835 = vmatpush1.bf16.msra.mxu0 0
      %3836 = vmatprep.subr.bf16.mxu0 0
      %3837 = vmatpush1.bf16.msra.mxu0 %v3787
      %3838 = vmatprep.subr.bf16.mxu0 0
      %3839 = vmatpush1.bf16.msra.mxu0 %v3786
      %3840 = vmatprep.subr.bf16.mxu0 0
      %3841 = vmatpush1.bf16.msra.mxu0 %v3785
      %3842 = vmatprep.subr.bf16.mxu0 0
      %3843 = vmatpush1.bf16.msra.mxu0 %v3784
      %3844 = vmatprep.subr.bf16.mxu0 0
      %3845 = vmatpush2.bf16.msra.mxu0 0
      %3846 = vmatprep.subr.bf16.mxu0 0
      %3847 = vmatpush2.bf16.msra.mxu0 0
      %3848 = vmatprep.subr.bf16.mxu0 0
      %3849 = vmatpush2.bf16.msra.mxu0 0
      %3850 = vmatprep.subr.bf16.mxu0 0
      %3851 = vmatpush2.bf16.msra.mxu0 0
      %3852 = vmatprep.subr.bf16.mxu0 0
      %3853 = vmatpush2.bf16.msra.mxu0 0
      %3854 = vmatprep.subr.bf16.mxu0 0
      %3855 = vmatpush2.bf16.msra.mxu0 0
      %3856 = vmatprep.subr.bf16.mxu0 0
      %3857 = vmatpush2.bf16.msra.mxu0 0
      %3858 = vmatprep.subr.bf16.mxu0 0
      %3859 = vmatpush2.bf16.msra.mxu0 0
      %3860 = vmatprep.mubr.bf16.mxu0 0
      %3861 = vmatmul.mubr.bf16.gmra.mxu0 %v3823
      %v3862 = vpop.f32.mrf.mxu0
      %v3863 = vadd.f32 %v3795, %v3862
      %v3864 = vpop.f32.mrf.mxu0
      %v3865 = vpop.f32.mrf.mxu0
      %v3866 = vadd.f32 %v3800, %v3865
      %v3867 = vpop.f32.mrf.mxu0
      %3868 = vmatprep.mubr.bf16.mxu0 0
      %3869 = vmatmul.mubr.bf16.gmra.mxu0 %v3826
      %v3870 = vpop.f32.mrf.mxu0
      %v3871 = vadd.f32 %v3805, %v3870
      %v3872 = vpop.f32.mrf.mxu0
      %v3873 = vpop.f32.mrf.mxu0
      %v3874 = vadd.f32 %v3810, %v3873
      %v3875 = vpop.f32.mrf.mxu0
      %3876 = vdwg.mxu0
      %v3877 = vadd.f32 %v3549, %v3863
      %v3878 = vadd.f32 %v3550, %v3866
      %v3879 = vadd.f32 %v3551, %v3871
      %v3880 = vadd.f32 %v3552, %v3874
      %v3881 = vld [vmem:[%s59] sm:$0xff]
      %v3882 = vld [vmem:[%s59 + $0x8] sm:$0xff]
      %v3883 = vld [vmem:[%s59 + $0x10] sm:$0xff]
      %v3884 = vld [vmem:[%s59 + $0x18] sm:$0xff]
      %v3885 = vld [vmem:[%s61] sm:$0xff]
      %v3886 = vld [vmem:[%s61 + $0x8] sm:$0xff]
      %v3887 = vld [vmem:[%s61 + $0x10] sm:$0xff]
      %v3888 = vld [vmem:[%s61 + $0x18] sm:$0xff]
      %v3889 = vadd.f32 %v3877, %v3878
      %v3890 = vadd.f32 %v3889, %v3879
      %v3891 = vadd.f32 %v3890, %v3880
      %v3892 = vrot.slane %v3891, 4
      %v3893 = vadd.f32 %v3891, %v3892
      %v3894 = vrot.slane %v3893, 2
      %v3895 = vadd.f32 %v3893, %v3894
      %v3896 = vrot.slane %v3895, 1
      %v3897 = vadd.f32 %v3895, %v3896
      %v3898 = vmul.f32 %v3897, %v2075
      %v3899 = vsub.f32 %v3877, %v3898
      %v3900 = vsub.f32 %v3878, %v3898
      %v3901 = vsub.f32 %v3879, %v3898
      %v3902 = vsub.f32 %v3880, %v3898
      %v3903 = vmul.f32 %v3899, %v3899
      %v3904 = vmul.f32 %v3900, %v3900
      %v3905 = vmul.f32 %v3901, %v3901
      %v3906 = vmul.f32 %v3902, %v3902
      %v3907 = vadd.f32 %v3903, %v3904
      %v3908 = vadd.f32 %v3907, %v3905
      %v3909 = vadd.f32 %v3908, %v3906
      %v3910 = vrot.slane %v3909, 4
      %v3911 = vadd.f32 %v3909, %v3910
      %v3912 = vrot.slane %v3911, 2
      %v3913 = vadd.f32 %v3911, %v3912
      %v3914 = vrot.slane %v3913, 1
      %v3915 = vadd.f32 %v3913, %v3914
      %v3916 = vmul.f32 %v3915, %v2075
      %v3917 = vadd.f32 %v3916, 1e-05
      %v3918 = vrsqrt.pop %v3917
      %v3919 = vmul.f32 %v3899, %v3918
      %v3920 = vmul.f32 %v3900, %v3918
      %v3921 = vmul.f32 %v3901, %v3918
      %v3922 = vmul.f32 %v3902, %v3918
      %3924 = vset.pattern.permute.xlu0 0
      %3925 = vperm.xlu0 %3924, %v3881
      %v3926 = vpop.permute.xlu0 %3925
      %3929 = vset.pattern.permute.xlu0 0
      %3930 = vperm.xlu0 %3929, %v3882
      %v3931 = vpop.permute.xlu0 %3930
      %3934 = vset.pattern.permute.xlu0 0
      %3935 = vperm.xlu0 %3934, %v3883
      %v3936 = vpop.permute.xlu0 %3935
      %3939 = vset.pattern.permute.xlu0 0
      %3940 = vperm.xlu0 %3939, %v3884
      %v3941 = vpop.permute.xlu0 %3940
      %v3943 = vmul.f32 %v3919, %v3926
      %v3944 = vmul.f32 %v3920, %v3931
      %v3945 = vmul.f32 %v3921, %v3936
      %v3946 = vmul.f32 %v3922, %v3941
      %3948 = vset.pattern.permute.xlu0 0
      %3949 = vperm.xlu0 %3948, %v3885
      %v3950 = vpop.permute.xlu0 %3949
      %3953 = vset.pattern.permute.xlu0 0
      %3954 = vperm.xlu0 %3953, %v3886
      %v3955 = vpop.permute.xlu0 %3954
      %3958 = vset.pattern.permute.xlu0 0
      %3959 = vperm.xlu0 %3958, %v3887
      %v3960 = vpop.permute.xlu0 %3959
      %3963 = vset.pattern.permute.xlu0 0
      %3964 = vperm.xlu0 %3963, %v3888
      %v3965 = vpop.permute.xlu0 %3964
      %v3967 = vadd.f32 %v3943, %v3950
      %v3968 = vadd.f32 %v3944, %v3955
      %v3969 = vadd.f32 %v3945, %v3960
      %v3970 = vadd.f32 %v3946, %v3965
      %3971 = vst [vmem:[%s1036] sm:$0xff] %v3967
      %3972 = vst [vmem:[%s1036 + $0x8] sm:$0xff] %v3968
      %3973 = vst [vmem:[%s1036 + $0x10] sm:$0xff] %v3969
      %3974 = vst [vmem:[%s1036 + $0x18] sm:$0xff] %v3970
      %p3975 = scmp.lt.s32.totalorder %s77, 1
      %s3976 = scalar_select %p3975, %s77, 1
      %s3977 = smul.addr %s3976, 4
      %s3978 = smul.addr %s3977, 8
      %s3979 = scalar_lea.vmem %s63, %s3978
      %p3980 = scmp.lt.s32.totalorder %s77, 1
      %s3981 = scalar_select %p3980, %s77, 1
      %s3982 = smul.addr %s3981, 4
      %s3983 = smul.addr %s3982, 8
      %s3984 = scalar_lea.vmem %s65, %s3983
      // Predicated region
      $region145: #{semantic_guidance_forward.1} parent=143 // pred_check
        %p3985 = pneg %p761
      $region146: #{semantic_guidance_forward.1} parent=143 // pred_check_branch
        %3987 = sbr.rel (%p3985) target = $region148
      $region147: #{semantic_guidance_forward.1} parent=143 // pred_region
        _
      $region148: #{semantic_guidance_forward.1} parent=143 // pred_fallthru
        _
      // Predicated region
      $region149: #{semantic_guidance_forward.1} parent=143 // pred_check
        %p3988 = pneg %p787
      $region150: #{semantic_guidance_forward.1} parent=143 // pred_check_branch
        %3990 = sbr.rel (%p3988) target = $region152
      $region151: #{semantic_guidance_forward.1} parent=143 // pred_region
        _
      $region152: #{semantic_guidance_forward.1} parent=143 // pred_fallthru
        _
    $region144: #{semantic_guidance_forward.1} parent=5 // pred_fallthru
      _
    %p3991 = scmp.le.s32.totalorder 2, %s72
    // Predicated region
    $region153: #{semantic_guidance_forward.1} parent=5 // pred_check
      %p3992 = pneg %p3991
    $region154: #{semantic_guidance_forward.1} parent=5 // pred_check_branch
      %3994 = sbr.rel (%p3992) target = $region156
    $region155: #{semantic_guidance_forward.1} parent=5 // pred_region
      %s3995 = ssub.s32 %s72, 2
      // Predicated region
      $region157: #{semantic_guidance_forward.1} parent=155 // pred_check
        %p3996 = pneg %p767
      $region158: #{semantic_guidance_forward.1} parent=155 // pred_check_branch
        %3998 = sbr.rel (%p3996) target = $region160
      $region159: #{semantic_guidance_forward.1} parent=155 // pred_region
        %p3999 = scmp.lt.s32.totalorder %s78, 1
        %s4000 = scalar_select %p3999, %s78, 1
        %s4001 = smul.addr %s4000, 4
        %s4002 = smul.addr %s4001, 8
        %s4003 = scalar_lea.vmem %s63, %s4002
      $region160: #{semantic_guidance_forward.1} parent=155 // pred_fallthru
        _
      // Predicated region
      $region161: #{semantic_guidance_forward.1} parent=155 // pred_check
        %p4004 = pneg %p793
      $region162: #{semantic_guidance_forward.1} parent=155 // pred_check_branch
        %4006 = sbr.rel (%p4004) target = $region164
      $region163: #{semantic_guidance_forward.1} parent=155 // pred_region
        %p4007 = scmp.lt.s32.totalorder %s78, 1
        %s4008 = scalar_select %p4007, %s78, 1
        %s4009 = smul.addr %s4008, 4
        %s4010 = smul.addr %s4009, 8
        %s4011 = scalar_lea.vmem %s65, %s4010
      $region164: #{semantic_guidance_forward.1} parent=155 // pred_fallthru
        _
    $region156: #{semantic_guidance_forward.1} parent=5 // pred_fallthru
      _
  $region6: #{semantic_guidance_forward.1} parent=0 // loop_footer
    %s76 = sadd.s32 1, %s72
  $region7: #{semantic_guidance_forward.1} parent=0 // loop_footer_branch
    %71 = sbr.rel target = $region3
  $region8: #{semantic_guidance_forward.1} parent=0 // loop_exit
    _

</llo_original>
